<compile_context>
chip_gen: v7x
topology: tpu7x:2x2x1
jax: 0.10.0
libtpu: 0.0.40
codegen_flags: <defaults>
</compile_context>

<pallas_src>
import jax
import jax.numpy as jnp
from jax.experimental import pallas as pl
from jax.experimental.pallas import tpu as pltpu


# ---------------------------------------------------------------------------
# Kernel 1: fused conv1(k5,p2)+ReLU+pool1 + conv2(k3,p1)+ReLU+pool2.
# Input rows = (sample, pooled position q in [0,64)).  The 32 packed columns
# hold the conv1 im2col taps of the 4 conv positions {4q..4q+3} (8 taps each,
# taps 5..7 zero-padded).  A block-diagonal conv1 weight turns conv1 into ONE
# lane-dense (rows,128) matmul; both stride-2 max-pools become elementwise
# maxima (relu/max/bias commute: relu(max(a,b)+c) == max(relu(a+c), relu(b+c))).
# conv2's +/-1 pooled-position taps are built in-kernel with pltpu.roll
# (shift=1 for "prev", shift=rows-1 for "next"; sample boundaries zero-masked),
# and conv2 is evaluated as 3 matmul-accumulates per output parity against
# 32-row slices of the shared (96,64) weight.
# ---------------------------------------------------------------------------
def _conv_stack_kernel(pk_ref, w1_ref, b1_ref, w2_ref, b2_ref, out_ref):
    rows = pk_ref.shape[0]                       # (samples in block) * 64

    # conv1 for all 4 position groups at once -> (rows, 128), lane dense.
    h1 = jnp.dot(pk_ref[...], w1_ref[...], preferred_element_type=jnp.float32)
    b1 = b1_ref[...]
    # pool1: max over conv positions (4q,4q+1) -> even pooled pos; (4q+2,4q+3) -> odd.
    p1e = jnp.maximum(jnp.maximum(h1[:, 0:32], h1[:, 32:64]) + b1, 0.0)
    p1o = jnp.maximum(jnp.maximum(h1[:, 64:96], h1[:, 96:128]) + b1, 0.0)

    # conv2 neighbour taps: shift by one pooled position inside each 64-row
    # sample.  pltpu.roll only takes non-negative shifts, so "-1" is rows-1;
    # wrap-around rows land on q==0 / q==63 and are zeroed (conv padding).
    q = jax.lax.broadcasted_iota(jnp.int32, (rows, 1), 0) % 64
    p1o_prev = jnp.where(q == 0, 0.0, pltpu.roll(p1o, shift=1, axis=0))
    p1e_next = jnp.where(q == 63, 0.0, pltpu.roll(p1e, shift=rows - 1, axis=0))

    # conv2 as 3 matmul-accumulates per output parity (k = 0,1,2 <-> m-1,m,m+1).
    w2_k0 = w2_ref[0:32, :]
    w2_k1 = w2_ref[32:64, :]
    w2_k2 = w2_ref[64:96, :]
    # even conv2 positions 2q: taps p1[2q-1], p1[2q], p1[2q+1]
    h2e = (jnp.dot(p1o_prev, w2_k0, preferred_element_type=jnp.float32)
           + jnp.dot(p1e, w2_k1, preferred_element_type=jnp.float32)
           + jnp.dot(p1o, w2_k2, preferred_element_type=jnp.float32))
    # odd conv2 positions 2q+1: taps p1[2q], p1[2q+1], p1[2q+2]
    h2o = (jnp.dot(p1e, w2_k0, preferred_element_type=jnp.float32)
           + jnp.dot(p1o, w2_k1, preferred_element_type=jnp.float32)
           + jnp.dot(p1e_next, w2_k2, preferred_element_type=jnp.float32))

    # pool2 + bias + ReLU; store bf16 (halves the only HBM intermediate).
    p2 = jnp.maximum(jnp.maximum(h2e, h2o) + b2_ref[...], 0.0)
    out_ref[...] = p2.astype(out_ref.dtype)


def conv_stack(packed, w1bd, b1, w2m, b2):
    rows = packed.shape[0]                       # B * 64
    # 2 "parallel" steps when the batch splits into whole samples (uses both v7x
    # TensorCores, ~free elsewhere); otherwise 1 full-size block so no rows are
    # ever dropped.
    nblk = 2 if rows % 128 == 0 else 1
    rblk = rows // nblk
    return pl.pallas_call(
        _conv_stack_kernel,
        out_shape=jax.ShapeDtypeStruct((rows, 64), jnp.bfloat16),
        grid_spec=pltpu.PrefetchScalarGridSpec(
            num_scalar_prefetch=0,
            grid=(nblk,),
            in_specs=[
                pl.BlockSpec((rblk, 32), lambda i: (i, 0)),   # packed conv1 patches
                pl.BlockSpec((32, 128), lambda i: (0, 0)),    # block-diag conv1 weight
                pl.BlockSpec((1, 32), lambda i: (0, 0)),      # conv1 bias
                pl.BlockSpec((96, 64), lambda i: (0, 0)),     # conv2 weight [k*32+ci, co]
                pl.BlockSpec((1, 64), lambda i: (0, 0)),      # conv2 bias
            ],
            out_specs=pl.BlockSpec((rblk, 64), lambda i: (i, 0)),
        ),
        compiler_params=pltpu.CompilerParams(dimension_semantics=("parallel",)),
    )(packed, w1bd, b1, w2m, b2)


# ---------------------------------------------------------------------------
# Kernel 2: fc head.  Single grid step, no K-tiling, no accumulator scratch.
# fc1 operands are bf16 (MXU-native, f32 accumulation); bias, ReLU and fc2 stay
# f32 on the VPU.  Dropout(p=0.5) is inference-mode identity.
# TODO(synk): training-mode dropout (random masking / scaling) is not implemented.
# ---------------------------------------------------------------------------
def _fc_kernel(x_ref, w1_ref, b1_ref, w2_ref, b2_ref, out_ref):
    h = jnp.dot(x_ref[...], w1_ref[...], preferred_element_type=jnp.float32)
    h = jnp.maximum(h + b1_ref[...], 0.0)
    out_ref[...] = (jnp.dot(h, w2_ref[...], preferred_element_type=jnp.float32)
                    + b2_ref[...]).astype(out_ref.dtype)


def fc_head(flat, wfc1p, bfc1, wfc2t, bfc2):
    bsz, kdim = flat.shape
    hidden = wfc1p.shape[1]
    return pl.pallas_call(
        _fc_kernel,
        out_shape=jax.ShapeDtypeStruct((bsz, 1), jnp.float32),
        grid_spec=pltpu.PrefetchScalarGridSpec(
            num_scalar_prefetch=0,
            grid=(1,),
            in_specs=[
                pl.BlockSpec((bsz, kdim), lambda i: (0, 0)),
                pl.BlockSpec((kdim, hidden), lambda i: (0, 0)),
                pl.BlockSpec((1, hidden), lambda i: (0, 0)),
                pl.BlockSpec((hidden, 1), lambda i: (0, 0)),
                pl.BlockSpec((1, 1), lambda i: (0, 0)),
            ],
            out_specs=pl.BlockSpec((bsz, 1), lambda i: (0, 0)),
        ),
        compiler_params=pltpu.CompilerParams(dimension_semantics=("arbitrary",)),
    )(flat, wfc1p, bfc1, wfc2t, bfc2)


# ---------------------------------------------------------------------------
# One-time weight preprocessing (hoisted out of the forward path).
# ---------------------------------------------------------------------------
def prepare_params(params):
    w1, b1, w2, b2, wfc1, bfc1, wfc2, bfc2 = params
    # conv1 weight -> (8,32) [tap, cout] (taps padded 5->8 with zeros, kept f32),
    # then block-diagonal (32,128) so 4 conv positions share one lane-dense matmul.
    w1m = jnp.pad(w1[:, 0, :].T, ((0, 3), (0, 0)))
    w1bd = jnp.zeros((32, 128), jnp.float32)
    for r in range(4):
        w1bd = w1bd.at[r * 8:(r + 1) * 8, r * 32:(r + 1) * 32].set(w1m)
    # conv2 weight -> (96,64) [k*32+ci, co].
    w2m = jnp.transpose(w2, (2, 1, 0)).reshape(96, 64)
    # fc1 weight permuted so our (position, channel) flatten matches torch's
    # (channel, position) flatten; stored bf16 (MXU operand, halves its DMA).
    wfc1p = (wfc1.T.reshape(64, 64, 128)                    # [co, q, f]
             .transpose(1, 0, 2).reshape(64 * 64, 128)      # [q*64+co, f]
             .astype(jnp.bfloat16))
    return (w1bd, b1[None, :], w2m, b2[None, :],
            wfc1p, bfc1[None, :], wfc2.T, bfc2[None, :])


# ---------------------------------------------------------------------------
# Forward pass.  The only host glue left is the conv1 im2col on the raw input
# (~64 KB of XLA work, independent of any kernel output).
# ---------------------------------------------------------------------------
def net_afd_forward(x, prep):
    """x: (B, 1, 256) float32 — same NCL layout as the PyTorch module."""
    w1bd, b1m, w2m, b2m, wfc1p, bfc1m, wfc2t, bfc2m = prep
    B, C, L = x.shape
    assert C == 1 and L == 256, "fc1 expects 64 channels * 64 positions"

    xp = jnp.pad(x[:, 0, :], ((0, 0), (2, 2)))                          # (B, 260)
    cols = jnp.stack([xp[:, k:k + L] for k in range(5)], axis=-1)       # (B, 256, 5)
    cols = jnp.pad(cols, ((0, 0), (0, 0), (0, 3)))                      # taps 5 -> 8
    # rows = (b, q); columns = (position residue r in [0,4), tap) -> r*8 + tap
    packed = cols.reshape(B * (L // 4), 32)

    p2 = conv_stack(packed, w1bd, b1m, w2m, b2m)                        # (B*64, 64) bf16
    flat = p2.reshape(B, (L // 4) * 64)                                 # [b, q*64 + co]
    return fc_head(flat, wfc1p, bfc1m, wfc2t, bfc2m)                    # (B, 1) f32


# ---------------------------------------------------------------------------
# Pure-JAX f32 reference (independent of the kernel path) for validation.
# ---------------------------------------------------------------------------
def ref_forward(x, params):
    w1, b1, w2, b2, wfc1, bfc1, wfc2, bfc2 = params
    dn = ("NCH", "OIH", "NCH")
    y = jax.lax.conv_general_dilated(x, w1, window_strides=(1,), padding=((2, 2),),
                                     dimension_numbers=dn)
    y = jnp.maximum(y + b1[None, :, None], 0.0)
    y = jax.lax.reduce_window(y, -jnp.inf, jax.lax.max, (1, 1, 2), (1, 1, 2), "VALID")
    y = jax.lax.conv_general_dilated(y, w2, window_strides=(1,), padding=((1, 1),),
                                     dimension_numbers=dn)
    y = jnp.maximum(y + b2[None, :, None], 0.0)
    y = jax.lax.reduce_window(y, -jnp.inf, jax.lax.max, (1, 1, 2), (1, 1, 2), "VALID")
    flat = y.reshape(y.shape[0], -1)            # (B, 64*64), channel-major like torch
    h = jnp.maximum(flat @ wfc1.T + bfc1[None, :], 0.0)
    return h @ wfc2.T + bfc2[None, :]


if __name__ == "__main__":
    key = jax.random.PRNGKey(0)
    kx, k1, k2, k3, k4, k5, k6, k7, k8 = jax.random.split(key, 9)
    B, L = 8, 256
    x = jax.random.normal(kx, (B, 1, L), jnp.float32)

    def uinit(k, shape, fan_in):
        bound = 1.0 / (fan_in ** 0.5)
        return jax.random.uniform(k, shape, jnp.float32, -bound, bound)

    params = (
        uinit(k1, (32, 1, 5), 5),        uinit(k2, (32,), 5),         # conv1
        uinit(k3, (64, 32, 3), 96),      uinit(k4, (64,), 96),        # conv2
        uinit(k5, (128, 64 * 64), 4096), uinit(k6, (128,), 4096),     # fc1
        uinit(k7, (1, 128), 128),        uinit(k8, (1,), 128),        # fc2
    )

    prep = jax.tree_util.tree_map(jax.block_until_ready, prepare_params(params))
    fwd = jax.jit(net_afd_forward)

    out = jax.block_until_ready(fwd(x, prep))
    ref = jax.block_until_ready(ref_forward(x, params))
    assert out.shape == (B, 1), out.shape
    # bf16 is used only for the fc1 MXU operands / the pool2 intermediate;
    # expected error is ~1e-3, well inside this tolerance.
    if not jnp.allclose(out, ref, rtol=2e-2, atol=2e-2):
        raise AssertionError(
            f"mismatch: max abs diff = {float(jnp.max(jnp.abs(out - ref)))}")
    print("KERNEL_OK")
</pallas_src>

<mosaic_0001>
module attributes {stable_mosaic.version = 11 : i64} {
  func.func @_conv_stack_kernel(%arg0: i32, %arg1: memref<256x32xf32, #tpu.memory_space<vmem>>, %arg2: memref<32x128xf32, #tpu.memory_space<vmem>>, %arg3: memref<1x32xf32, #tpu.memory_space<vmem>>, %arg4: memref<96x64xf32, #tpu.memory_space<vmem>>, %arg5: memref<1x64xf32, #tpu.memory_space<vmem>>, %arg6: memref<256x64xbf16, #tpu.memory_space<vmem>>) attributes {dimension_semantics = [#tpu.dimension_semantics<parallel>], iteration_bounds = array<i64: 2>, scalar_prefetch = 0 : i64, scratch_operands = 0 : i64, tpu.core_type = #tpu.core_type<tc>, window_params = [{transform_indices = @transform_0, window_bounds = array<i64: 256, 32>}, {pipeline_mode = #tpu.pipeline_mode<synchronous>, transform_indices = @transform_1, window_bounds = array<i64: 32, 128>}, {pipeline_mode = #tpu.pipeline_mode<synchronous>, transform_indices = @transform_2, window_bounds = array<i64: 1, 32>}, {pipeline_mode = #tpu.pipeline_mode<synchronous>, transform_indices = @transform_3, window_bounds = array<i64: 96, 64>}, {pipeline_mode = #tpu.pipeline_mode<synchronous>, transform_indices = @transform_4, window_bounds = array<i64: 1, 64>}, {transform_indices = @transform_5, window_bounds = array<i64: 256, 64>}]} {
    %c0 = arith.constant 0 : index
    %c0_0 = arith.constant 0 : index
    %0 = vector.load %arg1[%c0, %c0_0] : memref<256x32xf32, #tpu.memory_space<vmem>>, vector<256x32xf32>
    %c0_1 = arith.constant 0 : index
    %c0_2 = arith.constant 0 : index
    %1 = vector.load %arg2[%c0_1, %c0_2] : memref<32x128xf32, #tpu.memory_space<vmem>>, vector<32x128xf32>
    %cst = arith.constant dense<0.000000e+00> : vector<256x128xf32>
    %2 = tpu.matmul %0, %1, %cst {dimension_numbers = #tpu.dot_dimension_numbers<[1], [0], [0], [1], [0, 0, 1, 1], [], []>} : vector<256x32xf32>, vector<32x128xf32>, vector<256x128xf32> -> vector<256x128xf32>
    %c0_3 = arith.constant 0 : index
    %c0_4 = arith.constant 0 : index
    %3 = vector.load %arg3[%c0_3, %c0_4] : memref<1x32xf32, #tpu.memory_space<vmem>>, vector<1x32xf32>
    %4 = vector.extract_strided_slice %2 {offsets = [0, 0], sizes = [256, 32], strides = [1, 1]} : vector<256x128xf32> to vector<256x32xf32>
    %5 = vector.extract_strided_slice %2 {offsets = [0, 32], sizes = [256, 32], strides = [1, 1]} : vector<256x128xf32> to vector<256x32xf32>
    %6 = arith.maximumf %4, %5 : vector<256x32xf32>
    %7 = vector.broadcast %3 : vector<1x32xf32> to vector<256x32xf32>
    %8 = arith.addf %6, %7 : vector<256x32xf32>
    %cst_5 = arith.constant 0.000000e+00 : f32
    %9 = vector.broadcast %cst_5 : f32 to vector<256x32xf32>
    %10 = arith.maximumf %8, %9 : vector<256x32xf32>
    %11 = vector.extract_strided_slice %2 {offsets = [0, 64], sizes = [256, 32], strides = [1, 1]} : vector<256x128xf32> to vector<256x32xf32>
    %12 = vector.extract_strided_slice %2 {offsets = [0, 96], sizes = [256, 32], strides = [1, 1]} : vector<256x128xf32> to vector<256x32xf32>
    %13 = arith.maximumf %11, %12 : vector<256x32xf32>
    %14 = vector.broadcast %3 : vector<1x32xf32> to vector<256x32xf32>
    %15 = arith.addf %13, %14 : vector<256x32xf32>
    %cst_6 = arith.constant 0.000000e+00 : f32
    %16 = vector.broadcast %cst_6 : f32 to vector<256x32xf32>
    %17 = arith.maximumf %15, %16 : vector<256x32xf32>
    %18 = tpu.iota {dimensions = array<i32: 0>} : vector<256x1xi32>
    %c64_i32 = arith.constant 64 : i32
    %c0_i32 = arith.constant 0 : i32
    %19 = arith.cmpi eq, %c64_i32, %c0_i32 : i32
    %c1_i32 = arith.constant 1 : i32
    %20 = arith.select %19, %c1_i32, %c64_i32 : i32
    %21 = vector.broadcast %20 : i32 to vector<256x1xi32>
    %22 = arith.remsi %18, %21 : vector<256x1xi32>
    %c0_i32_7 = arith.constant 0 : i32
    %23 = vector.broadcast %c0_i32_7 : i32 to vector<256x1xi32>
    %24 = arith.cmpi ne, %22, %23 : vector<256x1xi32>
    %c0_i32_8 = arith.constant 0 : i32
    %25 = vector.broadcast %c0_i32_8 : i32 to vector<256x1xi32>
    %26 = arith.cmpi slt, %22, %25 : vector<256x1xi32>
    %c0_i32_9 = arith.constant 0 : i32
    %27 = arith.cmpi slt, %20, %c0_i32_9 : i32
    %28 = vector.broadcast %27 : i1 to vector<256x1xi1>
    %29 = vector.broadcast %28 : vector<256x1xi1> to vector<256x1xi1>
    %30 = arith.xori %26, %29 : vector<256x1xi1>
    %31 = arith.andi %30, %24 : vector<256x1xi1>
    %32 = vector.broadcast %20 : i32 to vector<256x1xi32>
    %33 = arith.addi %22, %32 : vector<256x1xi32>
    %34 = arith.select %31, %33, %22 : vector<256x1xi1>, vector<256x1xi32>
    %c0_i32_10 = arith.constant 0 : i32
    %35 = vector.broadcast %c0_i32_10 : i32 to vector<256x1xi32>
    %36 = arith.cmpi eq, %34, %35 : vector<256x1xi32>
    %c1_i32_11 = arith.constant 1 : i32
    %37 = tpu.dynamic_rotate %17 by %c1_i32_11 dim 0 : vector<256x32xf32>, i32 -> vector<256x32xf32>
    %cst_12 = arith.constant 0.000000e+00 : f32
    %38 = vector.shape_cast %36 : vector<256x1xi1> to vector<256x1xi1>
    %39 = vector.broadcast %38 : vector<256x1xi1> to vector<256x32xi1>
    %40 = vector.broadcast %cst_12 : f32 to vector<256x32xf32>
    %41 = arith.select %39, %40, %37 : vector<256x32xi1>, vector<256x32xf32>
    %c63_i32 = arith.constant 63 : i32
    %42 = vector.broadcast %c63_i32 : i32 to vector<256x1xi32>
    %43 = arith.cmpi eq, %34, %42 : vector<256x1xi32>
    %c255_i32 = arith.constant 255 : i32
    %44 = tpu.dynamic_rotate %10 by %c255_i32 dim 0 : vector<256x32xf32>, i32 -> vector<256x32xf32>
    %cst_13 = arith.constant 0.000000e+00 : f32
    %45 = vector.shape_cast %43 : vector<256x1xi1> to vector<256x1xi1>
    %46 = vector.broadcast %45 : vector<256x1xi1> to vector<256x32xi1>
    %47 = vector.broadcast %cst_13 : f32 to vector<256x32xf32>
    %48 = arith.select %46, %47, %44 : vector<256x32xi1>, vector<256x32xf32>
    %c0_14 = arith.constant 0 : index
    %c0_15 = arith.constant 0 : index
    %49 = vector.load %arg4[%c0_14, %c0_15] : memref<96x64xf32, #tpu.memory_space<vmem>>, vector<32x64xf32>
    %c32 = arith.constant 32 : index
    %c0_16 = arith.constant 0 : index
    %50 = vector.load %arg4[%c32, %c0_16] : memref<96x64xf32, #tpu.memory_space<vmem>>, vector<32x64xf32>
    %c64 = arith.constant 64 : index
    %c0_17 = arith.constant 0 : index
    %51 = vector.load %arg4[%c64, %c0_17] : memref<96x64xf32, #tpu.memory_space<vmem>>, vector<32x64xf32>
    %cst_18 = arith.constant dense<0.000000e+00> : vector<256x64xf32>
    %52 = tpu.matmul %41, %49, %cst_18 {dimension_numbers = #tpu.dot_dimension_numbers<[1], [0], [0], [1], [0, 0, 1, 1], [], []>} : vector<256x32xf32>, vector<32x64xf32>, vector<256x64xf32> -> vector<256x64xf32>
    %cst_19 = arith.constant dense<0.000000e+00> : vector<256x64xf32>
    %53 = tpu.matmul %10, %50, %cst_19 {dimension_numbers = #tpu.dot_dimension_numbers<[1], [0], [0], [1], [0, 0, 1, 1], [], []>} : vector<256x32xf32>, vector<32x64xf32>, vector<256x64xf32> -> vector<256x64xf32>
    %54 = arith.addf %52, %53 : vector<256x64xf32>
    %cst_20 = arith.constant dense<0.000000e+00> : vector<256x64xf32>
    %55 = tpu.matmul %17, %51, %cst_20 {dimension_numbers = #tpu.dot_dimension_numbers<[1], [0], [0], [1], [0, 0, 1, 1], [], []>} : vector<256x32xf32>, vector<32x64xf32>, vector<256x64xf32> -> vector<256x64xf32>
    %56 = arith.addf %54, %55 : vector<256x64xf32>
    %cst_21 = arith.constant dense<0.000000e+00> : vector<256x64xf32>
    %57 = tpu.matmul %10, %49, %cst_21 {dimension_numbers = #tpu.dot_dimension_numbers<[1], [0], [0], [1], [0, 0, 1, 1], [], []>} : vector<256x32xf32>, vector<32x64xf32>, vector<256x64xf32> -> vector<256x64xf32>
    %cst_22 = arith.constant dense<0.000000e+00> : vector<256x64xf32>
    %58 = tpu.matmul %17, %50, %cst_22 {dimension_numbers = #tpu.dot_dimension_numbers<[1], [0], [0], [1], [0, 0, 1, 1], [], []>} : vector<256x32xf32>, vector<32x64xf32>, vector<256x64xf32> -> vector<256x64xf32>
    %59 = arith.addf %57, %58 : vector<256x64xf32>
    %cst_23 = arith.constant dense<0.000000e+00> : vector<256x64xf32>
    %60 = tpu.matmul %48, %51, %cst_23 {dimension_numbers = #tpu.dot_dimension_numbers<[1], [0], [0], [1], [0, 0, 1, 1], [], []>} : vector<256x32xf32>, vector<32x64xf32>, vector<256x64xf32> -> vector<256x64xf32>
    %61 = arith.addf %59, %60 : vector<256x64xf32>
    %62 = arith.maximumf %56, %61 : vector<256x64xf32>
    %c0_24 = arith.constant 0 : index
    %c0_25 = arith.constant 0 : index
    %63 = vector.load %arg5[%c0_24, %c0_25] : memref<1x64xf32, #tpu.memory_space<vmem>>, vector<1x64xf32>
    %64 = vector.broadcast %63 : vector<1x64xf32> to vector<256x64xf32>
    %65 = arith.addf %62, %64 : vector<256x64xf32>
    %cst_26 = arith.constant 0.000000e+00 : f32
    %66 = vector.broadcast %cst_26 : f32 to vector<256x64xf32>
    %67 = arith.maximumf %65, %66 : vector<256x64xf32>
    %68 = arith.truncf %67 : vector<256x64xf32> to vector<256x64xbf16>
    %c0_27 = arith.constant 0 : index
    %c0_28 = arith.constant 0 : index
    %69 = vector.load %arg6[%c0_27, %c0_28] : memref<256x64xbf16, #tpu.memory_space<vmem>>, vector<256x64xbf16>
    tpu.vector_store %arg6[%c0_27, %c0_28], %68 {strides = array<i32>} : memref<256x64xbf16, #tpu.memory_space<vmem>>, vector<256x64xbf16>,
    return
  }
  func.func @transform_0(%arg0: i32) -> (i32, i32) {
    %c0_i32 = arith.constant 0 : i32
    %c0_i32_0 = arith.constant 0 : i32
    return %arg0, %c0_i32 : i32, i32
  }
  func.func @transform_1(%arg0: i32) -> (i32, i32) {
    %c0_i32 = arith.constant 0 : i32
    %c0_i32_0 = arith.constant 0 : i32
    %c0_i32_1 = arith.constant 0 : i32
    return %c0_i32, %c0_i32_0 : i32, i32
  }
  func.func @transform_2(%arg0: i32) -> (i32, i32) {
    %c0_i32 = arith.constant 0 : i32
    %c0_i32_0 = arith.constant 0 : i32
    %c0_i32_1 = arith.constant 0 : i32
    return %c0_i32, %c0_i32_0 : i32, i32
  }
  func.func @transform_3(%arg0: i32) -> (i32, i32) {
    %c0_i32 = arith.constant 0 : i32
    %c0_i32_0 = arith.constant 0 : i32
    %c0_i32_1 = arith.constant 0 : i32
    return %c0_i32, %c0_i32_0 : i32, i32
  }
  func.func @transform_4(%arg0: i32) -> (i32, i32) {
    %c0_i32 = arith.constant 0 : i32
    %c0_i32_0 = arith.constant 0 : i32
    %c0_i32_1 = arith.constant 0 : i32
    return %c0_i32, %c0_i32_0 : i32, i32
  }
  func.func @transform_5(%arg0: i32) -> (i32, i32) {
    %c0_i32 = arith.constant 0 : i32
    %c0_i32_0 = arith.constant 0 : i32
    return %arg0, %c0_i32 : i32, i32
  }
}

module attributes {stable_mosaic.version = 11 : i64} {
  func.func @_fc_kernel(%arg0: i32, %arg1: memref<8x4096xbf16, #tpu.memory_space<vmem>>, %arg2: memref<4096x128xbf16, #tpu.memory_space<vmem>>, %arg3: memref<1x128xf32, #tpu.memory_space<vmem>>, %arg4: memref<128x1xf32, #tpu.memory_space<vmem>>, %arg5: memref<1x1xf32, #tpu.memory_space<vmem>>, %arg6: memref<8x1xf32, #tpu.memory_space<vmem>>) attributes {dimension_semantics = [#tpu.dimension_semantics<arbitrary>], iteration_bounds = array<i64: 1>, scalar_prefetch = 0 : i64, scratch_operands = 0 : i64, tpu.core_type = #tpu.core_type<tc>, window_params = [{pipeline_mode = #tpu.pipeline_mode<synchronous>, transform_indices = @transform_0, window_bounds = array<i64: 8, 4096>}, {pipeline_mode = #tpu.pipeline_mode<synchronous>, transform_indices = @transform_1, window_bounds = array<i64: 4096, 128>}, {pipeline_mode = #tpu.pipeline_mode<synchronous>, transform_indices = @transform_2, window_bounds = array<i64: 1, 128>}, {pipeline_mode = #tpu.pipeline_mode<synchronous>, transform_indices = @transform_3, window_bounds = array<i64: 128, 1>}, {pipeline_mode = #tpu.pipeline_mode<synchronous>, transform_indices = @transform_4, window_bounds = array<i64: 1, 1>}, {pipeline_mode = #tpu.pipeline_mode<synchronous>, transform_indices = @transform_5, window_bounds = array<i64: 8, 1>}]} {
    %c0 = arith.constant 0 : index
    %c0_0 = arith.constant 0 : index
    %0 = vector.load %arg1[%c0, %c0_0] : memref<8x4096xbf16, #tpu.memory_space<vmem>>, vector<8x4096xbf16>
    %c0_1 = arith.constant 0 : index
    %c0_2 = arith.constant 0 : index
    %1 = vector.load %arg2[%c0_1, %c0_2] : memref<4096x128xbf16, #tpu.memory_space<vmem>>, vector<4096x128xbf16>
    %cst = arith.constant dense<0.000000e+00> : vector<8x128xf32>
    %2 = tpu.matmul %0, %1, %cst {dimension_numbers = #tpu.dot_dimension_numbers<[1], [0], [0], [1], [0, 0, 1, 1], [], []>} : vector<8x4096xbf16>, vector<4096x128xbf16>, vector<8x128xf32> -> vector<8x128xf32>
    %c0_3 = arith.constant 0 : index
    %c0_4 = arith.constant 0 : index
    %3 = vector.load %arg3[%c0_3, %c0_4] : memref<1x128xf32, #tpu.memory_space<vmem>>, vector<1x128xf32>
    %4 = vector.broadcast %3 : vector<1x128xf32> to vector<8x128xf32>
    %5 = arith.addf %2, %4 : vector<8x128xf32>
    %cst_5 = arith.constant 0.000000e+00 : f32
    %6 = vector.broadcast %cst_5 : f32 to vector<8x128xf32>
    %7 = arith.maximumf %5, %6 : vector<8x128xf32>
    %c0_6 = arith.constant 0 : index
    %c0_7 = arith.constant 0 : index
    %8 = vector.load %arg4[%c0_6, %c0_7] : memref<128x1xf32, #tpu.memory_space<vmem>>, vector<128x1xf32>
    %cst_8 = arith.constant dense<0.000000e+00> : vector<8x1xf32>
    %9 = tpu.matmul %7, %8, %cst_8 {dimension_numbers = #tpu.dot_dimension_numbers<[1], [0], [0], [1], [0, 0, 1, 1], [], []>} : vector<8x128xf32>, vector<128x1xf32>, vector<8x1xf32> -> vector<8x1xf32>
    %c0_9 = arith.constant 0 : index
    %c0_10 = arith.constant 0 : index
    %10 = vector.load %arg5[%c0_9, %c0_10] : memref<1x1xf32, #tpu.memory_space<vmem>>, vector<1x1xf32>
    %11 = vector.broadcast %10 : vector<1x1xf32> to vector<8x1xf32>
    %12 = arith.addf %9, %11 : vector<8x1xf32>
    %c0_11 = arith.constant 0 : index
    %c0_12 = arith.constant 0 : index
    %13 = vector.load %arg6[%c0_11, %c0_12] : memref<8x1xf32, #tpu.memory_space<vmem>>, vector<8x1xf32>
    tpu.vector_store %arg6[%c0_11, %c0_12], %12 {strides = array<i32>} : memref<8x1xf32, #tpu.memory_space<vmem>>, vector<8x1xf32>,
    return
  }
  func.func @transform_0(%arg0: i32) -> (i32, i32) {
    %c0_i32 = arith.constant 0 : i32
    %c0_i32_0 = arith.constant 0 : i32
    %c0_i32_1 = arith.constant 0 : i32
    return %c0_i32, %c0_i32_0 : i32, i32
  }
  func.func @transform_1(%arg0: i32) -> (i32, i32) {
    %c0_i32 = arith.constant 0 : i32
    %c0_i32_0 = arith.constant 0 : i32
    %c0_i32_1 = arith.constant 0 : i32
    return %c0_i32, %c0_i32_0 : i32, i32
  }
  func.func @transform_2(%arg0: i32) -> (i32, i32) {
    %c0_i32 = arith.constant 0 : i32
    %c0_i32_0 = arith.constant 0 : i32
    %c0_i32_1 = arith.constant 0 : i32
    return %c0_i32, %c0_i32_0 : i32, i32
  }
  func.func @transform_3(%arg0: i32) -> (i32, i32) {
    %c0_i32 = arith.constant 0 : i32
    %c0_i32_0 = arith.constant 0 : i32
    %c0_i32_1 = arith.constant 0 : i32
    return %c0_i32, %c0_i32_0 : i32, i32
  }
  func.func @transform_4(%arg0: i32) -> (i32, i32) {
    %c0_i32 = arith.constant 0 : i32
    %c0_i32_0 = arith.constant 0 : i32
    %c0_i32_1 = arith.constant 0 : i32
    return %c0_i32, %c0_i32_0 : i32, i32
  }
  func.func @transform_5(%arg0: i32) -> (i32, i32) {
    %c0_i32 = arith.constant 0 : i32
    %c0_i32_0 = arith.constant 0 : i32
    %c0_i32_1 = arith.constant 0 : i32
    return %c0_i32, %c0_i32_0 : i32, i32
  }
}

</mosaic_0001>

<llo_original>
// kernel: net_afd_forward.2
$region0: #{net_afd_forward.2}
  #allocation0 [shape = 'u32[]', space=smem, size = 0x4, offset = 0x4, fixed_abs, tag = 'smem constant byte address 0x4 - core index']
  #allocation1 [shape = 'u32[144,128]{1,0:T(1,128)}', space=vmem, size = 0x12000, scoped, tag = 'internal scratch']
  %s0 = inlined_call_operand.vmem [shape: f32[512,32], index: 0, kind: input, shape index: {}]
  %s1 = inlined_call_operand.vmem [shape: f32[32,128], index: 1, kind: input, shape index: {}]
  %s2 = inlined_call_operand.vmem [shape: f32[1,32], index: 2, kind: input, shape index: {}]
  %s3 = inlined_call_operand.vmem [shape: f32[96,64], index: 3, kind: input, shape index: {}]
  %s4 = inlined_call_operand.vmem [shape: f32[1,64], index: 4, kind: input, shape index: {}]
  %s5 = inlined_call_operand.vmem [shape: bf16[512,64], index: 5, kind: output, shape index: {}]
  %s6 = sld [smem:[#allocation0]]
  $region53: #{net_afd_forward.2} parent=0
    _
  %s8 = ssub.s32 1, %s6
  %s9 = scalar_select 0, %s8, %s6
  loop: start=0, step=1, limit=4
  $region2: #{net_afd_forward.2} parent=0 // loop_pre_header
    _
  $region3: #{net_afd_forward.2} parent=0 // loop_header
    %s11 = sphi 0, %s15
    %p12 = scmp.ge.s32.totalorder %s11, 4
    %s21 = sphi 0, %s23
    %s24 = sphi 0, %s21
    %s25 = sphi 0, %s24
    %s41 = sphi 0, %s25
    %s45 = sphi 0, %s45
    %s47 = sphi 0, %s45
    %s48 = sphi 0, %s47
    %s62 = sphi 0, %s48
    %s66 = sphi 0, %s66
    %s68 = sphi 0, %s66
    %s69 = sphi 0, %s68
    %s83 = sphi 0, %s69
    %s87 = sphi 0, %s87
    %s89 = sphi 0, %s87
    %s90 = sphi 0, %s89
    %s104 = sphi 0, %s90
    %s108 = sphi 0, %s108
    %s110 = sphi 0, %s108
    %s111 = sphi 0, %s110
    %s125 = sphi 0, %s111
    %s131 = sphi 0, %s133
    %s134 = sphi 0, %s131
    %s135 = sphi 0, %s134
    %s151 = sphi 0, %s135
  $region4: #{net_afd_forward.2} parent=0 // loop_header_branch
    %14 = sbr.rel (%p12) target = $region8
  $region5: #{net_afd_forward.2} parent=0 // loop_body
    %s16 = ssub.s32 %s11, 1
    %s17 = ssub.s32 %s11, 2
    %s18 = sadd.s32 %s11, 1
    %s19 = ssub.s32 %s11, %s18
    %p20 = scmp.eq.s32.totalorder %s19, 0
    %s22 = sadd.s32 %s21, 1
    %s23 = scalar_select %p20, %s21, %s22
    %p26 = pneg %p20
    %p27 = scmp.eq.s32.totalorder %s11, 1
    %p28 = por %p26, %p27
    %p29 = scmp.ne.s32.totalorder %s21, %s24
    %p30 = scmp.eq.s32.totalorder %s11, 0
    %p31 = por %p29, %p30
    %p32 = scmp.ne.s32.totalorder %s21, %s24
    %p33 = scmp.eq.s32.totalorder %s16, 1
    %p34 = por %p32, %p33
    %p35 = scmp.ne.s32.totalorder %s24, %s25
    %p36 = scmp.eq.s32.totalorder %s16, 0
    %p37 = por %p35, %p36
    %p38 = scmp.ne.s32.totalorder %s24, %s25
    %p39 = scmp.eq.s32.totalorder %s17, 1
    %p40 = por %p38, %p39
    %p42 = scmp.ne.s32.totalorder %s25, %s41
    %p43 = scmp.eq.s32.totalorder %s17, 0
    %p44 = por %p42, %p43
    %s46 = sadd.s32 %s45, 1
    %p49 = scmp.eq.s32.totalorder %s11, 1
    %p50 = scmp.ne.s32.totalorder %s45, %s47
    %p51 = scmp.eq.s32.totalorder %s11, 0
    %p52 = por %p50, %p51
    %p53 = scmp.ne.s32.totalorder %s45, %s47
    %p54 = scmp.eq.s32.totalorder %s16, 1
    %p55 = por %p53, %p54
    %p56 = scmp.ne.s32.totalorder %s47, %s48
    %p57 = scmp.eq.s32.totalorder %s16, 0
    %p58 = por %p56, %p57
    %p59 = scmp.ne.s32.totalorder %s47, %s48
    %p60 = scmp.eq.s32.totalorder %s17, 1
    %p61 = por %p59, %p60
    %p63 = scmp.ne.s32.totalorder %s48, %s62
    %p64 = scmp.eq.s32.totalorder %s17, 0
    %p65 = por %p63, %p64
    %s67 = sadd.s32 %s66, 1
    %p70 = scmp.eq.s32.totalorder %s11, 1
    %p71 = scmp.ne.s32.totalorder %s66, %s68
    %p72 = scmp.eq.s32.totalorder %s11, 0
    %p73 = por %p71, %p72
    %p74 = scmp.ne.s32.totalorder %s66, %s68
    %p75 = scmp.eq.s32.totalorder %s16, 1
    %p76 = por %p74, %p75
    %p77 = scmp.ne.s32.totalorder %s68, %s69
    %p78 = scmp.eq.s32.totalorder %s16, 0
    %p79 = por %p77, %p78
    %p80 = scmp.ne.s32.totalorder %s68, %s69
    %p81 = scmp.eq.s32.totalorder %s17, 1
    %p82 = por %p80, %p81
    %p84 = scmp.ne.s32.totalorder %s69, %s83
    %p85 = scmp.eq.s32.totalorder %s17, 0
    %p86 = por %p84, %p85
    %s88 = sadd.s32 %s87, 1
    %p91 = scmp.eq.s32.totalorder %s11, 1
    %p92 = scmp.ne.s32.totalorder %s87, %s89
    %p93 = scmp.eq.s32.totalorder %s11, 0
    %p94 = por %p92, %p93
    %p95 = scmp.ne.s32.totalorder %s87, %s89
    %p96 = scmp.eq.s32.totalorder %s16, 1
    %p97 = por %p95, %p96
    %p98 = scmp.ne.s32.totalorder %s89, %s90
    %p99 = scmp.eq.s32.totalorder %s16, 0
    %p100 = por %p98, %p99
    %p101 = scmp.ne.s32.totalorder %s89, %s90
    %p102 = scmp.eq.s32.totalorder %s17, 1
    %p103 = por %p101, %p102
    %p105 = scmp.ne.s32.totalorder %s90, %s104
    %p106 = scmp.eq.s32.totalorder %s17, 0
    %p107 = por %p105, %p106
    %s109 = sadd.s32 %s108, 1
    %p112 = scmp.eq.s32.totalorder %s11, 1
    %p113 = scmp.ne.s32.totalorder %s108, %s110
    %p114 = scmp.eq.s32.totalorder %s11, 0
    %p115 = por %p113, %p114
    %p116 = scmp.ne.s32.totalorder %s108, %s110
    %p117 = scmp.eq.s32.totalorder %s16, 1
    %p118 = por %p116, %p117
    %p119 = scmp.ne.s32.totalorder %s110, %s111
    %p120 = scmp.eq.s32.totalorder %s16, 0
    %p121 = por %p119, %p120
    %p122 = scmp.ne.s32.totalorder %s110, %s111
    %p123 = scmp.eq.s32.totalorder %s17, 1
    %p124 = por %p122, %p123
    %p126 = scmp.ne.s32.totalorder %s111, %s125
    %p127 = scmp.eq.s32.totalorder %s17, 0
    %p128 = por %p126, %p127
    %s129 = ssub.s32 %s11, %s18
    %p130 = scmp.eq.s32.totalorder %s129, 0
    %s132 = sadd.s32 %s131, 1
    %s133 = scalar_select %p130, %s131, %s132
    %p136 = pneg %p130
    %p137 = scmp.eq.s32.totalorder %s11, 1
    %p138 = por %p136, %p137
    %p139 = scmp.ne.s32.totalorder %s131, %s134
    %p140 = scmp.eq.s32.totalorder %s11, 0
    %p141 = por %p139, %p140
    %p142 = scmp.ne.s32.totalorder %s131, %s134
    %p143 = scmp.eq.s32.totalorder %s16, 1
    %p144 = por %p142, %p143
    %p145 = scmp.ne.s32.totalorder %s134, %s135
    %p146 = scmp.eq.s32.totalorder %s16, 0
    %p147 = por %p145, %p146
    %p148 = scmp.ne.s32.totalorder %s134, %s135
    %p149 = scmp.eq.s32.totalorder %s17, 1
    %p150 = por %p148, %p149
    %p152 = scmp.ne.s32.totalorder %s135, %s151
    %p153 = scmp.eq.s32.totalorder %s17, 0
    %p154 = por %p152, %p153
    %p155 = scmp.le.s32.totalorder 1, %s11
    %p156 = scmp.lt.s32.totalorder %s11, 3
    %p157 = pnand %p155, %p156
    %p158 = pneg %p157
    // Predicated region
    $region9: #{net_afd_forward.2} parent=5 // pred_check
      _
    $region10: #{net_afd_forward.2} parent=5 // pred_check_branch
      %160 = sbr.rel (%p157) target = $region12
    $region11: #{net_afd_forward.2} parent=5 // pred_region
      %s161 = ssub.s32 %s11, 1
      // Predicated region
      $region13: #{net_afd_forward.2} parent=11 // pred_check
        %p162 = pneg %p58
      $region14: #{net_afd_forward.2} parent=11 // pred_check_branch
        %164 = sbr.rel (%p162) target = $region16
      $region15: #{net_afd_forward.2} parent=11 // pred_region
        _
      $region16: #{net_afd_forward.2} parent=11 // pred_fallthru
        _
      // Predicated region
      $region17: #{net_afd_forward.2} parent=11 // pred_check
        %p165 = pneg %p79
      $region18: #{net_afd_forward.2} parent=11 // pred_check_branch
        %167 = sbr.rel (%p165) target = $region20
      $region19: #{net_afd_forward.2} parent=11 // pred_region
        _
      $region20: #{net_afd_forward.2} parent=11 // pred_fallthru
        _
      // Predicated region
      $region21: #{net_afd_forward.2} parent=11 // pred_check
        %p168 = pneg %p100
      $region22: #{net_afd_forward.2} parent=11 // pred_check_branch
        %170 = sbr.rel (%p168) target = $region24
      $region23: #{net_afd_forward.2} parent=11 // pred_region
        _
      $region24: #{net_afd_forward.2} parent=11 // pred_fallthru
        _
      // Predicated region
      $region25: #{net_afd_forward.2} parent=11 // pred_check
        %p171 = pneg %p121
      $region26: #{net_afd_forward.2} parent=11 // pred_check_branch
        %173 = sbr.rel (%p171) target = $region28
      $region27: #{net_afd_forward.2} parent=11 // pred_region
        _
      $region28: #{net_afd_forward.2} parent=11 // pred_fallthru
        _
    $region12: #{net_afd_forward.2} parent=5 // pred_fallthru
      _
    %p174 = scmp.lt.s32.totalorder %s11, 2
    // Predicated region
    $region29: #{net_afd_forward.2} parent=5 // pred_check
      %p175 = pneg %p174
    $region30: #{net_afd_forward.2} parent=5 // pred_check_branch
      %177 = sbr.rel (%p175) target = $region32
    $region31: #{net_afd_forward.2} parent=5 // pred_region
      // Predicated region
      $region33: #{net_afd_forward.2} parent=31 // pred_check
        %p178 = pneg %p31
      $region34: #{net_afd_forward.2} parent=31 // pred_check_branch
        %180 = sbr.rel (%p178) target = $region36
      $region35: #{net_afd_forward.2} parent=31 // pred_region
        %s181 = smul.u32 32, %s11
        %p182 = scmp.lt.s32.totalorder %s181, 63
        %s183 = scalar_select %p182, %s181, 63
        %s184 = smul.addr %s183, 8
        %s185 = scalar_lea.vmem %s0, %s184
        %s186 = smul.u32 32, %s11
      $region36: #{net_afd_forward.2} parent=31 // pred_fallthru
        _
    $region32: #{net_afd_forward.2} parent=5 // pred_fallthru
      _
    %p187 = scmp.le.s32.totalorder 1, %s11
    %p188 = scmp.lt.s32.totalorder %s11, 3
    %p189 = pnand %p187, %p188
    %p190 = pneg %p189
    // Predicated region
    $region37: #{net_afd_forward.2} parent=5 // pred_check
      _
    $region38: #{net_afd_forward.2} parent=5 // pred_check_branch
      %192 = sbr.rel (%p189) target = $region40
    $region39: #{net_afd_forward.2} parent=5 // pred_region
      %s193 = ssub.s32 %s11, 1
      %s194 = smul.u32 32, %s16
      %p195 = scmp.lt.s32.totalorder %s194, 63
      %s196 = scalar_select %p195, %s194, 63
      %s197 = smul.addr %s196, 8
      %s198 = scalar_lea.vmem %s0, %s197
      %p199 = pneg %p37
      %p200 = pneg %p34
      %p201 = pneg %p58
      %p202 = pneg %p55
      %p203 = pneg %p79
      %p204 = pneg %p76
      %p205 = pneg %p100
      %p206 = pneg %p97
      %p207 = pneg %p121
      %p208 = pneg %p118
      %p209 = pneg %p147
      %p210 = pneg %p144
      %s211 = smul.u32 32, %s16
      %p212 = scmp.lt.s32.totalorder %s211, 63
      %s213 = scalar_select %p212, %s211, 63
      %s214 = smul.addr %s213, 4
      %s215 = scalar_lea.vmem %s5, %s214
      %s216 = smul.u32 32, %s16
      %p217 = scmp.lt.s32.totalorder %s216, 63
      %s218 = scalar_select %p217, %s216, 63
      %s219 = smul.addr %s218, 8
      %s220 = scalar_lea.vmem %s0, %s219
      %s221 = smul.u32 32, %s16
      %s222 = smul.u32 32, %s16
      %p223 = scmp.lt.s32.totalorder %s222, 63
      %s224 = scalar_select %p223, %s222, 63
      %s225 = smul.addr %s224, 4
      %s226 = scalar_lea.vmem %s5, %s225
      %s227 = smul.u32 32, %s16
      %v228 = vld [vmem:[%s220] sm:$0xff]
      %v229 = vld [vmem:[%s220 + $0x8] sm:$0xff]
      %v230 = vld [vmem:[%s220 + $0x10] sm:$0xff]
      %v231 = vld [vmem:[%s220 + $0x18] sm:$0xff]
      %v232 = vld [vmem:[%s220 + $0x20] sm:$0xff]
      %v233 = vld [vmem:[%s220 + $0x28] sm:$0xff]
      %v234 = vld [vmem:[%s220 + $0x30] sm:$0xff]
      %v235 = vld [vmem:[%s220 + $0x38] sm:$0xff]
      %v236 = vld [vmem:[%s220 + $0x40] sm:$0xff]
      %v237 = vld [vmem:[%s220 + $0x48] sm:$0xff]
      %v238 = vld [vmem:[%s220 + $0x50] sm:$0xff]
      %v239 = vld [vmem:[%s220 + $0x58] sm:$0xff]
      %v240 = vld [vmem:[%s220 + $0x60] sm:$0xff]
      %v241 = vld [vmem:[%s220 + $0x68] sm:$0xff]
      %v242 = vld [vmem:[%s220 + $0x70] sm:$0xff]
      %v243 = vld [vmem:[%s220 + $0x78] sm:$0xff]
      %v244 = vld [vmem:[%s220 + $0x80] sm:$0xff]
      %v245 = vld [vmem:[%s220 + $0x88] sm:$0xff]
      %v246 = vld [vmem:[%s220 + $0x90] sm:$0xff]
      %v247 = vld [vmem:[%s220 + $0x98] sm:$0xff]
      %v248 = vld [vmem:[%s220 + $0xa0] sm:$0xff]
      %v249 = vld [vmem:[%s220 + $0xa8] sm:$0xff]
      %v250 = vld [vmem:[%s220 + $0xb0] sm:$0xff]
      %v251 = vld [vmem:[%s220 + $0xb8] sm:$0xff]
      %v252 = vld [vmem:[%s220 + $0xc0] sm:$0xff]
      %v253 = vld [vmem:[%s220 + $0xc8] sm:$0xff]
      %v254 = vld [vmem:[%s220 + $0xd0] sm:$0xff]
      %v255 = vld [vmem:[%s220 + $0xd8] sm:$0xff]
      %v256 = vld [vmem:[%s220 + $0xe0] sm:$0xff]
      %v257 = vld [vmem:[%s220 + $0xe8] sm:$0xff]
      %v258 = vld [vmem:[%s220 + $0xf0] sm:$0xff]
      %v259 = vld [vmem:[%s220 + $0xf8] sm:$0xff]
      %v260 = vld [vmem:[%s1] sm:$0xff]
      %v261 = vld [vmem:[%s1 + $0x8] sm:$0xff]
      %v262 = vld [vmem:[%s1 + $0x10] sm:$0xff]
      %v263 = vld [vmem:[%s1 + $0x18] sm:$0xff]
      %vm264 = vcmask 261120
      %v266 = vsel %vm264, %v228, 0
      %v269 = vsel %vm264, %v229, 0
      %v272 = vsel %vm264, %v230, 0
      %v275 = vsel %vm264, %v231, 0
      %v278 = vsel %vm264, %v232, 0
      %v281 = vsel %vm264, %v233, 0
      %v284 = vsel %vm264, %v234, 0
      %v287 = vsel %vm264, %v235, 0
      %v290 = vsel %vm264, %v236, 0
      %v293 = vsel %vm264, %v237, 0
      %v296 = vsel %vm264, %v238, 0
      %v299 = vsel %vm264, %v239, 0
      %v302 = vsel %vm264, %v240, 0
      %v305 = vsel %vm264, %v241, 0
      %v308 = vsel %vm264, %v242, 0
      %v311 = vsel %vm264, %v243, 0
      %v314 = vsel %vm264, %v244, 0
      %v317 = vsel %vm264, %v245, 0
      %v320 = vsel %vm264, %v246, 0
      %v323 = vsel %vm264, %v247, 0
      %v326 = vsel %vm264, %v248, 0
      %v329 = vsel %vm264, %v249, 0
      %v332 = vsel %vm264, %v250, 0
      %v335 = vsel %vm264, %v251, 0
      %v338 = vsel %vm264, %v252, 0
      %v341 = vsel %vm264, %v253, 0
      %v344 = vsel %vm264, %v254, 0
      %v347 = vsel %vm264, %v255, 0
      %v350 = vsel %vm264, %v256, 0
      %v353 = vsel %vm264, %v257, 0
      %v356 = vsel %vm264, %v258, 0
      %v359 = vsel %vm264, %v259, 0
      %361 = vmatprep.subr.mxu0 0.0
      %362 = vmatpush1.msra.mxu0 %v260
      %363 = vmatprep.subr.mxu0 0.0
      %364 = vmatpush1.msra.mxu0 %v261
      %365 = vmatprep.subr.mxu0 0.0
      %366 = vmatpush1.msra.mxu0 %v262
      %367 = vmatprep.subr.mxu0 0.0
      %368 = vmatpush1.msra.mxu0 %v263
      %369 = vmatprep.subr.mxu0 0.0
      %370 = vmatpush1.msra.mxu0 0.0
      %371 = vmatprep.subr.mxu0 0.0
      %372 = vmatpush1.msra.mxu0 0.0
      %373 = vmatprep.subr.mxu0 0.0
      %374 = vmatpush1.msra.mxu0 0.0
      %375 = vmatprep.subr.mxu0 0.0
      %376 = vmatpush1.msra.mxu0 0.0
      %377 = vmatprep.subr.mxu0 0.0
      %378 = vmatpush1.msra.mxu0 0.0
      %379 = vmatprep.subr.mxu0 0.0
      %380 = vmatpush1.msra.mxu0 0.0
      %381 = vmatprep.subr.mxu0 0.0
      %382 = vmatpush1.msra.mxu0 0.0
      %383 = vmatprep.subr.mxu0 0.0
      %384 = vmatpush1.msra.mxu0 0.0
      %385 = vmatprep.subr.mxu0 0.0
      %386 = vmatpush1.msra.mxu0 0.0
      %387 = vmatprep.subr.mxu0 0.0
      %388 = vmatpush1.msra.mxu0 0.0
      %389 = vmatprep.subr.mxu0 0.0
      %390 = vmatpush1.msra.mxu0 0.0
      %391 = vmatprep.subr.mxu0 0.0
      %392 = vmatpush1.msra.mxu0 0.0
      %393 = vmatprep.subr.mxu0 0.0
      %394 = vmatpush1.msra.mxu0 0.0
      %395 = vmatprep.subr.mxu0 0.0
      %396 = vmatpush1.msra.mxu0 0.0
      %397 = vmatprep.subr.mxu0 0.0
      %398 = vmatpush1.msra.mxu0 0.0
      %399 = vmatprep.subr.mxu0 0.0
      %400 = vmatpush1.msra.mxu0 0.0
      %401 = vmatprep.subr.mxu0 0.0
      %402 = vmatpush1.msra.mxu0 0.0
      %403 = vmatprep.subr.mxu0 0.0
      %404 = vmatpush1.msra.mxu0 0.0
      %405 = vmatprep.subr.mxu0 0.0
      %406 = vmatpush1.msra.mxu0 0.0
      %407 = vmatprep.subr.mxu0 0.0
      %408 = vmatpush1.msra.mxu0 0.0
      %409 = vmatprep.subr.mxu0 0.0
      %410 = vmatpush1.msra.mxu0 0.0
      %411 = vmatprep.subr.mxu0 0.0
      %412 = vmatpush1.msra.mxu0 0.0
      %413 = vmatprep.subr.mxu0 0.0
      %414 = vmatpush1.msra.mxu0 0.0
      %415 = vmatprep.subr.mxu0 0.0
      %416 = vmatpush1.msra.mxu0 0.0
      %417 = vmatprep.subr.mxu0 0.0
      %418 = vmatpush1.msra.mxu0 0.0
      %419 = vmatprep.subr.mxu0 0.0
      %420 = vmatpush1.msra.mxu0 0.0
      %421 = vmatprep.subr.mxu0 0.0
      %422 = vmatpush1.msra.mxu0 0.0
      %423 = vmatprep.subr.mxu0 0.0
      %424 = vmatpush1.msra.mxu0 0.0
      %425 = vmatprep.mubr.f32.mxu0 0.0
      %426 = vmatmul.mubr.f32.gmra.mrb[0].mxu0 %v266
      %v427 = vpop.f32.mrb[0].mxu0
      %v428 = vadd.f32 0.0, %v427
      %v429 = vpop.f32.mrb[0].mxu0
      %430 = vmatprep.mubr.f32.mxu0 0.0
      %431 = vmatmul.mubr.f32.gmra.mrb[0].mxu0 %v269
      %v432 = vpop.f32.mrb[0].mxu0
      %v433 = vadd.f32 0.0, %v432
      %v434 = vpop.f32.mrb[0].mxu0
      %435 = vmatprep.mubr.f32.mxu0 0.0
      %436 = vmatmul.mubr.f32.gmra.mrb[0].mxu0 %v272
      %v437 = vpop.f32.mrb[0].mxu0
      %v438 = vadd.f32 0.0, %v437
      %v439 = vpop.f32.mrb[0].mxu0
      %440 = vmatprep.mubr.f32.mxu0 0.0
      %441 = vmatmul.mubr.f32.gmra.mrb[0].mxu0 %v275
      %v442 = vpop.f32.mrb[0].mxu0
      %v443 = vadd.f32 0.0, %v442
      %v444 = vpop.f32.mrb[0].mxu0
      %445 = vmatprep.mubr.f32.mxu0 0.0
      %446 = vmatmul.mubr.f32.gmra.mrb[0].mxu0 %v278
      %v447 = vpop.f32.mrb[0].mxu0
      %v448 = vadd.f32 0.0, %v447
      %v449 = vpop.f32.mrb[0].mxu0
      %450 = vmatprep.mubr.f32.mxu0 0.0
      %451 = vmatmul.mubr.f32.gmra.mrb[0].mxu0 %v281
      %v452 = vpop.f32.mrb[0].mxu0
      %v453 = vadd.f32 0.0, %v452
      %v454 = vpop.f32.mrb[0].mxu0
      %455 = vmatprep.mubr.f32.mxu0 0.0
      %456 = vmatmul.mubr.f32.gmra.mrb[0].mxu0 %v284
      %v457 = vpop.f32.mrb[0].mxu0
      %v458 = vadd.f32 0.0, %v457
      %v459 = vpop.f32.mrb[0].mxu0
      %460 = vmatprep.mubr.f32.mxu0 0.0
      %461 = vmatmul.mubr.f32.gmra.mrb[0].mxu0 %v287
      %v462 = vpop.f32.mrb[0].mxu0
      %v463 = vadd.f32 0.0, %v462
      %v464 = vpop.f32.mrb[0].mxu0
      %465 = vmatprep.mubr.f32.mxu0 0.0
      %466 = vmatmul.mubr.f32.gmra.mrb[0].mxu0 %v290
      %v467 = vpop.f32.mrb[0].mxu0
      %v468 = vadd.f32 0.0, %v467
      %v469 = vpop.f32.mrb[0].mxu0
      %470 = vmatprep.mubr.f32.mxu0 0.0
      %471 = vmatmul.mubr.f32.gmra.mrb[0].mxu0 %v293
      %v472 = vpop.f32.mrb[0].mxu0
      %v473 = vadd.f32 0.0, %v472
      %v474 = vpop.f32.mrb[0].mxu0
      %475 = vmatprep.mubr.f32.mxu0 0.0
      %476 = vmatmul.mubr.f32.gmra.mrb[0].mxu0 %v296
      %v477 = vpop.f32.mrb[0].mxu0
      %v478 = vadd.f32 0.0, %v477
      %v479 = vpop.f32.mrb[0].mxu0
      %480 = vmatprep.mubr.f32.mxu0 0.0
      %481 = vmatmul.mubr.f32.gmra.mrb[0].mxu0 %v299
      %v482 = vpop.f32.mrb[0].mxu0
      %v483 = vadd.f32 0.0, %v482
      %v484 = vpop.f32.mrb[0].mxu0
      %485 = vmatprep.mubr.f32.mxu0 0.0
      %486 = vmatmul.mubr.f32.gmra.mrb[0].mxu0 %v302
      %v487 = vpop.f32.mrb[0].mxu0
      %v488 = vadd.f32 0.0, %v487
      %v489 = vpop.f32.mrb[0].mxu0
      %490 = vmatprep.mubr.f32.mxu0 0.0
      %491 = vmatmul.mubr.f32.gmra.mrb[0].mxu0 %v305
      %v492 = vpop.f32.mrb[0].mxu0
      %v493 = vadd.f32 0.0, %v492
      %v494 = vpop.f32.mrb[0].mxu0
      %495 = vmatprep.mubr.f32.mxu0 0.0
      %496 = vmatmul.mubr.f32.gmra.mrb[0].mxu0 %v308
      %v497 = vpop.f32.mrb[0].mxu0
      %v498 = vadd.f32 0.0, %v497
      %v499 = vpop.f32.mrb[0].mxu0
      %500 = vmatprep.mubr.f32.mxu0 0.0
      %501 = vmatmul.mubr.f32.gmra.mrb[0].mxu0 %v311
      %v502 = vpop.f32.mrb[0].mxu0
      %v503 = vadd.f32 0.0, %v502
      %v504 = vpop.f32.mrb[0].mxu0
      %505 = vmatprep.mubr.f32.mxu0 0.0
      %506 = vmatmul.mubr.f32.gmra.mrb[0].mxu0 %v314
      %v507 = vpop.f32.mrb[0].mxu0
      %v508 = vadd.f32 0.0, %v507
      %v509 = vpop.f32.mrb[0].mxu0
      %510 = vmatprep.mubr.f32.mxu0 0.0
      %511 = vmatmul.mubr.f32.gmra.mrb[0].mxu0 %v317
      %v512 = vpop.f32.mrb[0].mxu0
      %v513 = vadd.f32 0.0, %v512
      %v514 = vpop.f32.mrb[0].mxu0
      %515 = vmatprep.mubr.f32.mxu0 0.0
      %516 = vmatmul.mubr.f32.gmra.mrb[0].mxu0 %v320
      %v517 = vpop.f32.mrb[0].mxu0
      %v518 = vadd.f32 0.0, %v517
      %v519 = vpop.f32.mrb[0].mxu0
      %520 = vmatprep.mubr.f32.mxu0 0.0
      %521 = vmatmul.mubr.f32.gmra.mrb[0].mxu0 %v323
      %v522 = vpop.f32.mrb[0].mxu0
      %v523 = vadd.f32 0.0, %v522
      %v524 = vpop.f32.mrb[0].mxu0
      %525 = vmatprep.mubr.f32.mxu0 0.0
      %526 = vmatmul.mubr.f32.gmra.mrb[0].mxu0 %v326
      %v527 = vpop.f32.mrb[0].mxu0
      %v528 = vadd.f32 0.0, %v527
      %v529 = vpop.f32.mrb[0].mxu0
      %530 = vmatprep.mubr.f32.mxu0 0.0
      %531 = vmatmul.mubr.f32.gmra.mrb[0].mxu0 %v329
      %v532 = vpop.f32.mrb[0].mxu0
      %v533 = vadd.f32 0.0, %v532
      %v534 = vpop.f32.mrb[0].mxu0
      %535 = vmatprep.mubr.f32.mxu0 0.0
      %536 = vmatmul.mubr.f32.gmra.mrb[0].mxu0 %v332
      %v537 = vpop.f32.mrb[0].mxu0
      %v538 = vadd.f32 0.0, %v537
      %v539 = vpop.f32.mrb[0].mxu0
      %540 = vmatprep.mubr.f32.mxu0 0.0
      %541 = vmatmul.mubr.f32.gmra.mrb[0].mxu0 %v335
      %v542 = vpop.f32.mrb[0].mxu0
      %v543 = vadd.f32 0.0, %v542
      %v544 = vpop.f32.mrb[0].mxu0
      %545 = vmatprep.mubr.f32.mxu0 0.0
      %546 = vmatmul.mubr.f32.gmra.mrb[0].mxu0 %v338
      %v547 = vpop.f32.mrb[0].mxu0
      %v548 = vadd.f32 0.0, %v547
      %v549 = vpop.f32.mrb[0].mxu0
      %550 = vmatprep.mubr.f32.mxu0 0.0
      %551 = vmatmul.mubr.f32.gmra.mrb[0].mxu0 %v341
      %v552 = vpop.f32.mrb[0].mxu0
      %v553 = vadd.f32 0.0, %v552
      %v554 = vpop.f32.mrb[0].mxu0
      %555 = vmatprep.mubr.f32.mxu0 0.0
      %556 = vmatmul.mubr.f32.gmra.mrb[0].mxu0 %v344
      %v557 = vpop.f32.mrb[0].mxu0
      %v558 = vadd.f32 0.0, %v557
      %v559 = vpop.f32.mrb[0].mxu0
      %560 = vmatprep.mubr.f32.mxu0 0.0
      %561 = vmatmul.mubr.f32.gmra.mrb[0].mxu0 %v347
      %v562 = vpop.f32.mrb[0].mxu0
      %v563 = vadd.f32 0.0, %v562
      %v564 = vpop.f32.mrb[0].mxu0
      %565 = vmatprep.mubr.f32.mxu0 0.0
      %566 = vmatmul.mubr.f32.gmra.mrb[0].mxu0 %v350
      %v567 = vpop.f32.mrb[0].mxu0
      %v568 = vadd.f32 0.0, %v567
      %v569 = vpop.f32.mrb[0].mxu0
      %570 = vmatprep.mubr.f32.mxu0 0.0
      %571 = vmatmul.mubr.f32.gmra.mrb[0].mxu0 %v353
      %v572 = vpop.f32.mrb[0].mxu0
      %v573 = vadd.f32 0.0, %v572
      %v574 = vpop.f32.mrb[0].mxu0
      %575 = vmatprep.mubr.f32.mxu0 0.0
      %576 = vmatmul.mubr.f32.gmra.mrb[0].mxu0 %v356
      %v577 = vpop.f32.mrb[0].mxu0
      %v578 = vadd.f32 0.0, %v577
      %v579 = vpop.f32.mrb[0].mxu0
      %580 = vmatprep.mubr.f32.mxu0 0.0
      %581 = vmatmul.mubr.f32.gmra.mrb[0].mxu0 %v359
      %v582 = vpop.f32.mrb[0].mxu0
      %v583 = vadd.f32 0.0, %v582
      %v584 = vpop.f32.mrb[0].mxu0
      %585 = vdwg.mxu0
      %v586 = vld [vmem:[%s2] sm:$0x1]
      %619 = vrot.lane.b32.xlu0 %v428, 96
      %v620 = vpop.permute.xlu0 %619
      %621 = vrot.lane.b32.xlu0 %v433, 96
      %v622 = vpop.permute.xlu0 %621
      %623 = vrot.lane.b32.xlu0 %v438, 96
      %v624 = vpop.permute.xlu0 %623
      %625 = vrot.lane.b32.xlu0 %v443, 96
      %v626 = vpop.permute.xlu0 %625
      %627 = vrot.lane.b32.xlu0 %v448, 96
      %v628 = vpop.permute.xlu0 %627
      %629 = vrot.lane.b32.xlu0 %v453, 96
      %v630 = vpop.permute.xlu0 %629
      %631 = vrot.lane.b32.xlu0 %v458, 96
      %v632 = vpop.permute.xlu0 %631
      %633 = vrot.lane.b32.xlu0 %v463, 96
      %v634 = vpop.permute.xlu0 %633
      %635 = vrot.lane.b32.xlu0 %v468, 96
      %v636 = vpop.permute.xlu0 %635
      %637 = vrot.lane.b32.xlu0 %v473, 96
      %v638 = vpop.permute.xlu0 %637
      %639 = vrot.lane.b32.xlu0 %v478, 96
      %v640 = vpop.permute.xlu0 %639
      %641 = vrot.lane.b32.xlu0 %v483, 96
      %v642 = vpop.permute.xlu0 %641
      %643 = vrot.lane.b32.xlu0 %v488, 96
      %v644 = vpop.permute.xlu0 %643
      %645 = vrot.lane.b32.xlu0 %v493, 96
      %v646 = vpop.permute.xlu0 %645
      %647 = vrot.lane.b32.xlu0 %v498, 96
      %v648 = vpop.permute.xlu0 %647
      %649 = vrot.lane.b32.xlu0 %v503, 96
      %v650 = vpop.permute.xlu0 %649
      %651 = vrot.lane.b32.xlu0 %v508, 96
      %v652 = vpop.permute.xlu0 %651
      %653 = vrot.lane.b32.xlu0 %v513, 96
      %v654 = vpop.permute.xlu0 %653
      %655 = vrot.lane.b32.xlu0 %v518, 96
      %v656 = vpop.permute.xlu0 %655
      %657 = vrot.lane.b32.xlu0 %v523, 96
      %v658 = vpop.permute.xlu0 %657
      %659 = vrot.lane.b32.xlu0 %v528, 96
      %v660 = vpop.permute.xlu0 %659
      %661 = vrot.lane.b32.xlu0 %v533, 96
      %v662 = vpop.permute.xlu0 %661
      %663 = vrot.lane.b32.xlu0 %v538, 96
      %v664 = vpop.permute.xlu0 %663
      %665 = vrot.lane.b32.xlu0 %v543, 96
      %v666 = vpop.permute.xlu0 %665
      %667 = vrot.lane.b32.xlu0 %v548, 96
      %v668 = vpop.permute.xlu0 %667
      %669 = vrot.lane.b32.xlu0 %v553, 96
      %v670 = vpop.permute.xlu0 %669
      %671 = vrot.lane.b32.xlu0 %v558, 96
      %v672 = vpop.permute.xlu0 %671
      %673 = vrot.lane.b32.xlu0 %v563, 96
      %v674 = vpop.permute.xlu0 %673
      %675 = vrot.lane.b32.xlu0 %v568, 96
      %v676 = vpop.permute.xlu0 %675
      %677 = vrot.lane.b32.xlu0 %v573, 96
      %v678 = vpop.permute.xlu0 %677
      %679 = vrot.lane.b32.xlu0 %v578, 96
      %v680 = vpop.permute.xlu0 %679
      %681 = vrot.lane.b32.xlu0 %v583, 96
      %v682 = vpop.permute.xlu0 %681
      %v715 = vmax.f32 %v428, %v620
      %v716 = vmax.f32 %v433, %v622
      %v717 = vmax.f32 %v438, %v624
      %v718 = vmax.f32 %v443, %v626
      %v719 = vmax.f32 %v448, %v628
      %v720 = vmax.f32 %v453, %v630
      %v721 = vmax.f32 %v458, %v632
      %v722 = vmax.f32 %v463, %v634
      %v723 = vmax.f32 %v468, %v636
      %v724 = vmax.f32 %v473, %v638
      %v725 = vmax.f32 %v478, %v640
      %v726 = vmax.f32 %v483, %v642
      %v727 = vmax.f32 %v488, %v644
      %v728 = vmax.f32 %v493, %v646
      %v729 = vmax.f32 %v498, %v648
      %v730 = vmax.f32 %v503, %v650
      %v731 = vmax.f32 %v508, %v652
      %v732 = vmax.f32 %v513, %v654
      %v733 = vmax.f32 %v518, %v656
      %v734 = vmax.f32 %v523, %v658
      %v735 = vmax.f32 %v528, %v660
      %v736 = vmax.f32 %v533, %v662
      %v737 = vmax.f32 %v538, %v664
      %v738 = vmax.f32 %v543, %v666
      %v739 = vmax.f32 %v548, %v668
      %v740 = vmax.f32 %v553, %v670
      %v741 = vmax.f32 %v558, %v672
      %v742 = vmax.f32 %v563, %v674
      %v743 = vmax.f32 %v568, %v676
      %v744 = vmax.f32 %v573, %v678
      %v745 = vmax.f32 %v578, %v680
      %v746 = vmax.f32 %v583, %v682
      %v748 = vlaneseq
      %v749 = vshrl.u32 %v748, 7
      %v750 = vsub.s32 0, %v749
      %v751 = vrot.slane %v586, %v750
      %v753 = vadd.f32 %v715, %v751
      %v754 = vadd.f32 %v716, %v751
      %v755 = vadd.f32 %v717, %v751
      %v756 = vadd.f32 %v718, %v751
      %v757 = vadd.f32 %v719, %v751
      %v758 = vadd.f32 %v720, %v751
      %v759 = vadd.f32 %v721, %v751
      %v760 = vadd.f32 %v722, %v751
      %v761 = vadd.f32 %v723, %v751
      %v762 = vadd.f32 %v724, %v751
      %v763 = vadd.f32 %v725, %v751
      %v764 = vadd.f32 %v726, %v751
      %v765 = vadd.f32 %v727, %v751
      %v766 = vadd.f32 %v728, %v751
      %v767 = vadd.f32 %v729, %v751
      %v768 = vadd.f32 %v730, %v751
      %v769 = vadd.f32 %v731, %v751
      %v770 = vadd.f32 %v732, %v751
      %v771 = vadd.f32 %v733, %v751
      %v772 = vadd.f32 %v734, %v751
      %v773 = vadd.f32 %v735, %v751
      %v774 = vadd.f32 %v736, %v751
      %v775 = vadd.f32 %v737, %v751
      %v776 = vadd.f32 %v738, %v751
      %v777 = vadd.f32 %v739, %v751
      %v778 = vadd.f32 %v740, %v751
      %v779 = vadd.f32 %v741, %v751
      %v780 = vadd.f32 %v742, %v751
      %v781 = vadd.f32 %v743, %v751
      %v782 = vadd.f32 %v744, %v751
      %v783 = vadd.f32 %v745, %v751
      %v784 = vadd.f32 %v746, %v751
      %v785 = vmax.f32 %v753, 0.0
      %v786 = vmax.f32 %v754, 0.0
      %v787 = vmax.f32 %v755, 0.0
      %v788 = vmax.f32 %v756, 0.0
      %v789 = vmax.f32 %v757, 0.0
      %v790 = vmax.f32 %v758, 0.0
      %v791 = vmax.f32 %v759, 0.0
      %v792 = vmax.f32 %v760, 0.0
      %v793 = vmax.f32 %v761, 0.0
      %v794 = vmax.f32 %v762, 0.0
      %v795 = vmax.f32 %v763, 0.0
      %v796 = vmax.f32 %v764, 0.0
      %v797 = vmax.f32 %v765, 0.0
      %v798 = vmax.f32 %v766, 0.0
      %v799 = vmax.f32 %v767, 0.0
      %v800 = vmax.f32 %v768, 0.0
      %v801 = vmax.f32 %v769, 0.0
      %v802 = vmax.f32 %v770, 0.0
      %v803 = vmax.f32 %v771, 0.0
      %v804 = vmax.f32 %v772, 0.0
      %v805 = vmax.f32 %v773, 0.0
      %v806 = vmax.f32 %v774, 0.0
      %v807 = vmax.f32 %v775, 0.0
      %v808 = vmax.f32 %v776, 0.0
      %v809 = vmax.f32 %v777, 0.0
      %v810 = vmax.f32 %v778, 0.0
      %v811 = vmax.f32 %v779, 0.0
      %v812 = vmax.f32 %v780, 0.0
      %v813 = vmax.f32 %v781, 0.0
      %v814 = vmax.f32 %v782, 0.0
      %v815 = vmax.f32 %v783, 0.0
      %v816 = vmax.f32 %v784, 0.0
      %817 = vrot.lane.b32.xlu0 %v751, 64
      %v818 = vpop.permute.xlu0 %817
      %v820 = vadd.f32 %v715, %v818
      %v821 = vadd.f32 %v716, %v818
      %v822 = vadd.f32 %v717, %v818
      %v823 = vadd.f32 %v718, %v818
      %v824 = vadd.f32 %v719, %v818
      %v825 = vadd.f32 %v720, %v818
      %v826 = vadd.f32 %v721, %v818
      %v827 = vadd.f32 %v722, %v818
      %v828 = vadd.f32 %v723, %v818
      %v829 = vadd.f32 %v724, %v818
      %v830 = vadd.f32 %v725, %v818
      %v831 = vadd.f32 %v726, %v818
      %v832 = vadd.f32 %v727, %v818
      %v833 = vadd.f32 %v728, %v818
      %v834 = vadd.f32 %v729, %v818
      %v835 = vadd.f32 %v730, %v818
      %v836 = vadd.f32 %v731, %v818
      %v837 = vadd.f32 %v732, %v818
      %v838 = vadd.f32 %v733, %v818
      %v839 = vadd.f32 %v734, %v818
      %v840 = vadd.f32 %v735, %v818
      %v841 = vadd.f32 %v736, %v818
      %v842 = vadd.f32 %v737, %v818
      %v843 = vadd.f32 %v738, %v818
      %v844 = vadd.f32 %v739, %v818
      %v845 = vadd.f32 %v740, %v818
      %v846 = vadd.f32 %v741, %v818
      %v847 = vadd.f32 %v742, %v818
      %v848 = vadd.f32 %v743, %v818
      %v849 = vadd.f32 %v744, %v818
      %v850 = vadd.f32 %v745, %v818
      %v851 = vadd.f32 %v746, %v818
      %v852 = vmax.f32 %v820, 0.0
      %v853 = vmax.f32 %v821, 0.0
      %v854 = vmax.f32 %v822, 0.0
      %v855 = vmax.f32 %v823, 0.0
      %v856 = vmax.f32 %v824, 0.0
      %v857 = vmax.f32 %v825, 0.0
      %v858 = vmax.f32 %v826, 0.0
      %v859 = vmax.f32 %v827, 0.0
      %v860 = vmax.f32 %v828, 0.0
      %v861 = vmax.f32 %v829, 0.0
      %v862 = vmax.f32 %v830, 0.0
      %v863 = vmax.f32 %v831, 0.0
      %v864 = vmax.f32 %v832, 0.0
      %v865 = vmax.f32 %v833, 0.0
      %v866 = vmax.f32 %v834, 0.0
      %v867 = vmax.f32 %v835, 0.0
      %v868 = vmax.f32 %v836, 0.0
      %v869 = vmax.f32 %v837, 0.0
      %v870 = vmax.f32 %v838, 0.0
      %v871 = vmax.f32 %v839, 0.0
      %v872 = vmax.f32 %v840, 0.0
      %v873 = vmax.f32 %v841, 0.0
      %v874 = vmax.f32 %v842, 0.0
      %v875 = vmax.f32 %v843, 0.0
      %v876 = vmax.f32 %v844, 0.0
      %v877 = vmax.f32 %v845, 0.0
      %v878 = vmax.f32 %v846, 0.0
      %v879 = vmax.f32 %v847, 0.0
      %v880 = vmax.f32 %v848, 0.0
      %v881 = vmax.f32 %v849, 0.0
      %v882 = vmax.f32 %v850, 0.0
      %v883 = vmax.f32 %v851, 0.0
      %v884 = vlaneseq
      %v885 = vshrl.u32 %v884, 7
      %v886 = vadd.s32 %v885, 8
      %v887 = vadd.s32 %v885, 16
      %v888 = vadd.s32 %v885, 24
      %v889 = vadd.s32 %v885, 32
      %v890 = vadd.s32 %v885, 40
      %v891 = vadd.s32 %v885, 48
      %v892 = vadd.s32 %v885, 56
      %v893 = vadd.s32 %v885, 64
      %v894 = vadd.s32 %v885, 72
      %v895 = vadd.s32 %v885, 80
      %v896 = vadd.s32 %v885, 88
      %v897 = vadd.s32 %v885, 96
      %v898 = vadd.s32 %v885, 104
      %v899 = vadd.s32 %v885, 112
      %v900 = vadd.s32 %v885, 120
      %v901 = vadd.s32 %v885, 128
      %v902 = vadd.s32 %v885, 136
      %v903 = vadd.s32 %v885, 144
      %v904 = vadd.s32 %v885, 152
      %v905 = vadd.s32 %v885, 160
      %v906 = vadd.s32 %v885, 168
      %v907 = vadd.s32 %v885, 176
      %v908 = vadd.s32 %v885, 184
      %v909 = vadd.s32 %v885, 192
      %v910 = vadd.s32 %v885, 200
      %v911 = vadd.s32 %v885, 208
      %v912 = vadd.s32 %v885, 216
      %v913 = vadd.s32 %v885, 224
      %v914 = vadd.s32 %v885, 232
      %v915 = vadd.s32 %v885, 240
      %v916 = vadd.s32 %v885, 248
      %vm917 = vcmp.lt.s32.totalorder %v885, 0
      %v918 = vsub.s32 0, %v885
      %v919 = vsel %vm917, %v918, %v885
      %v920 = vshrl.u32 %v919, 6
      %v921 = vand.u32 %v919, 63
      %v922 = vsub.s32 0, %v921
      %v923 = vsel %vm917, %v922, %v921
      %vm924 = vcmp.lt.s32.totalorder %v886, 0
      %v925 = vsub.s32 0, %v886
      %v926 = vsel %vm924, %v925, %v886
      %v927 = vshrl.u32 %v926, 6
      %v928 = vand.u32 %v926, 63
      %v929 = vsub.s32 0, %v928
      %v930 = vsel %vm924, %v929, %v928
      %vm931 = vcmp.lt.s32.totalorder %v887, 0
      %v932 = vsub.s32 0, %v887
      %v933 = vsel %vm931, %v932, %v887
      %v934 = vshrl.u32 %v933, 6
      %v935 = vand.u32 %v933, 63
      %v936 = vsub.s32 0, %v935
      %v937 = vsel %vm931, %v936, %v935
      %vm938 = vcmp.lt.s32.totalorder %v888, 0
      %v939 = vsub.s32 0, %v888
      %v940 = vsel %vm938, %v939, %v888
      %v941 = vshrl.u32 %v940, 6
      %v942 = vand.u32 %v940, 63
      %v943 = vsub.s32 0, %v942
      %v944 = vsel %vm938, %v943, %v942
      %vm945 = vcmp.lt.s32.totalorder %v889, 0
      %v946 = vsub.s32 0, %v889
      %v947 = vsel %vm945, %v946, %v889
      %v948 = vshrl.u32 %v947, 6
      %v949 = vand.u32 %v947, 63
      %v950 = vsub.s32 0, %v949
      %v951 = vsel %vm945, %v950, %v949
      %vm952 = vcmp.lt.s32.totalorder %v890, 0
      %v953 = vsub.s32 0, %v890
      %v954 = vsel %vm952, %v953, %v890
      %v955 = vshrl.u32 %v954, 6
      %v956 = vand.u32 %v954, 63
      %v957 = vsub.s32 0, %v956
      %v958 = vsel %vm952, %v957, %v956
      %vm959 = vcmp.lt.s32.totalorder %v891, 0
      %v960 = vsub.s32 0, %v891
      %v961 = vsel %vm959, %v960, %v891
      %v962 = vshrl.u32 %v961, 6
      %v963 = vand.u32 %v961, 63
      %v964 = vsub.s32 0, %v963
      %v965 = vsel %vm959, %v964, %v963
      %vm966 = vcmp.lt.s32.totalorder %v892, 0
      %v967 = vsub.s32 0, %v892
      %v968 = vsel %vm966, %v967, %v892
      %v969 = vshrl.u32 %v968, 6
      %v970 = vand.u32 %v968, 63
      %v971 = vsub.s32 0, %v970
      %v972 = vsel %vm966, %v971, %v970
      %vm973 = vcmp.lt.s32.totalorder %v893, 0
      %v974 = vsub.s32 0, %v893
      %v975 = vsel %vm973, %v974, %v893
      %v976 = vshrl.u32 %v975, 6
      %v977 = vand.u32 %v975, 63
      %v978 = vsub.s32 0, %v977
      %v979 = vsel %vm973, %v978, %v977
      %vm980 = vcmp.lt.s32.totalorder %v894, 0
      %v981 = vsub.s32 0, %v894
      %v982 = vsel %vm980, %v981, %v894
      %v983 = vshrl.u32 %v982, 6
      %v984 = vand.u32 %v982, 63
      %v985 = vsub.s32 0, %v984
      %v986 = vsel %vm980, %v985, %v984
      %vm987 = vcmp.lt.s32.totalorder %v895, 0
      %v988 = vsub.s32 0, %v895
      %v989 = vsel %vm987, %v988, %v895
      %v990 = vshrl.u32 %v989, 6
      %v991 = vand.u32 %v989, 63
      %v992 = vsub.s32 0, %v991
      %v993 = vsel %vm987, %v992, %v991
      %vm994 = vcmp.lt.s32.totalorder %v896, 0
      %v995 = vsub.s32 0, %v896
      %v996 = vsel %vm994, %v995, %v896
      %v997 = vshrl.u32 %v996, 6
      %v998 = vand.u32 %v996, 63
      %v999 = vsub.s32 0, %v998
      %v1000 = vsel %vm994, %v999, %v998
      %vm1001 = vcmp.lt.s32.totalorder %v897, 0
      %v1002 = vsub.s32 0, %v897
      %v1003 = vsel %vm1001, %v1002, %v897
      %v1004 = vshrl.u32 %v1003, 6
      %v1005 = vand.u32 %v1003, 63
      %v1006 = vsub.s32 0, %v1005
      %v1007 = vsel %vm1001, %v1006, %v1005
      %vm1008 = vcmp.lt.s32.totalorder %v898, 0
      %v1009 = vsub.s32 0, %v898
      %v1010 = vsel %vm1008, %v1009, %v898
      %v1011 = vshrl.u32 %v1010, 6
      %v1012 = vand.u32 %v1010, 63
      %v1013 = vsub.s32 0, %v1012
      %v1014 = vsel %vm1008, %v1013, %v1012
      %vm1015 = vcmp.lt.s32.totalorder %v899, 0
      %v1016 = vsub.s32 0, %v899
      %v1017 = vsel %vm1015, %v1016, %v899
      %v1018 = vshrl.u32 %v1017, 6
      %v1019 = vand.u32 %v1017, 63
      %v1020 = vsub.s32 0, %v1019
      %v1021 = vsel %vm1015, %v1020, %v1019
      %vm1022 = vcmp.lt.s32.totalorder %v900, 0
      %v1023 = vsub.s32 0, %v900
      %v1024 = vsel %vm1022, %v1023, %v900
      %v1025 = vshrl.u32 %v1024, 6
      %v1026 = vand.u32 %v1024, 63
      %v1027 = vsub.s32 0, %v1026
      %v1028 = vsel %vm1022, %v1027, %v1026
      %vm1029 = vcmp.lt.s32.totalorder %v901, 0
      %v1030 = vsub.s32 0, %v901
      %v1031 = vsel %vm1029, %v1030, %v901
      %v1032 = vshrl.u32 %v1031, 6
      %v1033 = vand.u32 %v1031, 63
      %v1034 = vsub.s32 0, %v1033
      %v1035 = vsel %vm1029, %v1034, %v1033
      %vm1036 = vcmp.lt.s32.totalorder %v902, 0
      %v1037 = vsub.s32 0, %v902
      %v1038 = vsel %vm1036, %v1037, %v902
      %v1039 = vshrl.u32 %v1038, 6
      %v1040 = vand.u32 %v1038, 63
      %v1041 = vsub.s32 0, %v1040
      %v1042 = vsel %vm1036, %v1041, %v1040
      %vm1043 = vcmp.lt.s32.totalorder %v903, 0
      %v1044 = vsub.s32 0, %v903
      %v1045 = vsel %vm1043, %v1044, %v903
      %v1046 = vshrl.u32 %v1045, 6
      %v1047 = vand.u32 %v1045, 63
      %v1048 = vsub.s32 0, %v1047
      %v1049 = vsel %vm1043, %v1048, %v1047
      %vm1050 = vcmp.lt.s32.totalorder %v904, 0
      %v1051 = vsub.s32 0, %v904
      %v1052 = vsel %vm1050, %v1051, %v904
      %v1053 = vshrl.u32 %v1052, 6
      %v1054 = vand.u32 %v1052, 63
      %v1055 = vsub.s32 0, %v1054
      %v1056 = vsel %vm1050, %v1055, %v1054
      %vm1057 = vcmp.lt.s32.totalorder %v905, 0
      %v1058 = vsub.s32 0, %v905
      %v1059 = vsel %vm1057, %v1058, %v905
      %v1060 = vshrl.u32 %v1059, 6
      %v1061 = vand.u32 %v1059, 63
      %v1062 = vsub.s32 0, %v1061
      %v1063 = vsel %vm1057, %v1062, %v1061
      %vm1064 = vcmp.lt.s32.totalorder %v906, 0
      %v1065 = vsub.s32 0, %v906
      %v1066 = vsel %vm1064, %v1065, %v906
      %v1067 = vshrl.u32 %v1066, 6
      %v1068 = vand.u32 %v1066, 63
      %v1069 = vsub.s32 0, %v1068
      %v1070 = vsel %vm1064, %v1069, %v1068
      %vm1071 = vcmp.lt.s32.totalorder %v907, 0
      %v1072 = vsub.s32 0, %v907
      %v1073 = vsel %vm1071, %v1072, %v907
      %v1074 = vshrl.u32 %v1073, 6
      %v1075 = vand.u32 %v1073, 63
      %v1076 = vsub.s32 0, %v1075
      %v1077 = vsel %vm1071, %v1076, %v1075
      %vm1078 = vcmp.lt.s32.totalorder %v908, 0
      %v1079 = vsub.s32 0, %v908
      %v1080 = vsel %vm1078, %v1079, %v908
      %v1081 = vshrl.u32 %v1080, 6
      %v1082 = vand.u32 %v1080, 63
      %v1083 = vsub.s32 0, %v1082
      %v1084 = vsel %vm1078, %v1083, %v1082
      %vm1085 = vcmp.lt.s32.totalorder %v909, 0
      %v1086 = vsub.s32 0, %v909
      %v1087 = vsel %vm1085, %v1086, %v909
      %v1088 = vshrl.u32 %v1087, 6
      %v1089 = vand.u32 %v1087, 63
      %v1090 = vsub.s32 0, %v1089
      %v1091 = vsel %vm1085, %v1090, %v1089
      %vm1092 = vcmp.lt.s32.totalorder %v910, 0
      %v1093 = vsub.s32 0, %v910
      %v1094 = vsel %vm1092, %v1093, %v910
      %v1095 = vshrl.u32 %v1094, 6
      %v1096 = vand.u32 %v1094, 63
      %v1097 = vsub.s32 0, %v1096
      %v1098 = vsel %vm1092, %v1097, %v1096
      %vm1099 = vcmp.lt.s32.totalorder %v911, 0
      %v1100 = vsub.s32 0, %v911
      %v1101 = vsel %vm1099, %v1100, %v911
      %v1102 = vshrl.u32 %v1101, 6
      %v1103 = vand.u32 %v1101, 63
      %v1104 = vsub.s32 0, %v1103
      %v1105 = vsel %vm1099, %v1104, %v1103
      %vm1106 = vcmp.lt.s32.totalorder %v912, 0
      %v1107 = vsub.s32 0, %v912
      %v1108 = vsel %vm1106, %v1107, %v912
      %v1109 = vshrl.u32 %v1108, 6
      %v1110 = vand.u32 %v1108, 63
      %v1111 = vsub.s32 0, %v1110
      %v1112 = vsel %vm1106, %v1111, %v1110
      %vm1113 = vcmp.lt.s32.totalorder %v913, 0
      %v1114 = vsub.s32 0, %v913
      %v1115 = vsel %vm1113, %v1114, %v913
      %v1116 = vshrl.u32 %v1115, 6
      %v1117 = vand.u32 %v1115, 63
      %v1118 = vsub.s32 0, %v1117
      %v1119 = vsel %vm1113, %v1118, %v1117
      %vm1120 = vcmp.lt.s32.totalorder %v914, 0
      %v1121 = vsub.s32 0, %v914
      %v1122 = vsel %vm1120, %v1121, %v914
      %v1123 = vshrl.u32 %v1122, 6
      %v1124 = vand.u32 %v1122, 63
      %v1125 = vsub.s32 0, %v1124
      %v1126 = vsel %vm1120, %v1125, %v1124
      %vm1127 = vcmp.lt.s32.totalorder %v915, 0
      %v1128 = vsub.s32 0, %v915
      %v1129 = vsel %vm1127, %v1128, %v915
      %v1130 = vshrl.u32 %v1129, 6
      %v1131 = vand.u32 %v1129, 63
      %v1132 = vsub.s32 0, %v1131
      %v1133 = vsel %vm1127, %v1132, %v1131
      %vm1134 = vcmp.lt.s32.totalorder %v916, 0
      %v1135 = vsub.s32 0, %v916
      %v1136 = vsel %vm1134, %v1135, %v916
      %v1137 = vshrl.u32 %v1136, 6
      %v1138 = vand.u32 %v1136, 63
      %v1139 = vsub.s32 0, %v1138
      %v1140 = vsel %vm1134, %v1139, %v1138
      %vm1141 = vcmp.ne.s32.totalorder %v923, 0
      %vm1142 = vcmp.ne.s32.totalorder %v930, 0
      %vm1143 = vcmp.ne.s32.totalorder %v937, 0
      %vm1144 = vcmp.ne.s32.totalorder %v944, 0
      %vm1145 = vcmp.ne.s32.totalorder %v951, 0
      %vm1146 = vcmp.ne.s32.totalorder %v958, 0
      %vm1147 = vcmp.ne.s32.totalorder %v965, 0
      %vm1148 = vcmp.ne.s32.totalorder %v972, 0
      %vm1149 = vcmp.ne.s32.totalorder %v979, 0
      %vm1150 = vcmp.ne.s32.totalorder %v986, 0
      %vm1151 = vcmp.ne.s32.totalorder %v993, 0
      %vm1152 = vcmp.ne.s32.totalorder %v1000, 0
      %vm1153 = vcmp.ne.s32.totalorder %v1007, 0
      %vm1154 = vcmp.ne.s32.totalorder %v1014, 0
      %vm1155 = vcmp.ne.s32.totalorder %v1021, 0
      %vm1156 = vcmp.ne.s32.totalorder %v1028, 0
      %vm1157 = vcmp.ne.s32.totalorder %v1035, 0
      %vm1158 = vcmp.ne.s32.totalorder %v1042, 0
      %vm1159 = vcmp.ne.s32.totalorder %v1049, 0
      %vm1160 = vcmp.ne.s32.totalorder %v1056, 0
      %vm1161 = vcmp.ne.s32.totalorder %v1063, 0
      %vm1162 = vcmp.ne.s32.totalorder %v1070, 0
      %vm1163 = vcmp.ne.s32.totalorder %v1077, 0
      %vm1164 = vcmp.ne.s32.totalorder %v1084, 0
      %vm1165 = vcmp.ne.s32.totalorder %v1091, 0
      %vm1166 = vcmp.ne.s32.totalorder %v1098, 0
      %vm1167 = vcmp.ne.s32.totalorder %v1105, 0
      %vm1168 = vcmp.ne.s32.totalorder %v1112, 0
      %vm1169 = vcmp.ne.s32.totalorder %v1119, 0
      %vm1170 = vcmp.ne.s32.totalorder %v1126, 0
      %vm1171 = vcmp.ne.s32.totalorder %v1133, 0
      %vm1172 = vcmp.ne.s32.totalorder %v1140, 0
      %vm1173 = vcmp.lt.s32.totalorder %v923, 0
      %vm1174 = vcmp.lt.s32.totalorder %v930, 0
      %vm1175 = vcmp.lt.s32.totalorder %v937, 0
      %vm1176 = vcmp.lt.s32.totalorder %v944, 0
      %vm1177 = vcmp.lt.s32.totalorder %v951, 0
      %vm1178 = vcmp.lt.s32.totalorder %v958, 0
      %vm1179 = vcmp.lt.s32.totalorder %v965, 0
      %vm1180 = vcmp.lt.s32.totalorder %v972, 0
      %vm1181 = vcmp.lt.s32.totalorder %v979, 0
      %vm1182 = vcmp.lt.s32.totalorder %v986, 0
      %vm1183 = vcmp.lt.s32.totalorder %v993, 0
      %vm1184 = vcmp.lt.s32.totalorder %v1000, 0
      %vm1185 = vcmp.lt.s32.totalorder %v1007, 0
      %vm1186 = vcmp.lt.s32.totalorder %v1014, 0
      %vm1187 = vcmp.lt.s32.totalorder %v1021, 0
      %vm1188 = vcmp.lt.s32.totalorder %v1028, 0
      %vm1189 = vcmp.lt.s32.totalorder %v1035, 0
      %vm1190 = vcmp.lt.s32.totalorder %v1042, 0
      %vm1191 = vcmp.lt.s32.totalorder %v1049, 0
      %vm1192 = vcmp.lt.s32.totalorder %v1056, 0
      %vm1193 = vcmp.lt.s32.totalorder %v1063, 0
      %vm1194 = vcmp.lt.s32.totalorder %v1070, 0
      %vm1195 = vcmp.lt.s32.totalorder %v1077, 0
      %vm1196 = vcmp.lt.s32.totalorder %v1084, 0
      %vm1197 = vcmp.lt.s32.totalorder %v1091, 0
      %vm1198 = vcmp.lt.s32.totalorder %v1098, 0
      %vm1199 = vcmp.lt.s32.totalorder %v1105, 0
      %vm1200 = vcmp.lt.s32.totalorder %v1112, 0
      %vm1201 = vcmp.lt.s32.totalorder %v1119, 0
      %vm1202 = vcmp.lt.s32.totalorder %v1126, 0
      %vm1203 = vcmp.lt.s32.totalorder %v1133, 0
      %vm1204 = vcmp.lt.s32.totalorder %v1140, 0
      %vm1205 = vmand %vm1173, %vm1141
      %vm1206 = vmand %vm1174, %vm1142
      %vm1207 = vmand %vm1175, %vm1143
      %vm1208 = vmand %vm1176, %vm1144
      %vm1209 = vmand %vm1177, %vm1145
      %vm1210 = vmand %vm1178, %vm1146
      %vm1211 = vmand %vm1179, %vm1147
      %vm1212 = vmand %vm1180, %vm1148
      %vm1213 = vmand %vm1181, %vm1149
      %vm1214 = vmand %vm1182, %vm1150
      %vm1215 = vmand %vm1183, %vm1151
      %vm1216 = vmand %vm1184, %vm1152
      %vm1217 = vmand %vm1185, %vm1153
      %vm1218 = vmand %vm1186, %vm1154
      %vm1219 = vmand %vm1187, %vm1155
      %vm1220 = vmand %vm1188, %vm1156
      %vm1221 = vmand %vm1189, %vm1157
      %vm1222 = vmand %vm1190, %vm1158
      %vm1223 = vmand %vm1191, %vm1159
      %vm1224 = vmand %vm1192, %vm1160
      %vm1225 = vmand %vm1193, %vm1161
      %vm1226 = vmand %vm1194, %vm1162
      %vm1227 = vmand %vm1195, %vm1163
      %vm1228 = vmand %vm1196, %vm1164
      %vm1229 = vmand %vm1197, %vm1165
      %vm1230 = vmand %vm1198, %vm1166
      %vm1231 = vmand %vm1199, %vm1167
      %vm1232 = vmand %vm1200, %vm1168
      %vm1233 = vmand %vm1201, %vm1169
      %vm1234 = vmand %vm1202, %vm1170
      %vm1235 = vmand %vm1203, %vm1171
      %vm1236 = vmand %vm1204, %vm1172
      %v1237 = vadd.s32 %v923, 64
      %v1238 = vadd.s32 %v930, 64
      %v1239 = vadd.s32 %v937, 64
      %v1240 = vadd.s32 %v944, 64
      %v1241 = vadd.s32 %v951, 64
      %v1242 = vadd.s32 %v958, 64
      %v1243 = vadd.s32 %v965, 64
      %v1244 = vadd.s32 %v972, 64
      %v1245 = vadd.s32 %v979, 64
      %v1246 = vadd.s32 %v986, 64
      %v1247 = vadd.s32 %v993, 64
      %v1248 = vadd.s32 %v1000, 64
      %v1249 = vadd.s32 %v1007, 64
      %v1250 = vadd.s32 %v1014, 64
      %v1251 = vadd.s32 %v1021, 64
      %v1252 = vadd.s32 %v1028, 64
      %v1253 = vadd.s32 %v1035, 64
      %v1254 = vadd.s32 %v1042, 64
      %v1255 = vadd.s32 %v1049, 64
      %v1256 = vadd.s32 %v1056, 64
      %v1257 = vadd.s32 %v1063, 64
      %v1258 = vadd.s32 %v1070, 64
      %v1259 = vadd.s32 %v1077, 64
      %v1260 = vadd.s32 %v1084, 64
      %v1261 = vadd.s32 %v1091, 64
      %v1262 = vadd.s32 %v1098, 64
      %v1263 = vadd.s32 %v1105, 64
      %v1264 = vadd.s32 %v1112, 64
      %v1265 = vadd.s32 %v1119, 64
      %v1266 = vadd.s32 %v1126, 64
      %v1267 = vadd.s32 %v1133, 64
      %v1268 = vadd.s32 %v1140, 64
      %v1269 = vsel %vm1205, %v1237, %v923
      %v1270 = vsel %vm1206, %v1238, %v930
      %v1271 = vsel %vm1207, %v1239, %v937
      %v1272 = vsel %vm1208, %v1240, %v944
      %v1273 = vsel %vm1209, %v1241, %v951
      %v1274 = vsel %vm1210, %v1242, %v958
      %v1275 = vsel %vm1211, %v1243, %v965
      %v1276 = vsel %vm1212, %v1244, %v972
      %v1277 = vsel %vm1213, %v1245, %v979
      %v1278 = vsel %vm1214, %v1246, %v986
      %v1279 = vsel %vm1215, %v1247, %v993
      %v1280 = vsel %vm1216, %v1248, %v1000
      %v1281 = vsel %vm1217, %v1249, %v1007
      %v1282 = vsel %vm1218, %v1250, %v1014
      %v1283 = vsel %vm1219, %v1251, %v1021
      %v1284 = vsel %vm1220, %v1252, %v1028
      %v1285 = vsel %vm1221, %v1253, %v1035
      %v1286 = vsel %vm1222, %v1254, %v1042
      %v1287 = vsel %vm1223, %v1255, %v1049
      %v1288 = vsel %vm1224, %v1256, %v1056
      %v1289 = vsel %vm1225, %v1257, %v1063
      %v1290 = vsel %vm1226, %v1258, %v1070
      %v1291 = vsel %vm1227, %v1259, %v1077
      %v1292 = vsel %vm1228, %v1260, %v1084
      %v1293 = vsel %vm1229, %v1261, %v1091
      %v1294 = vsel %vm1230, %v1262, %v1098
      %v1295 = vsel %vm1231, %v1263, %v1105
      %v1296 = vsel %vm1232, %v1264, %v1112
      %v1297 = vsel %vm1233, %v1265, %v1119
      %v1298 = vsel %vm1234, %v1266, %v1126
      %v1299 = vsel %vm1235, %v1267, %v1133
      %v1300 = vsel %vm1236, %v1268, %v1140
      %vm1301 = vcmp.eq.s32.totalorder %v1269, 0
      %vm1302 = vcmp.eq.s32.totalorder %v1270, 0
      %vm1303 = vcmp.eq.s32.totalorder %v1271, 0
      %vm1304 = vcmp.eq.s32.totalorder %v1272, 0
      %vm1305 = vcmp.eq.s32.totalorder %v1273, 0
      %vm1306 = vcmp.eq.s32.totalorder %v1274, 0
      %vm1307 = vcmp.eq.s32.totalorder %v1275, 0
      %vm1308 = vcmp.eq.s32.totalorder %v1276, 0
      %vm1309 = vcmp.eq.s32.totalorder %v1277, 0
      %vm1310 = vcmp.eq.s32.totalorder %v1278, 0
      %vm1311 = vcmp.eq.s32.totalorder %v1279, 0
      %vm1312 = vcmp.eq.s32.totalorder %v1280, 0
      %vm1313 = vcmp.eq.s32.totalorder %v1281, 0
      %vm1314 = vcmp.eq.s32.totalorder %v1282, 0
      %vm1315 = vcmp.eq.s32.totalorder %v1283, 0
      %vm1316 = vcmp.eq.s32.totalorder %v1284, 0
      %vm1317 = vcmp.eq.s32.totalorder %v1285, 0
      %vm1318 = vcmp.eq.s32.totalorder %v1286, 0
      %vm1319 = vcmp.eq.s32.totalorder %v1287, 0
      %vm1320 = vcmp.eq.s32.totalorder %v1288, 0
      %vm1321 = vcmp.eq.s32.totalorder %v1289, 0
      %vm1322 = vcmp.eq.s32.totalorder %v1290, 0
      %vm1323 = vcmp.eq.s32.totalorder %v1291, 0
      %vm1324 = vcmp.eq.s32.totalorder %v1292, 0
      %vm1325 = vcmp.eq.s32.totalorder %v1293, 0
      %vm1326 = vcmp.eq.s32.totalorder %v1294, 0
      %vm1327 = vcmp.eq.s32.totalorder %v1295, 0
      %vm1328 = vcmp.eq.s32.totalorder %v1296, 0
      %vm1329 = vcmp.eq.s32.totalorder %v1297, 0
      %vm1330 = vcmp.eq.s32.totalorder %v1298, 0
      %vm1331 = vcmp.eq.s32.totalorder %v1299, 0
      %vm1332 = vcmp.eq.s32.totalorder %v1300, 0
      %1365 = vrot.lane.b32.xlu0 %v852, 64
      %v1366 = vpop.permute.xlu0 %1365
      %1367 = vrot.lane.b32.xlu0 %v853, 64
      %v1368 = vpop.permute.xlu0 %1367
      %1369 = vrot.lane.b32.xlu0 %v854, 64
      %v1370 = vpop.permute.xlu0 %1369
      %1371 = vrot.lane.b32.xlu0 %v855, 64
      %v1372 = vpop.permute.xlu0 %1371
      %1373 = vrot.lane.b32.xlu0 %v856, 64
      %v1374 = vpop.permute.xlu0 %1373
      %1375 = vrot.lane.b32.xlu0 %v857, 64
      %v1376 = vpop.permute.xlu0 %1375
      %1377 = vrot.lane.b32.xlu0 %v858, 64
      %v1378 = vpop.permute.xlu0 %1377
      %1379 = vrot.lane.b32.xlu0 %v859, 64
      %v1380 = vpop.permute.xlu0 %1379
      %1381 = vrot.lane.b32.xlu0 %v860, 64
      %v1382 = vpop.permute.xlu0 %1381
      %1383 = vrot.lane.b32.xlu0 %v861, 64
      %v1384 = vpop.permute.xlu0 %1383
      %1385 = vrot.lane.b32.xlu0 %v862, 64
      %v1386 = vpop.permute.xlu0 %1385
      %1387 = vrot.lane.b32.xlu0 %v863, 64
      %v1388 = vpop.permute.xlu0 %1387
      %1389 = vrot.lane.b32.xlu0 %v864, 64
      %v1390 = vpop.permute.xlu0 %1389
      %1391 = vrot.lane.b32.xlu0 %v865, 64
      %v1392 = vpop.permute.xlu0 %1391
      %1393 = vrot.lane.b32.xlu0 %v866, 64
      %v1394 = vpop.permute.xlu0 %1393
      %1395 = vrot.lane.b32.xlu0 %v867, 64
      %v1396 = vpop.permute.xlu0 %1395
      %1397 = vrot.lane.b32.xlu0 %v868, 64
      %v1398 = vpop.permute.xlu0 %1397
      %1399 = vrot.lane.b32.xlu0 %v869, 64
      %v1400 = vpop.permute.xlu0 %1399
      %1401 = vrot.lane.b32.xlu0 %v870, 64
      %v1402 = vpop.permute.xlu0 %1401
      %1403 = vrot.lane.b32.xlu0 %v871, 64
      %v1404 = vpop.permute.xlu0 %1403
      %1405 = vrot.lane.b32.xlu0 %v872, 64
      %v1406 = vpop.permute.xlu0 %1405
      %1407 = vrot.lane.b32.xlu0 %v873, 64
      %v1408 = vpop.permute.xlu0 %1407
      %1409 = vrot.lane.b32.xlu0 %v874, 64
      %v1410 = vpop.permute.xlu0 %1409
      %1411 = vrot.lane.b32.xlu0 %v875, 64
      %v1412 = vpop.permute.xlu0 %1411
      %1413 = vrot.lane.b32.xlu0 %v876, 64
      %v1414 = vpop.permute.xlu0 %1413
      %1415 = vrot.lane.b32.xlu0 %v877, 64
      %v1416 = vpop.permute.xlu0 %1415
      %1417 = vrot.lane.b32.xlu0 %v878, 64
      %v1418 = vpop.permute.xlu0 %1417
      %1419 = vrot.lane.b32.xlu0 %v879, 64
      %v1420 = vpop.permute.xlu0 %1419
      %1421 = vrot.lane.b32.xlu0 %v880, 64
      %v1422 = vpop.permute.xlu0 %1421
      %1423 = vrot.lane.b32.xlu0 %v881, 64
      %v1424 = vpop.permute.xlu0 %1423
      %1425 = vrot.lane.b32.xlu0 %v882, 64
      %v1426 = vpop.permute.xlu0 %1425
      %1427 = vrot.lane.b32.xlu0 %v883, 64
      %v1428 = vpop.permute.xlu0 %1427
      %v1461 = vrot.slane %v1366, 7
      %v1462 = vrot.slane %v1368, 7
      %v1463 = vrot.slane %v1370, 7
      %v1464 = vrot.slane %v1372, 7
      %v1465 = vrot.slane %v1374, 7
      %v1466 = vrot.slane %v1376, 7
      %v1467 = vrot.slane %v1378, 7
      %v1468 = vrot.slane %v1380, 7
      %v1469 = vrot.slane %v1382, 7
      %v1470 = vrot.slane %v1384, 7
      %v1471 = vrot.slane %v1386, 7
      %v1472 = vrot.slane %v1388, 7
      %v1473 = vrot.slane %v1390, 7
      %v1474 = vrot.slane %v1392, 7
      %v1475 = vrot.slane %v1394, 7
      %v1476 = vrot.slane %v1396, 7
      %v1477 = vrot.slane %v1398, 7
      %v1478 = vrot.slane %v1400, 7
      %v1479 = vrot.slane %v1402, 7
      %v1480 = vrot.slane %v1404, 7
      %v1481 = vrot.slane %v1406, 7
      %v1482 = vrot.slane %v1408, 7
      %v1483 = vrot.slane %v1410, 7
      %v1484 = vrot.slane %v1412, 7
      %v1485 = vrot.slane %v1414, 7
      %v1486 = vrot.slane %v1416, 7
      %v1487 = vrot.slane %v1418, 7
      %v1488 = vrot.slane %v1420, 7
      %v1489 = vrot.slane %v1422, 7
      %v1490 = vrot.slane %v1424, 7
      %v1491 = vrot.slane %v1426, 7
      %v1492 = vrot.slane %v1428, 7
      %vm1493 = vcmp.lt.s32.totalorder %v885, 1
      %v1494 = vsel %vm1493, %v1491, %v1492
      %v1495 = vsel %vm1493, %v1490, %v1491
      %v1496 = vsel %vm1493, %v1489, %v1490
      %v1497 = vsel %vm1493, %v1488, %v1489
      %v1498 = vsel %vm1493, %v1487, %v1488
      %v1499 = vsel %vm1493, %v1486, %v1487
      %v1500 = vsel %vm1493, %v1485, %v1486
      %v1501 = vsel %vm1493, %v1484, %v1485
      %v1502 = vsel %vm1493, %v1483, %v1484
      %v1503 = vsel %vm1493, %v1482, %v1483
      %v1504 = vsel %vm1493, %v1481, %v1482
      %v1505 = vsel %vm1493, %v1480, %v1481
      %v1506 = vsel %vm1493, %v1479, %v1480
      %v1507 = vsel %vm1493, %v1478, %v1479
      %v1508 = vsel %vm1493, %v1477, %v1478
      %v1509 = vsel %vm1493, %v1476, %v1477
      %v1510 = vsel %vm1493, %v1475, %v1476
      %v1511 = vsel %vm1493, %v1474, %v1475
      %v1512 = vsel %vm1493, %v1473, %v1474
      %v1513 = vsel %vm1493, %v1472, %v1473
      %v1514 = vsel %vm1493, %v1471, %v1472
      %v1515 = vsel %vm1493, %v1470, %v1471
      %v1516 = vsel %vm1493, %v1469, %v1470
      %v1517 = vsel %vm1493, %v1468, %v1469
      %v1518 = vsel %vm1493, %v1467, %v1468
      %v1519 = vsel %vm1493, %v1466, %v1467
      %v1520 = vsel %vm1493, %v1465, %v1466
      %v1521 = vsel %vm1493, %v1464, %v1465
      %v1522 = vsel %vm1493, %v1463, %v1464
      %v1523 = vsel %vm1493, %v1462, %v1463
      %v1524 = vsel %vm1493, %v1461, %v1462
      %v1525 = vsel %vm1493, %v1492, %v1461
      %v1526 = vsel %vm1301, 1, 0
      %v1527 = vsel %vm1302, 1, 0
      %v1528 = vsel %vm1303, 1, 0
      %v1529 = vsel %vm1304, 1, 0
      %v1530 = vsel %vm1305, 1, 0
      %v1531 = vsel %vm1306, 1, 0
      %v1532 = vsel %vm1307, 1, 0
      %v1533 = vsel %vm1308, 1, 0
      %v1534 = vsel %vm1309, 1, 0
      %v1535 = vsel %vm1310, 1, 0
      %v1536 = vsel %vm1311, 1, 0
      %v1537 = vsel %vm1312, 1, 0
      %v1538 = vsel %vm1313, 1, 0
      %v1539 = vsel %vm1314, 1, 0
      %v1540 = vsel %vm1315, 1, 0
      %v1541 = vsel %vm1316, 1, 0
      %v1542 = vsel %vm1317, 1, 0
      %v1543 = vsel %vm1318, 1, 0
      %v1544 = vsel %vm1319, 1, 0
      %v1545 = vsel %vm1320, 1, 0
      %v1546 = vsel %vm1321, 1, 0
      %v1547 = vsel %vm1322, 1, 0
      %v1548 = vsel %vm1323, 1, 0
      %v1549 = vsel %vm1324, 1, 0
      %v1550 = vsel %vm1325, 1, 0
      %v1551 = vsel %vm1326, 1, 0
      %v1552 = vsel %vm1327, 1, 0
      %v1553 = vsel %vm1328, 1, 0
      %v1554 = vsel %vm1329, 1, 0
      %v1555 = vsel %vm1330, 1, 0
      %v1556 = vsel %vm1331, 1, 0
      %v1557 = vsel %vm1332, 1, 0
      %vm1558 = vcmp.eq.s32.totalorder %v1526, 1
      %vm1559 = vcmp.eq.s32.totalorder %v1527, 1
      %vm1560 = vcmp.eq.s32.totalorder %v1528, 1
      %vm1561 = vcmp.eq.s32.totalorder %v1529, 1
      %vm1562 = vcmp.eq.s32.totalorder %v1530, 1
      %vm1563 = vcmp.eq.s32.totalorder %v1531, 1
      %vm1564 = vcmp.eq.s32.totalorder %v1532, 1
      %vm1565 = vcmp.eq.s32.totalorder %v1533, 1
      %vm1566 = vcmp.eq.s32.totalorder %v1534, 1
      %vm1567 = vcmp.eq.s32.totalorder %v1535, 1
      %vm1568 = vcmp.eq.s32.totalorder %v1536, 1
      %vm1569 = vcmp.eq.s32.totalorder %v1537, 1
      %vm1570 = vcmp.eq.s32.totalorder %v1538, 1
      %vm1571 = vcmp.eq.s32.totalorder %v1539, 1
      %vm1572 = vcmp.eq.s32.totalorder %v1540, 1
      %vm1573 = vcmp.eq.s32.totalorder %v1541, 1
      %vm1574 = vcmp.eq.s32.totalorder %v1542, 1
      %vm1575 = vcmp.eq.s32.totalorder %v1543, 1
      %vm1576 = vcmp.eq.s32.totalorder %v1544, 1
      %vm1577 = vcmp.eq.s32.totalorder %v1545, 1
      %vm1578 = vcmp.eq.s32.totalorder %v1546, 1
      %vm1579 = vcmp.eq.s32.totalorder %v1547, 1
      %vm1580 = vcmp.eq.s32.totalorder %v1548, 1
      %vm1581 = vcmp.eq.s32.totalorder %v1549, 1
      %vm1582 = vcmp.eq.s32.totalorder %v1550, 1
      %vm1583 = vcmp.eq.s32.totalorder %v1551, 1
      %vm1584 = vcmp.eq.s32.totalorder %v1552, 1
      %vm1585 = vcmp.eq.s32.totalorder %v1553, 1
      %vm1586 = vcmp.eq.s32.totalorder %v1554, 1
      %vm1587 = vcmp.eq.s32.totalorder %v1555, 1
      %vm1588 = vcmp.eq.s32.totalorder %v1556, 1
      %vm1589 = vcmp.eq.s32.totalorder %v1557, 1
      %v1590 = vsel %vm1558, 0.0, %v1525
      %v1591 = vsel %vm1559, 0.0, %v1524
      %v1592 = vsel %vm1560, 0.0, %v1523
      %v1593 = vsel %vm1561, 0.0, %v1522
      %v1594 = vsel %vm1562, 0.0, %v1521
      %v1595 = vsel %vm1563, 0.0, %v1520
      %v1596 = vsel %vm1564, 0.0, %v1519
      %v1597 = vsel %vm1565, 0.0, %v1518
      %v1598 = vsel %vm1566, 0.0, %v1517
      %v1599 = vsel %vm1567, 0.0, %v1516
      %v1600 = vsel %vm1568, 0.0, %v1515
      %v1601 = vsel %vm1569, 0.0, %v1514
      %v1602 = vsel %vm1570, 0.0, %v1513
      %v1603 = vsel %vm1571, 0.0, %v1512
      %v1604 = vsel %vm1572, 0.0, %v1511
      %v1605 = vsel %vm1573, 0.0, %v1510
      %v1606 = vsel %vm1574, 0.0, %v1509
      %v1607 = vsel %vm1575, 0.0, %v1508
      %v1608 = vsel %vm1576, 0.0, %v1507
      %v1609 = vsel %vm1577, 0.0, %v1506
      %v1610 = vsel %vm1578, 0.0, %v1505
      %v1611 = vsel %vm1579, 0.0, %v1504
      %v1612 = vsel %vm1580, 0.0, %v1503
      %v1613 = vsel %vm1581, 0.0, %v1502
      %v1614 = vsel %vm1582, 0.0, %v1501
      %v1615 = vsel %vm1583, 0.0, %v1500
      %v1616 = vsel %vm1584, 0.0, %v1499
      %v1617 = vsel %vm1585, 0.0, %v1498
      %v1618 = vsel %vm1586, 0.0, %v1497
      %v1619 = vsel %vm1587, 0.0, %v1496
      %v1620 = vsel %vm1588, 0.0, %v1495
      %v1621 = vsel %vm1589, 0.0, %v1494
      %vm1622 = vcmp.eq.s32.totalorder %v1269, 63
      %vm1623 = vcmp.eq.s32.totalorder %v1270, 63
      %vm1624 = vcmp.eq.s32.totalorder %v1271, 63
      %vm1625 = vcmp.eq.s32.totalorder %v1272, 63
      %vm1626 = vcmp.eq.s32.totalorder %v1273, 63
      %vm1627 = vcmp.eq.s32.totalorder %v1274, 63
      %vm1628 = vcmp.eq.s32.totalorder %v1275, 63
      %vm1629 = vcmp.eq.s32.totalorder %v1276, 63
      %vm1630 = vcmp.eq.s32.totalorder %v1277, 63
      %vm1631 = vcmp.eq.s32.totalorder %v1278, 63
      %vm1632 = vcmp.eq.s32.totalorder %v1279, 63
      %vm1633 = vcmp.eq.s32.totalorder %v1280, 63
      %vm1634 = vcmp.eq.s32.totalorder %v1281, 63
      %vm1635 = vcmp.eq.s32.totalorder %v1282, 63
      %vm1636 = vcmp.eq.s32.totalorder %v1283, 63
      %vm1637 = vcmp.eq.s32.totalorder %v1284, 63
      %vm1638 = vcmp.eq.s32.totalorder %v1285, 63
      %vm1639 = vcmp.eq.s32.totalorder %v1286, 63
      %vm1640 = vcmp.eq.s32.totalorder %v1287, 63
      %vm1641 = vcmp.eq.s32.totalorder %v1288, 63
      %vm1642 = vcmp.eq.s32.totalorder %v1289, 63
      %vm1643 = vcmp.eq.s32.totalorder %v1290, 63
      %vm1644 = vcmp.eq.s32.totalorder %v1291, 63
      %vm1645 = vcmp.eq.s32.totalorder %v1292, 63
      %vm1646 = vcmp.eq.s32.totalorder %v1293, 63
      %vm1647 = vcmp.eq.s32.totalorder %v1294, 63
      %vm1648 = vcmp.eq.s32.totalorder %v1295, 63
      %vm1649 = vcmp.eq.s32.totalorder %v1296, 63
      %vm1650 = vcmp.eq.s32.totalorder %v1297, 63
      %vm1651 = vcmp.eq.s32.totalorder %v1298, 63
      %vm1652 = vcmp.eq.s32.totalorder %v1299, 63
      %vm1653 = vcmp.eq.s32.totalorder %v1300, 63
      %v1654 = vrot.slane %v785, 1
      %v1655 = vrot.slane %v786, 1
      %v1656 = vrot.slane %v787, 1
      %v1657 = vrot.slane %v788, 1
      %v1658 = vrot.slane %v789, 1
      %v1659 = vrot.slane %v790, 1
      %v1660 = vrot.slane %v791, 1
      %v1661 = vrot.slane %v792, 1
      %v1662 = vrot.slane %v793, 1
      %v1663 = vrot.slane %v794, 1
      %v1664 = vrot.slane %v795, 1
      %v1665 = vrot.slane %v796, 1
      %v1666 = vrot.slane %v797, 1
      %v1667 = vrot.slane %v798, 1
      %v1668 = vrot.slane %v799, 1
      %v1669 = vrot.slane %v800, 1
      %v1670 = vrot.slane %v801, 1
      %v1671 = vrot.slane %v802, 1
      %v1672 = vrot.slane %v803, 1
      %v1673 = vrot.slane %v804, 1
      %v1674 = vrot.slane %v805, 1
      %v1675 = vrot.slane %v806, 1
      %v1676 = vrot.slane %v807, 1
      %v1677 = vrot.slane %v808, 1
      %v1678 = vrot.slane %v809, 1
      %v1679 = vrot.slane %v810, 1
      %v1680 = vrot.slane %v811, 1
      %v1681 = vrot.slane %v812, 1
      %v1682 = vrot.slane %v813, 1
      %v1683 = vrot.slane %v814, 1
      %v1684 = vrot.slane %v815, 1
      %v1685 = vrot.slane %v816, 1
      %vm1686 = vcmp.lt.s32.totalorder %v885, 7
      %v1687 = vsel %vm1686, %v1684, %v1685
      %v1688 = vsel %vm1686, %v1683, %v1684
      %v1689 = vsel %vm1686, %v1682, %v1683
      %v1690 = vsel %vm1686, %v1681, %v1682
      %v1691 = vsel %vm1686, %v1680, %v1681
      %v1692 = vsel %vm1686, %v1679, %v1680
      %v1693 = vsel %vm1686, %v1678, %v1679
      %v1694 = vsel %vm1686, %v1677, %v1678
      %v1695 = vsel %vm1686, %v1676, %v1677
      %v1696 = vsel %vm1686, %v1675, %v1676
      %v1697 = vsel %vm1686, %v1674, %v1675
      %v1698 = vsel %vm1686, %v1673, %v1674
      %v1699 = vsel %vm1686, %v1672, %v1673
      %v1700 = vsel %vm1686, %v1671, %v1672
      %v1701 = vsel %vm1686, %v1670, %v1671
      %v1702 = vsel %vm1686, %v1669, %v1670
      %v1703 = vsel %vm1686, %v1668, %v1669
      %v1704 = vsel %vm1686, %v1667, %v1668
      %v1705 = vsel %vm1686, %v1666, %v1667
      %v1706 = vsel %vm1686, %v1665, %v1666
      %v1707 = vsel %vm1686, %v1664, %v1665
      %v1708 = vsel %vm1686, %v1663, %v1664
      %v1709 = vsel %vm1686, %v1662, %v1663
      %v1710 = vsel %vm1686, %v1661, %v1662
      %v1711 = vsel %vm1686, %v1660, %v1661
      %v1712 = vsel %vm1686, %v1659, %v1660
      %v1713 = vsel %vm1686, %v1658, %v1659
      %v1714 = vsel %vm1686, %v1657, %v1658
      %v1715 = vsel %vm1686, %v1656, %v1657
      %v1716 = vsel %vm1686, %v1655, %v1656
      %v1717 = vsel %vm1686, %v1654, %v1655
      %v1718 = vsel %vm1686, %v1685, %v1654
      %v1719 = vsel %vm1622, 1, 0
      %v1720 = vsel %vm1623, 1, 0
      %v1721 = vsel %vm1624, 1, 0
      %v1722 = vsel %vm1625, 1, 0
      %v1723 = vsel %vm1626, 1, 0
      %v1724 = vsel %vm1627, 1, 0
      %v1725 = vsel %vm1628, 1, 0
      %v1726 = vsel %vm1629, 1, 0
      %v1727 = vsel %vm1630, 1, 0
      %v1728 = vsel %vm1631, 1, 0
      %v1729 = vsel %vm1632, 1, 0
      %v1730 = vsel %vm1633, 1, 0
      %v1731 = vsel %vm1634, 1, 0
      %v1732 = vsel %vm1635, 1, 0
      %v1733 = vsel %vm1636, 1, 0
      %v1734 = vsel %vm1637, 1, 0
      %v1735 = vsel %vm1638, 1, 0
      %v1736 = vsel %vm1639, 1, 0
      %v1737 = vsel %vm1640, 1, 0
      %v1738 = vsel %vm1641, 1, 0
      %v1739 = vsel %vm1642, 1, 0
      %v1740 = vsel %vm1643, 1, 0
      %v1741 = vsel %vm1644, 1, 0
      %v1742 = vsel %vm1645, 1, 0
      %v1743 = vsel %vm1646, 1, 0
      %v1744 = vsel %vm1647, 1, 0
      %v1745 = vsel %vm1648, 1, 0
      %v1746 = vsel %vm1649, 1, 0
      %v1747 = vsel %vm1650, 1, 0
      %v1748 = vsel %vm1651, 1, 0
      %v1749 = vsel %vm1652, 1, 0
      %v1750 = vsel %vm1653, 1, 0
      %vm1751 = vcmp.eq.s32.totalorder %v1719, 1
      %vm1752 = vcmp.eq.s32.totalorder %v1720, 1
      %vm1753 = vcmp.eq.s32.totalorder %v1721, 1
      %vm1754 = vcmp.eq.s32.totalorder %v1722, 1
      %vm1755 = vcmp.eq.s32.totalorder %v1723, 1
      %vm1756 = vcmp.eq.s32.totalorder %v1724, 1
      %vm1757 = vcmp.eq.s32.totalorder %v1725, 1
      %vm1758 = vcmp.eq.s32.totalorder %v1726, 1
      %vm1759 = vcmp.eq.s32.totalorder %v1727, 1
      %vm1760 = vcmp.eq.s32.totalorder %v1728, 1
      %vm1761 = vcmp.eq.s32.totalorder %v1729, 1
      %vm1762 = vcmp.eq.s32.totalorder %v1730, 1
      %vm1763 = vcmp.eq.s32.totalorder %v1731, 1
      %vm1764 = vcmp.eq.s32.totalorder %v1732, 1
      %vm1765 = vcmp.eq.s32.totalorder %v1733, 1
      %vm1766 = vcmp.eq.s32.totalorder %v1734, 1
      %vm1767 = vcmp.eq.s32.totalorder %v1735, 1
      %vm1768 = vcmp.eq.s32.totalorder %v1736, 1
      %vm1769 = vcmp.eq.s32.totalorder %v1737, 1
      %vm1770 = vcmp.eq.s32.totalorder %v1738, 1
      %vm1771 = vcmp.eq.s32.totalorder %v1739, 1
      %vm1772 = vcmp.eq.s32.totalorder %v1740, 1
      %vm1773 = vcmp.eq.s32.totalorder %v1741, 1
      %vm1774 = vcmp.eq.s32.totalorder %v1742, 1
      %vm1775 = vcmp.eq.s32.totalorder %v1743, 1
      %vm1776 = vcmp.eq.s32.totalorder %v1744, 1
      %vm1777 = vcmp.eq.s32.totalorder %v1745, 1
      %vm1778 = vcmp.eq.s32.totalorder %v1746, 1
      %vm1779 = vcmp.eq.s32.totalorder %v1747, 1
      %vm1780 = vcmp.eq.s32.totalorder %v1748, 1
      %vm1781 = vcmp.eq.s32.totalorder %v1749, 1
      %vm1782 = vcmp.eq.s32.totalorder %v1750, 1
      %v1783 = vsel %vm1751, 0.0, %v1717
      %v1784 = vsel %vm1752, 0.0, %v1716
      %v1785 = vsel %vm1753, 0.0, %v1715
      %v1786 = vsel %vm1754, 0.0, %v1714
      %v1787 = vsel %vm1755, 0.0, %v1713
      %v1788 = vsel %vm1756, 0.0, %v1712
      %v1789 = vsel %vm1757, 0.0, %v1711
      %v1790 = vsel %vm1758, 0.0, %v1710
      %v1791 = vsel %vm1759, 0.0, %v1709
      %v1792 = vsel %vm1760, 0.0, %v1708
      %v1793 = vsel %vm1761, 0.0, %v1707
      %v1794 = vsel %vm1762, 0.0, %v1706
      %v1795 = vsel %vm1763, 0.0, %v1705
      %v1796 = vsel %vm1764, 0.0, %v1704
      %v1797 = vsel %vm1765, 0.0, %v1703
      %v1798 = vsel %vm1766, 0.0, %v1702
      %v1799 = vsel %vm1767, 0.0, %v1701
      %v1800 = vsel %vm1768, 0.0, %v1700
      %v1801 = vsel %vm1769, 0.0, %v1699
      %v1802 = vsel %vm1770, 0.0, %v1698
      %v1803 = vsel %vm1771, 0.0, %v1697
      %v1804 = vsel %vm1772, 0.0, %v1696
      %v1805 = vsel %vm1773, 0.0, %v1695
      %v1806 = vsel %vm1774, 0.0, %v1694
      %v1807 = vsel %vm1775, 0.0, %v1693
      %v1808 = vsel %vm1776, 0.0, %v1692
      %v1809 = vsel %vm1777, 0.0, %v1691
      %v1810 = vsel %vm1778, 0.0, %v1690
      %v1811 = vsel %vm1779, 0.0, %v1689
      %v1812 = vsel %vm1780, 0.0, %v1688
      %v1813 = vsel %vm1781, 0.0, %v1687
      %v1814 = vsel %vm1782, 0.0, %v1718
      %v1815 = vld [vmem:[%s3] sm:$0xff]
      %v1816 = vld [vmem:[%s3 + $0x8] sm:$0xff]
      %v1817 = vld [vmem:[%s3 + $0x10] sm:$0xff]
      %v1818 = vld [vmem:[%s3 + $0x18] sm:$0xff]
      %v1819 = vld [vmem:[%s3 + $0x20] sm:$0xff]
      %v1820 = vld [vmem:[%s3 + $0x28] sm:$0xff]
      %v1821 = vld [vmem:[%s3 + $0x30] sm:$0xff]
      %v1822 = vld [vmem:[%s3 + $0x38] sm:$0xff]
      %v1823 = vld [vmem:[%s3 + $0x40] sm:$0xff]
      %v1824 = vld [vmem:[%s3 + $0x48] sm:$0xff]
      %v1825 = vld [vmem:[%s3 + $0x50] sm:$0xff]
      %v1826 = vld [vmem:[%s3 + $0x58] sm:$0xff]
      %v1828 = vsel %vm264, %v785, 0
      %v1831 = vsel %vm264, %v786, 0
      %v1834 = vsel %vm264, %v787, 0
      %v1837 = vsel %vm264, %v788, 0
      %v1840 = vsel %vm264, %v789, 0
      %v1843 = vsel %vm264, %v790, 0
      %v1846 = vsel %vm264, %v791, 0
      %v1849 = vsel %vm264, %v792, 0
      %v1852 = vsel %vm264, %v793, 0
      %v1855 = vsel %vm264, %v794, 0
      %v1858 = vsel %vm264, %v795, 0
      %v1861 = vsel %vm264, %v796, 0
      %v1864 = vsel %vm264, %v797, 0
      %v1867 = vsel %vm264, %v798, 0
      %v1870 = vsel %vm264, %v799, 0
      %v1873 = vsel %vm264, %v800, 0
      %v1876 = vsel %vm264, %v801, 0
      %v1879 = vsel %vm264, %v802, 0
      %v1882 = vsel %vm264, %v803, 0
      %v1885 = vsel %vm264, %v804, 0
      %v1888 = vsel %vm264, %v805, 0
      %v1891 = vsel %vm264, %v806, 0
      %v1894 = vsel %vm264, %v807, 0
      %v1897 = vsel %vm264, %v808, 0
      %v1900 = vsel %vm264, %v809, 0
      %v1903 = vsel %vm264, %v810, 0
      %v1906 = vsel %vm264, %v811, 0
      %v1909 = vsel %vm264, %v812, 0
      %v1912 = vsel %vm264, %v813, 0
      %v1915 = vsel %vm264, %v814, 0
      %v1918 = vsel %vm264, %v815, 0
      %v1921 = vsel %vm264, %v816, 0
      %1923 = vmatprep.subr.mxu0 0.0
      %1924 = vmatpush1.msra.mxu0 %v1819
      %1925 = vmatprep.subr.mxu0 0.0
      %1926 = vmatpush1.msra.mxu0 %v1820
      %1927 = vmatprep.subr.mxu0 0.0
      %1928 = vmatpush1.msra.mxu0 %v1821
      %1929 = vmatprep.subr.mxu0 0.0
      %1930 = vmatpush1.msra.mxu0 %v1822
      %1931 = vmatprep.subr.mxu0 0.0
      %1932 = vmatpush1.msra.mxu0 0.0
      %1933 = vmatprep.subr.mxu0 0.0
      %1934 = vmatpush1.msra.mxu0 0.0
      %1935 = vmatprep.subr.mxu0 0.0
      %1936 = vmatpush1.msra.mxu0 0.0
      %1937 = vmatprep.subr.mxu0 0.0
      %1938 = vmatpush1.msra.mxu0 0.0
      %1939 = vmatprep.subr.mxu0 0.0
      %1940 = vmatpush1.msra.mxu0 0.0
      %1941 = vmatprep.subr.mxu0 0.0
      %1942 = vmatpush1.msra.mxu0 0.0
      %1943 = vmatprep.subr.mxu0 0.0
      %1944 = vmatpush1.msra.mxu0 0.0
      %1945 = vmatprep.subr.mxu0 0.0
      %1946 = vmatpush1.msra.mxu0 0.0
      %1947 = vmatprep.subr.mxu0 0.0
      %1948 = vmatpush1.msra.mxu0 0.0
      %1949 = vmatprep.subr.mxu0 0.0
      %1950 = vmatpush1.msra.mxu0 0.0
      %1951 = vmatprep.subr.mxu0 0.0
      %1952 = vmatpush1.msra.mxu0 0.0
      %1953 = vmatprep.subr.mxu0 0.0
      %1954 = vmatpush1.msra.mxu0 0.0
      %1955 = vmatprep.subr.mxu0 0.0
      %1956 = vmatpush1.msra.mxu0 0.0
      %1957 = vmatprep.subr.mxu0 0.0
      %1958 = vmatpush1.msra.mxu0 0.0
      %1959 = vmatprep.subr.mxu0 0.0
      %1960 = vmatpush1.msra.mxu0 0.0
      %1961 = vmatprep.subr.mxu0 0.0
      %1962 = vmatpush1.msra.mxu0 0.0
      %1963 = vmatprep.subr.mxu0 0.0
      %1964 = vmatpush1.msra.mxu0 0.0
      %1965 = vmatprep.subr.mxu0 0.0
      %1966 = vmatpush1.msra.mxu0 0.0
      %1967 = vmatprep.subr.mxu0 0.0
      %1968 = vmatpush1.msra.mxu0 0.0
      %1969 = vmatprep.subr.mxu0 0.0
      %1970 = vmatpush1.msra.mxu0 0.0
      %1971 = vmatprep.subr.mxu0 0.0
      %1972 = vmatpush1.msra.mxu0 0.0
      %1973 = vmatprep.subr.mxu0 0.0
      %1974 = vmatpush1.msra.mxu0 0.0
      %1975 = vmatprep.subr.mxu0 0.0
      %1976 = vmatpush1.msra.mxu0 0.0
      %1977 = vmatprep.subr.mxu0 0.0
      %1978 = vmatpush1.msra.mxu0 0.0
      %1979 = vmatprep.subr.mxu0 0.0
      %1980 = vmatpush1.msra.mxu0 0.0
      %1981 = vmatprep.subr.mxu0 0.0
      %1982 = vmatpush1.msra.mxu0 0.0
      %1983 = vmatprep.subr.mxu0 0.0
      %1984 = vmatpush1.msra.mxu0 0.0
      %1985 = vmatprep.subr.mxu0 0.0
      %1986 = vmatpush1.msra.mxu0 0.0
      %1987 = vmatprep.mubr.f32.mxu0 0.0
      %1988 = vmatmul.mubr.f32.gmra.mrb[0].mxu0 %v1828
      %v1989 = vpop.f32.mrb[0].mxu0
      %v1990 = vadd.f32 0.0, %v1989
      %v1991 = vpop.f32.mrb[0].mxu0
      %1992 = vmatprep.mubr.f32.mxu0 0.0
      %1993 = vmatmul.mubr.f32.gmra.mrb[0].mxu0 %v1831
      %v1994 = vpop.f32.mrb[0].mxu0
      %v1995 = vadd.f32 0.0, %v1994
      %v1996 = vpop.f32.mrb[0].mxu0
      %1997 = vmatprep.mubr.f32.mxu0 0.0
      %1998 = vmatmul.mubr.f32.gmra.mrb[0].mxu0 %v1834
      %v1999 = vpop.f32.mrb[0].mxu0
      %v2000 = vadd.f32 0.0, %v1999
      %v2001 = vpop.f32.mrb[0].mxu0
      %2002 = vmatprep.mubr.f32.mxu0 0.0
      %2003 = vmatmul.mubr.f32.gmra.mrb[0].mxu0 %v1837
      %v2004 = vpop.f32.mrb[0].mxu0
      %v2005 = vadd.f32 0.0, %v2004
      %v2006 = vpop.f32.mrb[0].mxu0
      %2007 = vmatprep.mubr.f32.mxu0 0.0
      %2008 = vmatmul.mubr.f32.gmra.mrb[0].mxu0 %v1840
      %v2009 = vpop.f32.mrb[0].mxu0
      %v2010 = vadd.f32 0.0, %v2009
      %v2011 = vpop.f32.mrb[0].mxu0
      %2012 = vmatprep.mubr.f32.mxu0 0.0
      %2013 = vmatmul.mubr.f32.gmra.mrb[0].mxu0 %v1843
      %v2014 = vpop.f32.mrb[0].mxu0
      %v2015 = vadd.f32 0.0, %v2014
      %v2016 = vpop.f32.mrb[0].mxu0
      %2017 = vmatprep.mubr.f32.mxu0 0.0
      %2018 = vmatmul.mubr.f32.gmra.mrb[0].mxu0 %v1846
      %v2019 = vpop.f32.mrb[0].mxu0
      %v2020 = vadd.f32 0.0, %v2019
      %v2021 = vpop.f32.mrb[0].mxu0
      %2022 = vmatprep.mubr.f32.mxu0 0.0
      %2023 = vmatmul.mubr.f32.gmra.mrb[0].mxu0 %v1849
      %v2024 = vpop.f32.mrb[0].mxu0
      %v2025 = vadd.f32 0.0, %v2024
      %v2026 = vpop.f32.mrb[0].mxu0
      %2027 = vmatprep.mubr.f32.mxu0 0.0
      %2028 = vmatmul.mubr.f32.gmra.mrb[0].mxu0 %v1852
      %v2029 = vpop.f32.mrb[0].mxu0
      %v2030 = vadd.f32 0.0, %v2029
      %v2031 = vpop.f32.mrb[0].mxu0
      %2032 = vmatprep.mubr.f32.mxu0 0.0
      %2033 = vmatmul.mubr.f32.gmra.mrb[0].mxu0 %v1855
      %v2034 = vpop.f32.mrb[0].mxu0
      %v2035 = vadd.f32 0.0, %v2034
      %v2036 = vpop.f32.mrb[0].mxu0
      %2037 = vmatprep.mubr.f32.mxu0 0.0
      %2038 = vmatmul.mubr.f32.gmra.mrb[0].mxu0 %v1858
      %v2039 = vpop.f32.mrb[0].mxu0
      %v2040 = vadd.f32 0.0, %v2039
      %v2041 = vpop.f32.mrb[0].mxu0
      %2042 = vmatprep.mubr.f32.mxu0 0.0
      %2043 = vmatmul.mubr.f32.gmra.mrb[0].mxu0 %v1861
      %v2044 = vpop.f32.mrb[0].mxu0
      %v2045 = vadd.f32 0.0, %v2044
      %v2046 = vpop.f32.mrb[0].mxu0
      %2047 = vmatprep.mubr.f32.mxu0 0.0
      %2048 = vmatmul.mubr.f32.gmra.mrb[0].mxu0 %v1864
      %v2049 = vpop.f32.mrb[0].mxu0
      %v2050 = vadd.f32 0.0, %v2049
      %v2051 = vpop.f32.mrb[0].mxu0
      %2052 = vmatprep.mubr.f32.mxu0 0.0
      %2053 = vmatmul.mubr.f32.gmra.mrb[0].mxu0 %v1867
      %v2054 = vpop.f32.mrb[0].mxu0
      %v2055 = vadd.f32 0.0, %v2054
      %v2056 = vpop.f32.mrb[0].mxu0
      %2057 = vmatprep.mubr.f32.mxu0 0.0
      %2058 = vmatmul.mubr.f32.gmra.mrb[0].mxu0 %v1870
      %v2059 = vpop.f32.mrb[0].mxu0
      %v2060 = vadd.f32 0.0, %v2059
      %v2061 = vpop.f32.mrb[0].mxu0
      %2062 = vmatprep.mubr.f32.mxu0 0.0
      %2063 = vmatmul.mubr.f32.gmra.mrb[0].mxu0 %v1873
      %v2064 = vpop.f32.mrb[0].mxu0
      %v2065 = vadd.f32 0.0, %v2064
      %v2066 = vpop.f32.mrb[0].mxu0
      %2067 = vmatprep.mubr.f32.mxu0 0.0
      %2068 = vmatmul.mubr.f32.gmra.mrb[0].mxu0 %v1876
      %v2069 = vpop.f32.mrb[0].mxu0
      %v2070 = vadd.f32 0.0, %v2069
      %v2071 = vpop.f32.mrb[0].mxu0
      %2072 = vmatprep.mubr.f32.mxu0 0.0
      %2073 = vmatmul.mubr.f32.gmra.mrb[0].mxu0 %v1879
      %v2074 = vpop.f32.mrb[0].mxu0
      %v2075 = vadd.f32 0.0, %v2074
      %v2076 = vpop.f32.mrb[0].mxu0
      %2077 = vmatprep.mubr.f32.mxu0 0.0
      %2078 = vmatmul.mubr.f32.gmra.mrb[0].mxu0 %v1882
      %v2079 = vpop.f32.mrb[0].mxu0
      %v2080 = vadd.f32 0.0, %v2079
      %v2081 = vpop.f32.mrb[0].mxu0
      %2082 = vmatprep.mubr.f32.mxu0 0.0
      %2083 = vmatmul.mubr.f32.gmra.mrb[0].mxu0 %v1885
      %v2084 = vpop.f32.mrb[0].mxu0
      %v2085 = vadd.f32 0.0, %v2084
      %v2086 = vpop.f32.mrb[0].mxu0
      %2087 = vmatprep.mubr.f32.mxu0 0.0
      %2088 = vmatmul.mubr.f32.gmra.mrb[0].mxu0 %v1888
      %v2089 = vpop.f32.mrb[0].mxu0
      %v2090 = vadd.f32 0.0, %v2089
      %v2091 = vpop.f32.mrb[0].mxu0
      %2092 = vmatprep.mubr.f32.mxu0 0.0
      %2093 = vmatmul.mubr.f32.gmra.mrb[0].mxu0 %v1891
      %v2094 = vpop.f32.mrb[0].mxu0
      %v2095 = vadd.f32 0.0, %v2094
      %v2096 = vpop.f32.mrb[0].mxu0
      %2097 = vmatprep.mubr.f32.mxu0 0.0
      %2098 = vmatmul.mubr.f32.gmra.mrb[0].mxu0 %v1894
      %v2099 = vpop.f32.mrb[0].mxu0
      %v2100 = vadd.f32 0.0, %v2099
      %v2101 = vpop.f32.mrb[0].mxu0
      %2102 = vmatprep.mubr.f32.mxu0 0.0
      %2103 = vmatmul.mubr.f32.gmra.mrb[0].mxu0 %v1897
      %v2104 = vpop.f32.mrb[0].mxu0
      %v2105 = vadd.f32 0.0, %v2104
      %v2106 = vpop.f32.mrb[0].mxu0
      %2107 = vmatprep.mubr.f32.mxu0 0.0
      %2108 = vmatmul.mubr.f32.gmra.mrb[0].mxu0 %v1900
      %v2109 = vpop.f32.mrb[0].mxu0
      %v2110 = vadd.f32 0.0, %v2109
      %v2111 = vpop.f32.mrb[0].mxu0
      %2112 = vmatprep.mubr.f32.mxu0 0.0
      %2113 = vmatmul.mubr.f32.gmra.mrb[0].mxu0 %v1903
      %v2114 = vpop.f32.mrb[0].mxu0
      %v2115 = vadd.f32 0.0, %v2114
      %v2116 = vpop.f32.mrb[0].mxu0
      %2117 = vmatprep.mubr.f32.mxu0 0.0
      %2118 = vmatmul.mubr.f32.gmra.mrb[0].mxu0 %v1906
      %v2119 = vpop.f32.mrb[0].mxu0
      %v2120 = vadd.f32 0.0, %v2119
      %v2121 = vpop.f32.mrb[0].mxu0
      %2122 = vmatprep.mubr.f32.mxu0 0.0
      %2123 = vmatmul.mubr.f32.gmra.mrb[0].mxu0 %v1909
      %v2124 = vpop.f32.mrb[0].mxu0
      %v2125 = vadd.f32 0.0, %v2124
      %v2126 = vpop.f32.mrb[0].mxu0
      %2127 = vmatprep.mubr.f32.mxu0 0.0
      %2128 = vmatmul.mubr.f32.gmra.mrb[0].mxu0 %v1912
      %v2129 = vpop.f32.mrb[0].mxu0
      %v2130 = vadd.f32 0.0, %v2129
      %v2131 = vpop.f32.mrb[0].mxu0
      %2132 = vmatprep.mubr.f32.mxu0 0.0
      %2133 = vmatmul.mubr.f32.gmra.mrb[0].mxu0 %v1915
      %v2134 = vpop.f32.mrb[0].mxu0
      %v2135 = vadd.f32 0.0, %v2134
      %v2136 = vpop.f32.mrb[0].mxu0
      %2137 = vmatprep.mubr.f32.mxu0 0.0
      %2138 = vmatmul.mubr.f32.gmra.mrb[0].mxu0 %v1918
      %v2139 = vpop.f32.mrb[0].mxu0
      %v2140 = vadd.f32 0.0, %v2139
      %v2141 = vpop.f32.mrb[0].mxu0
      %2142 = vmatprep.mubr.f32.mxu0 0.0
      %2143 = vmatmul.mubr.f32.gmra.mrb[0].mxu0 %v1921
      %v2144 = vpop.f32.mrb[0].mxu0
      %v2145 = vadd.f32 0.0, %v2144
      %v2146 = vpop.f32.mrb[0].mxu0
      %2147 = vdwg.mxu0
      %v2149 = vsel %vm264, %v1590, 0
      %v2152 = vsel %vm264, %v1591, 0
      %v2155 = vsel %vm264, %v1592, 0
      %v2158 = vsel %vm264, %v1593, 0
      %v2161 = vsel %vm264, %v1594, 0
      %v2164 = vsel %vm264, %v1595, 0
      %v2167 = vsel %vm264, %v1596, 0
      %v2170 = vsel %vm264, %v1597, 0
      %v2173 = vsel %vm264, %v1598, 0
      %v2176 = vsel %vm264, %v1599, 0
      %v2179 = vsel %vm264, %v1600, 0
      %v2182 = vsel %vm264, %v1601, 0
      %v2185 = vsel %vm264, %v1602, 0
      %v2188 = vsel %vm264, %v1603, 0
      %v2191 = vsel %vm264, %v1604, 0
      %v2194 = vsel %vm264, %v1605, 0
      %v2197 = vsel %vm264, %v1606, 0
      %v2200 = vsel %vm264, %v1607, 0
      %v2203 = vsel %vm264, %v1608, 0
      %v2206 = vsel %vm264, %v1609, 0
      %v2209 = vsel %vm264, %v1610, 0
      %v2212 = vsel %vm264, %v1611, 0
      %v2215 = vsel %vm264, %v1612, 0
      %v2218 = vsel %vm264, %v1613, 0
      %v2221 = vsel %vm264, %v1614, 0
      %v2224 = vsel %vm264, %v1615, 0
      %v2227 = vsel %vm264, %v1616, 0
      %v2230 = vsel %vm264, %v1617, 0
      %v2233 = vsel %vm264, %v1618, 0
      %v2236 = vsel %vm264, %v1619, 0
      %v2239 = vsel %vm264, %v1620, 0
      %v2242 = vsel %vm264, %v1621, 0
      %2244 = vmatprep.subr.mxu0 0.0
      %2245 = vmatpush1.msra.mxu0 %v1815
      %2246 = vmatprep.subr.mxu0 0.0
      %2247 = vmatpush1.msra.mxu0 %v1816
      %2248 = vmatprep.subr.mxu0 0.0
      %2249 = vmatpush1.msra.mxu0 %v1817
      %2250 = vmatprep.subr.mxu0 0.0
      %2251 = vmatpush1.msra.mxu0 %v1818
      %2252 = vmatprep.subr.mxu0 0.0
      %2253 = vmatpush1.msra.mxu0 0.0
      %2254 = vmatprep.subr.mxu0 0.0
      %2255 = vmatpush1.msra.mxu0 0.0
      %2256 = vmatprep.subr.mxu0 0.0
      %2257 = vmatpush1.msra.mxu0 0.0
      %2258 = vmatprep.subr.mxu0 0.0
      %2259 = vmatpush1.msra.mxu0 0.0
      %2260 = vmatprep.subr.mxu0 0.0
      %2261 = vmatpush1.msra.mxu0 0.0
      %2262 = vmatprep.subr.mxu0 0.0
      %2263 = vmatpush1.msra.mxu0 0.0
      %2264 = vmatprep.subr.mxu0 0.0
      %2265 = vmatpush1.msra.mxu0 0.0
      %2266 = vmatprep.subr.mxu0 0.0
      %2267 = vmatpush1.msra.mxu0 0.0
      %2268 = vmatprep.subr.mxu0 0.0
      %2269 = vmatpush1.msra.mxu0 0.0
      %2270 = vmatprep.subr.mxu0 0.0
      %2271 = vmatpush1.msra.mxu0 0.0
      %2272 = vmatprep.subr.mxu0 0.0
      %2273 = vmatpush1.msra.mxu0 0.0
      %2274 = vmatprep.subr.mxu0 0.0
      %2275 = vmatpush1.msra.mxu0 0.0
      %2276 = vmatprep.subr.mxu0 0.0
      %2277 = vmatpush1.msra.mxu0 0.0
      %2278 = vmatprep.subr.mxu0 0.0
      %2279 = vmatpush1.msra.mxu0 0.0
      %2280 = vmatprep.subr.mxu0 0.0
      %2281 = vmatpush1.msra.mxu0 0.0
      %2282 = vmatprep.subr.mxu0 0.0
      %2283 = vmatpush1.msra.mxu0 0.0
      %2284 = vmatprep.subr.mxu0 0.0
      %2285 = vmatpush1.msra.mxu0 0.0
      %2286 = vmatprep.subr.mxu0 0.0
      %2287 = vmatpush1.msra.mxu0 0.0
      %2288 = vmatprep.subr.mxu0 0.0
      %2289 = vmatpush1.msra.mxu0 0.0
      %2290 = vmatprep.subr.mxu0 0.0
      %2291 = vmatpush1.msra.mxu0 0.0
      %2292 = vmatprep.subr.mxu0 0.0
      %2293 = vmatpush1.msra.mxu0 0.0
      %2294 = vmatprep.subr.mxu0 0.0
      %2295 = vmatpush1.msra.mxu0 0.0
      %2296 = vmatprep.subr.mxu0 0.0
      %2297 = vmatpush1.msra.mxu0 0.0
      %2298 = vmatprep.subr.mxu0 0.0
      %2299 = vmatpush1.msra.mxu0 0.0
      %2300 = vmatprep.subr.mxu0 0.0
      %2301 = vmatpush1.msra.mxu0 0.0
      %2302 = vmatprep.subr.mxu0 0.0
      %2303 = vmatpush1.msra.mxu0 0.0
      %2304 = vmatprep.subr.mxu0 0.0
      %2305 = vmatpush1.msra.mxu0 0.0
      %2306 = vmatprep.subr.mxu0 0.0
      %2307 = vmatpush1.msra.mxu0 0.0
      %2308 = vmatprep.mubr.f32.mxu0 0.0
      %2309 = vmatmul.mubr.f32.gmra.mrb[0].mxu0 %v2149
      %v2310 = vpop.f32.mrb[0].mxu0
      %v2311 = vadd.f32 %v1990, %v2310
      %v2312 = vpop.f32.mrb[0].mxu0
      %2313 = vmatprep.mubr.f32.mxu0 0.0
      %2314 = vmatmul.mubr.f32.gmra.mrb[0].mxu0 %v2152
      %v2315 = vpop.f32.mrb[0].mxu0
      %v2316 = vadd.f32 %v1995, %v2315
      %v2317 = vpop.f32.mrb[0].mxu0
      %2318 = vmatprep.mubr.f32.mxu0 0.0
      %2319 = vmatmul.mubr.f32.gmra.mrb[0].mxu0 %v2155
      %v2320 = vpop.f32.mrb[0].mxu0
      %v2321 = vadd.f32 %v2000, %v2320
      %v2322 = vpop.f32.mrb[0].mxu0
      %2323 = vmatprep.mubr.f32.mxu0 0.0
      %2324 = vmatmul.mubr.f32.gmra.mrb[0].mxu0 %v2158
      %v2325 = vpop.f32.mrb[0].mxu0
      %v2326 = vadd.f32 %v2005, %v2325
      %v2327 = vpop.f32.mrb[0].mxu0
      %2328 = vmatprep.mubr.f32.mxu0 0.0
      %2329 = vmatmul.mubr.f32.gmra.mrb[0].mxu0 %v2161
      %v2330 = vpop.f32.mrb[0].mxu0
      %v2331 = vadd.f32 %v2010, %v2330
      %v2332 = vpop.f32.mrb[0].mxu0
      %2333 = vmatprep.mubr.f32.mxu0 0.0
      %2334 = vmatmul.mubr.f32.gmra.mrb[0].mxu0 %v2164
      %v2335 = vpop.f32.mrb[0].mxu0
      %v2336 = vadd.f32 %v2015, %v2335
      %v2337 = vpop.f32.mrb[0].mxu0
      %2338 = vmatprep.mubr.f32.mxu0 0.0
      %2339 = vmatmul.mubr.f32.gmra.mrb[0].mxu0 %v2167
      %v2340 = vpop.f32.mrb[0].mxu0
      %v2341 = vadd.f32 %v2020, %v2340
      %v2342 = vpop.f32.mrb[0].mxu0
      %2343 = vmatprep.mubr.f32.mxu0 0.0
      %2344 = vmatmul.mubr.f32.gmra.mrb[0].mxu0 %v2170
      %v2345 = vpop.f32.mrb[0].mxu0
      %v2346 = vadd.f32 %v2025, %v2345
      %v2347 = vpop.f32.mrb[0].mxu0
      %2348 = vmatprep.mubr.f32.mxu0 0.0
      %2349 = vmatmul.mubr.f32.gmra.mrb[0].mxu0 %v2173
      %v2350 = vpop.f32.mrb[0].mxu0
      %v2351 = vadd.f32 %v2030, %v2350
      %v2352 = vpop.f32.mrb[0].mxu0
      %2353 = vmatprep.mubr.f32.mxu0 0.0
      %2354 = vmatmul.mubr.f32.gmra.mrb[0].mxu0 %v2176
      %v2355 = vpop.f32.mrb[0].mxu0
      %v2356 = vadd.f32 %v2035, %v2355
      %v2357 = vpop.f32.mrb[0].mxu0
      %2358 = vmatprep.mubr.f32.mxu0 0.0
      %2359 = vmatmul.mubr.f32.gmra.mrb[0].mxu0 %v2179
      %v2360 = vpop.f32.mrb[0].mxu0
      %v2361 = vadd.f32 %v2040, %v2360
      %v2362 = vpop.f32.mrb[0].mxu0
      %2363 = vmatprep.mubr.f32.mxu0 0.0
      %2364 = vmatmul.mubr.f32.gmra.mrb[0].mxu0 %v2182
      %v2365 = vpop.f32.mrb[0].mxu0
      %v2366 = vadd.f32 %v2045, %v2365
      %v2367 = vpop.f32.mrb[0].mxu0
      %2368 = vmatprep.mubr.f32.mxu0 0.0
      %2369 = vmatmul.mubr.f32.gmra.mrb[0].mxu0 %v2185
      %v2370 = vpop.f32.mrb[0].mxu0
      %v2371 = vadd.f32 %v2050, %v2370
      %v2372 = vpop.f32.mrb[0].mxu0
      %2373 = vmatprep.mubr.f32.mxu0 0.0
      %2374 = vmatmul.mubr.f32.gmra.mrb[0].mxu0 %v2188
      %v2375 = vpop.f32.mrb[0].mxu0
      %v2376 = vadd.f32 %v2055, %v2375
      %v2377 = vpop.f32.mrb[0].mxu0
      %2378 = vmatprep.mubr.f32.mxu0 0.0
      %2379 = vmatmul.mubr.f32.gmra.mrb[0].mxu0 %v2191
      %v2380 = vpop.f32.mrb[0].mxu0
      %v2381 = vadd.f32 %v2060, %v2380
      %v2382 = vpop.f32.mrb[0].mxu0
      %2383 = vmatprep.mubr.f32.mxu0 0.0
      %2384 = vmatmul.mubr.f32.gmra.mrb[0].mxu0 %v2194
      %v2385 = vpop.f32.mrb[0].mxu0
      %v2386 = vadd.f32 %v2065, %v2385
      %v2387 = vpop.f32.mrb[0].mxu0
      %2388 = vmatprep.mubr.f32.mxu0 0.0
      %2389 = vmatmul.mubr.f32.gmra.mrb[0].mxu0 %v2197
      %v2390 = vpop.f32.mrb[0].mxu0
      %v2391 = vadd.f32 %v2070, %v2390
      %v2392 = vpop.f32.mrb[0].mxu0
      %2393 = vmatprep.mubr.f32.mxu0 0.0
      %2394 = vmatmul.mubr.f32.gmra.mrb[0].mxu0 %v2200
      %v2395 = vpop.f32.mrb[0].mxu0
      %v2396 = vadd.f32 %v2075, %v2395
      %v2397 = vpop.f32.mrb[0].mxu0
      %2398 = vmatprep.mubr.f32.mxu0 0.0
      %2399 = vmatmul.mubr.f32.gmra.mrb[0].mxu0 %v2203
      %v2400 = vpop.f32.mrb[0].mxu0
      %v2401 = vadd.f32 %v2080, %v2400
      %v2402 = vpop.f32.mrb[0].mxu0
      %2403 = vmatprep.mubr.f32.mxu0 0.0
      %2404 = vmatmul.mubr.f32.gmra.mrb[0].mxu0 %v2206
      %v2405 = vpop.f32.mrb[0].mxu0
      %v2406 = vadd.f32 %v2085, %v2405
      %v2407 = vpop.f32.mrb[0].mxu0
      %2408 = vmatprep.mubr.f32.mxu0 0.0
      %2409 = vmatmul.mubr.f32.gmra.mrb[0].mxu0 %v2209
      %v2410 = vpop.f32.mrb[0].mxu0
      %v2411 = vadd.f32 %v2090, %v2410
      %v2412 = vpop.f32.mrb[0].mxu0
      %2413 = vmatprep.mubr.f32.mxu0 0.0
      %2414 = vmatmul.mubr.f32.gmra.mrb[0].mxu0 %v2212
      %v2415 = vpop.f32.mrb[0].mxu0
      %v2416 = vadd.f32 %v2095, %v2415
      %v2417 = vpop.f32.mrb[0].mxu0
      %2418 = vmatprep.mubr.f32.mxu0 0.0
      %2419 = vmatmul.mubr.f32.gmra.mrb[0].mxu0 %v2215
      %v2420 = vpop.f32.mrb[0].mxu0
      %v2421 = vadd.f32 %v2100, %v2420
      %v2422 = vpop.f32.mrb[0].mxu0
      %2423 = vmatprep.mubr.f32.mxu0 0.0
      %2424 = vmatmul.mubr.f32.gmra.mrb[0].mxu0 %v2218
      %v2425 = vpop.f32.mrb[0].mxu0
      %v2426 = vadd.f32 %v2105, %v2425
      %v2427 = vpop.f32.mrb[0].mxu0
      %2428 = vmatprep.mubr.f32.mxu0 0.0
      %2429 = vmatmul.mubr.f32.gmra.mrb[0].mxu0 %v2221
      %v2430 = vpop.f32.mrb[0].mxu0
      %v2431 = vadd.f32 %v2110, %v2430
      %v2432 = vpop.f32.mrb[0].mxu0
      %2433 = vmatprep.mubr.f32.mxu0 0.0
      %2434 = vmatmul.mubr.f32.gmra.mrb[0].mxu0 %v2224
      %v2435 = vpop.f32.mrb[0].mxu0
      %v2436 = vadd.f32 %v2115, %v2435
      %v2437 = vpop.f32.mrb[0].mxu0
      %2438 = vmatprep.mubr.f32.mxu0 0.0
      %2439 = vmatmul.mubr.f32.gmra.mrb[0].mxu0 %v2227
      %v2440 = vpop.f32.mrb[0].mxu0
      %v2441 = vadd.f32 %v2120, %v2440
      %v2442 = vpop.f32.mrb[0].mxu0
      %2443 = vmatprep.mubr.f32.mxu0 0.0
      %2444 = vmatmul.mubr.f32.gmra.mrb[0].mxu0 %v2230
      %v2445 = vpop.f32.mrb[0].mxu0
      %v2446 = vadd.f32 %v2125, %v2445
      %v2447 = vpop.f32.mrb[0].mxu0
      %2448 = vmatprep.mubr.f32.mxu0 0.0
      %2449 = vmatmul.mubr.f32.gmra.mrb[0].mxu0 %v2233
      %v2450 = vpop.f32.mrb[0].mxu0
      %v2451 = vadd.f32 %v2130, %v2450
      %v2452 = vpop.f32.mrb[0].mxu0
      %2453 = vmatprep.mubr.f32.mxu0 0.0
      %2454 = vmatmul.mubr.f32.gmra.mrb[0].mxu0 %v2236
      %v2455 = vpop.f32.mrb[0].mxu0
      %v2456 = vadd.f32 %v2135, %v2455
      %v2457 = vpop.f32.mrb[0].mxu0
      %2458 = vmatprep.mubr.f32.mxu0 0.0
      %2459 = vmatmul.mubr.f32.gmra.mrb[0].mxu0 %v2239
      %v2460 = vpop.f32.mrb[0].mxu0
      %v2461 = vadd.f32 %v2140, %v2460
      %v2462 = vpop.f32.mrb[0].mxu0
      %2463 = vmatprep.mubr.f32.mxu0 0.0
      %2464 = vmatmul.mubr.f32.gmra.mrb[0].mxu0 %v2242
      %v2465 = vpop.f32.mrb[0].mxu0
      %v2466 = vadd.f32 %v2145, %v2465
      %v2467 = vpop.f32.mrb[0].mxu0
      %2468 = vdwg.mxu0
      %v2469 = vsel %vm264, %v1366, 0
      %v2471 = vsel %vm264, %v1368, 0
      %v2473 = vsel %vm264, %v1370, 0
      %v2475 = vsel %vm264, %v1372, 0
      %v2477 = vsel %vm264, %v1374, 0
      %v2479 = vsel %vm264, %v1376, 0
      %v2481 = vsel %vm264, %v1378, 0
      %v2483 = vsel %vm264, %v1380, 0
      %v2485 = vsel %vm264, %v1382, 0
      %v2487 = vsel %vm264, %v1384, 0
      %v2489 = vsel %vm264, %v1386, 0
      %v2491 = vsel %vm264, %v1388, 0
      %v2493 = vsel %vm264, %v1390, 0
      %v2495 = vsel %vm264, %v1392, 0
      %v2497 = vsel %vm264, %v1394, 0
      %v2499 = vsel %vm264, %v1396, 0
      %v2501 = vsel %vm264, %v1398, 0
      %v2503 = vsel %vm264, %v1400, 0
      %v2505 = vsel %vm264, %v1402, 0
      %v2507 = vsel %vm264, %v1404, 0
      %v2509 = vsel %vm264, %v1406, 0
      %v2511 = vsel %vm264, %v1408, 0
      %v2513 = vsel %vm264, %v1410, 0
      %v2515 = vsel %vm264, %v1412, 0
      %v2517 = vsel %vm264, %v1414, 0
      %v2519 = vsel %vm264, %v1416, 0
      %v2521 = vsel %vm264, %v1418, 0
      %v2523 = vsel %vm264, %v1420, 0
      %v2525 = vsel %vm264, %v1422, 0
      %v2527 = vsel %vm264, %v1424, 0
      %v2529 = vsel %vm264, %v1426, 0
      %v2531 = vsel %vm264, %v1428, 0
      %2533 = vmatprep.subr.mxu0 0.0
      %2534 = vmatpush1.msra.mxu0 %v1823
      %2535 = vmatprep.subr.mxu0 0.0
      %2536 = vmatpush1.msra.mxu0 %v1824
      %2537 = vmatprep.subr.mxu0 0.0
      %2538 = vmatpush1.msra.mxu0 %v1825
      %2539 = vmatprep.subr.mxu0 0.0
      %2540 = vmatpush1.msra.mxu0 %v1826
      %2541 = vmatprep.subr.mxu0 0.0
      %2542 = vmatpush1.msra.mxu0 0.0
      %2543 = vmatprep.subr.mxu0 0.0
      %2544 = vmatpush1.msra.mxu0 0.0
      %2545 = vmatprep.subr.mxu0 0.0
      %2546 = vmatpush1.msra.mxu0 0.0
      %2547 = vmatprep.subr.mxu0 0.0
      %2548 = vmatpush1.msra.mxu0 0.0
      %2549 = vmatprep.subr.mxu0 0.0
      %2550 = vmatpush1.msra.mxu0 0.0
      %2551 = vmatprep.subr.mxu0 0.0
      %2552 = vmatpush1.msra.mxu0 0.0
      %2553 = vmatprep.subr.mxu0 0.0
      %2554 = vmatpush1.msra.mxu0 0.0
      %2555 = vmatprep.subr.mxu0 0.0
      %2556 = vmatpush1.msra.mxu0 0.0
      %2557 = vmatprep.subr.mxu0 0.0
      %2558 = vmatpush1.msra.mxu0 0.0
      %2559 = vmatprep.subr.mxu0 0.0
      %2560 = vmatpush1.msra.mxu0 0.0
      %2561 = vmatprep.subr.mxu0 0.0
      %2562 = vmatpush1.msra.mxu0 0.0
      %2563 = vmatprep.subr.mxu0 0.0
      %2564 = vmatpush1.msra.mxu0 0.0
      %2565 = vmatprep.subr.mxu0 0.0
      %2566 = vmatpush1.msra.mxu0 0.0
      %2567 = vmatprep.subr.mxu0 0.0
      %2568 = vmatpush1.msra.mxu0 0.0
      %2569 = vmatprep.subr.mxu0 0.0
      %2570 = vmatpush1.msra.mxu0 0.0
      %2571 = vmatprep.subr.mxu0 0.0
      %2572 = vmatpush1.msra.mxu0 0.0
      %2573 = vmatprep.subr.mxu0 0.0
      %2574 = vmatpush1.msra.mxu0 0.0
      %2575 = vmatprep.subr.mxu0 0.0
      %2576 = vmatpush1.msra.mxu0 0.0
      %2577 = vmatprep.subr.mxu0 0.0
      %2578 = vmatpush1.msra.mxu0 0.0
      %2579 = vmatprep.subr.mxu0 0.0
      %2580 = vmatpush1.msra.mxu0 0.0
      %2581 = vmatprep.subr.mxu0 0.0
      %2582 = vmatpush1.msra.mxu0 0.0
      %2583 = vmatprep.subr.mxu0 0.0
      %2584 = vmatpush1.msra.mxu0 0.0
      %2585 = vmatprep.subr.mxu0 0.0
      %2586 = vmatpush1.msra.mxu0 0.0
      %2587 = vmatprep.subr.mxu0 0.0
      %2588 = vmatpush1.msra.mxu0 0.0
      %2589 = vmatprep.subr.mxu0 0.0
      %2590 = vmatpush1.msra.mxu0 0.0
      %2591 = vmatprep.subr.mxu0 0.0
      %2592 = vmatpush1.msra.mxu0 0.0
      %2593 = vmatprep.subr.mxu0 0.0
      %2594 = vmatpush1.msra.mxu0 0.0
      %2595 = vmatprep.subr.mxu0 0.0
      %2596 = vmatpush1.msra.mxu0 0.0
      %2597 = vmatprep.mubr.f32.mxu0 0.0
      %2598 = vmatmul.mubr.f32.gmra.mrb[0].mxu0 %v2469
      %v2599 = vpop.f32.mrb[0].mxu0
      %v2600 = vadd.f32 0.0, %v2599
      %v2601 = vpop.f32.mrb[0].mxu0
      %2602 = vmatprep.mubr.f32.mxu0 0.0
      %2603 = vmatmul.mubr.f32.gmra.mrb[0].mxu0 %v2471
      %v2604 = vpop.f32.mrb[0].mxu0
      %v2605 = vadd.f32 0.0, %v2604
      %v2606 = vpop.f32.mrb[0].mxu0
      %2607 = vmatprep.mubr.f32.mxu0 0.0
      %2608 = vmatmul.mubr.f32.gmra.mrb[0].mxu0 %v2473
      %v2609 = vpop.f32.mrb[0].mxu0
      %v2610 = vadd.f32 0.0, %v2609
      %v2611 = vpop.f32.mrb[0].mxu0
      %2612 = vmatprep.mubr.f32.mxu0 0.0
      %2613 = vmatmul.mubr.f32.gmra.mrb[0].mxu0 %v2475
      %v2614 = vpop.f32.mrb[0].mxu0
      %v2615 = vadd.f32 0.0, %v2614
      %v2616 = vpop.f32.mrb[0].mxu0
      %2617 = vmatprep.mubr.f32.mxu0 0.0
      %2618 = vmatmul.mubr.f32.gmra.mrb[0].mxu0 %v2477
      %v2619 = vpop.f32.mrb[0].mxu0
      %v2620 = vadd.f32 0.0, %v2619
      %v2621 = vpop.f32.mrb[0].mxu0
      %2622 = vmatprep.mubr.f32.mxu0 0.0
      %2623 = vmatmul.mubr.f32.gmra.mrb[0].mxu0 %v2479
      %v2624 = vpop.f32.mrb[0].mxu0
      %v2625 = vadd.f32 0.0, %v2624
      %v2626 = vpop.f32.mrb[0].mxu0
      %2627 = vmatprep.mubr.f32.mxu0 0.0
      %2628 = vmatmul.mubr.f32.gmra.mrb[0].mxu0 %v2481
      %v2629 = vpop.f32.mrb[0].mxu0
      %v2630 = vadd.f32 0.0, %v2629
      %v2631 = vpop.f32.mrb[0].mxu0
      %2632 = vmatprep.mubr.f32.mxu0 0.0
      %2633 = vmatmul.mubr.f32.gmra.mrb[0].mxu0 %v2483
      %v2634 = vpop.f32.mrb[0].mxu0
      %v2635 = vadd.f32 0.0, %v2634
      %v2636 = vpop.f32.mrb[0].mxu0
      %2637 = vmatprep.mubr.f32.mxu0 0.0
      %2638 = vmatmul.mubr.f32.gmra.mrb[0].mxu0 %v2485
      %v2639 = vpop.f32.mrb[0].mxu0
      %v2640 = vadd.f32 0.0, %v2639
      %v2641 = vpop.f32.mrb[0].mxu0
      %2642 = vmatprep.mubr.f32.mxu0 0.0
      %2643 = vmatmul.mubr.f32.gmra.mrb[0].mxu0 %v2487
      %v2644 = vpop.f32.mrb[0].mxu0
      %v2645 = vadd.f32 0.0, %v2644
      %v2646 = vpop.f32.mrb[0].mxu0
      %2647 = vmatprep.mubr.f32.mxu0 0.0
      %2648 = vmatmul.mubr.f32.gmra.mrb[0].mxu0 %v2489
      %v2649 = vpop.f32.mrb[0].mxu0
      %v2650 = vadd.f32 0.0, %v2649
      %v2651 = vpop.f32.mrb[0].mxu0
      %2652 = vmatprep.mubr.f32.mxu0 0.0
      %2653 = vmatmul.mubr.f32.gmra.mrb[0].mxu0 %v2491
      %v2654 = vpop.f32.mrb[0].mxu0
      %v2655 = vadd.f32 0.0, %v2654
      %v2656 = vpop.f32.mrb[0].mxu0
      %2657 = vmatprep.mubr.f32.mxu0 0.0
      %2658 = vmatmul.mubr.f32.gmra.mrb[0].mxu0 %v2493
      %v2659 = vpop.f32.mrb[0].mxu0
      %v2660 = vadd.f32 0.0, %v2659
      %v2661 = vpop.f32.mrb[0].mxu0
      %2662 = vmatprep.mubr.f32.mxu0 0.0
      %2663 = vmatmul.mubr.f32.gmra.mrb[0].mxu0 %v2495
      %v2664 = vpop.f32.mrb[0].mxu0
      %v2665 = vadd.f32 0.0, %v2664
      %v2666 = vpop.f32.mrb[0].mxu0
      %2667 = vmatprep.mubr.f32.mxu0 0.0
      %2668 = vmatmul.mubr.f32.gmra.mrb[0].mxu0 %v2497
      %v2669 = vpop.f32.mrb[0].mxu0
      %v2670 = vadd.f32 0.0, %v2669
      %v2671 = vpop.f32.mrb[0].mxu0
      %2672 = vmatprep.mubr.f32.mxu0 0.0
      %2673 = vmatmul.mubr.f32.gmra.mrb[0].mxu0 %v2499
      %v2674 = vpop.f32.mrb[0].mxu0
      %v2675 = vadd.f32 0.0, %v2674
      %v2676 = vpop.f32.mrb[0].mxu0
      %2677 = vmatprep.mubr.f32.mxu0 0.0
      %2678 = vmatmul.mubr.f32.gmra.mrb[0].mxu0 %v2501
      %v2679 = vpop.f32.mrb[0].mxu0
      %v2680 = vadd.f32 0.0, %v2679
      %v2681 = vpop.f32.mrb[0].mxu0
      %2682 = vmatprep.mubr.f32.mxu0 0.0
      %2683 = vmatmul.mubr.f32.gmra.mrb[0].mxu0 %v2503
      %v2684 = vpop.f32.mrb[0].mxu0
      %v2685 = vadd.f32 0.0, %v2684
      %v2686 = vpop.f32.mrb[0].mxu0
      %2687 = vmatprep.mubr.f32.mxu0 0.0
      %2688 = vmatmul.mubr.f32.gmra.mrb[0].mxu0 %v2505
      %v2689 = vpop.f32.mrb[0].mxu0
      %v2690 = vadd.f32 0.0, %v2689
      %v2691 = vpop.f32.mrb[0].mxu0
      %2692 = vmatprep.mubr.f32.mxu0 0.0
      %2693 = vmatmul.mubr.f32.gmra.mrb[0].mxu0 %v2507
      %v2694 = vpop.f32.mrb[0].mxu0
      %v2695 = vadd.f32 0.0, %v2694
      %v2696 = vpop.f32.mrb[0].mxu0
      %2697 = vmatprep.mubr.f32.mxu0 0.0
      %2698 = vmatmul.mubr.f32.gmra.mrb[0].mxu0 %v2509
      %v2699 = vpop.f32.mrb[0].mxu0
      %v2700 = vadd.f32 0.0, %v2699
      %v2701 = vpop.f32.mrb[0].mxu0
      %2702 = vmatprep.mubr.f32.mxu0 0.0
      %2703 = vmatmul.mubr.f32.gmra.mrb[0].mxu0 %v2511
      %v2704 = vpop.f32.mrb[0].mxu0
      %v2705 = vadd.f32 0.0, %v2704
      %v2706 = vpop.f32.mrb[0].mxu0
      %2707 = vmatprep.mubr.f32.mxu0 0.0
      %2708 = vmatmul.mubr.f32.gmra.mrb[0].mxu0 %v2513
      %v2709 = vpop.f32.mrb[0].mxu0
      %v2710 = vadd.f32 0.0, %v2709
      %v2711 = vpop.f32.mrb[0].mxu0
      %2712 = vmatprep.mubr.f32.mxu0 0.0
      %2713 = vmatmul.mubr.f32.gmra.mrb[0].mxu0 %v2515
      %v2714 = vpop.f32.mrb[0].mxu0
      %v2715 = vadd.f32 0.0, %v2714
      %v2716 = vpop.f32.mrb[0].mxu0
      %2717 = vmatprep.mubr.f32.mxu0 0.0
      %2718 = vmatmul.mubr.f32.gmra.mrb[0].mxu0 %v2517
      %v2719 = vpop.f32.mrb[0].mxu0
      %v2720 = vadd.f32 0.0, %v2719
      %v2721 = vpop.f32.mrb[0].mxu0
      %2722 = vmatprep.mubr.f32.mxu0 0.0
      %2723 = vmatmul.mubr.f32.gmra.mrb[0].mxu0 %v2519
      %v2724 = vpop.f32.mrb[0].mxu0
      %v2725 = vadd.f32 0.0, %v2724
      %v2726 = vpop.f32.mrb[0].mxu0
      %2727 = vmatprep.mubr.f32.mxu0 0.0
      %2728 = vmatmul.mubr.f32.gmra.mrb[0].mxu0 %v2521
      %v2729 = vpop.f32.mrb[0].mxu0
      %v2730 = vadd.f32 0.0, %v2729
      %v2731 = vpop.f32.mrb[0].mxu0
      %2732 = vmatprep.mubr.f32.mxu0 0.0
      %2733 = vmatmul.mubr.f32.gmra.mrb[0].mxu0 %v2523
      %v2734 = vpop.f32.mrb[0].mxu0
      %v2735 = vadd.f32 0.0, %v2734
      %v2736 = vpop.f32.mrb[0].mxu0
      %2737 = vmatprep.mubr.f32.mxu0 0.0
      %2738 = vmatmul.mubr.f32.gmra.mrb[0].mxu0 %v2525
      %v2739 = vpop.f32.mrb[0].mxu0
      %v2740 = vadd.f32 0.0, %v2739
      %v2741 = vpop.f32.mrb[0].mxu0
      %2742 = vmatprep.mubr.f32.mxu0 0.0
      %2743 = vmatmul.mubr.f32.gmra.mrb[0].mxu0 %v2527
      %v2744 = vpop.f32.mrb[0].mxu0
      %v2745 = vadd.f32 0.0, %v2744
      %v2746 = vpop.f32.mrb[0].mxu0
      %2747 = vmatprep.mubr.f32.mxu0 0.0
      %2748 = vmatmul.mubr.f32.gmra.mrb[0].mxu0 %v2529
      %v2749 = vpop.f32.mrb[0].mxu0
      %v2750 = vadd.f32 0.0, %v2749
      %v2751 = vpop.f32.mrb[0].mxu0
      %2752 = vmatprep.mubr.f32.mxu0 0.0
      %2753 = vmatmul.mubr.f32.gmra.mrb[0].mxu0 %v2531
      %v2754 = vpop.f32.mrb[0].mxu0
      %v2755 = vadd.f32 0.0, %v2754
      %v2756 = vpop.f32.mrb[0].mxu0
      %2757 = vdwg.mxu0
      %v2758 = vadd.f32 %v2311, %v2600
      %v2759 = vadd.f32 %v2316, %v2605
      %v2760 = vadd.f32 %v2321, %v2610
      %v2761 = vadd.f32 %v2326, %v2615
      %v2762 = vadd.f32 %v2331, %v2620
      %v2763 = vadd.f32 %v2336, %v2625
      %v2764 = vadd.f32 %v2341, %v2630
      %v2765 = vadd.f32 %v2346, %v2635
      %v2766 = vadd.f32 %v2351, %v2640
      %v2767 = vadd.f32 %v2356, %v2645
      %v2768 = vadd.f32 %v2361, %v2650
      %v2769 = vadd.f32 %v2366, %v2655
      %v2770 = vadd.f32 %v2371, %v2660
      %v2771 = vadd.f32 %v2376, %v2665
      %v2772 = vadd.f32 %v2381, %v2670
      %v2773 = vadd.f32 %v2386, %v2675
      %v2774 = vadd.f32 %v2391, %v2680
      %v2775 = vadd.f32 %v2396, %v2685
      %v2776 = vadd.f32 %v2401, %v2690
      %v2777 = vadd.f32 %v2406, %v2695
      %v2778 = vadd.f32 %v2411, %v2700
      %v2779 = vadd.f32 %v2416, %v2705
      %v2780 = vadd.f32 %v2421, %v2710
      %v2781 = vadd.f32 %v2426, %v2715
      %v2782 = vadd.f32 %v2431, %v2720
      %v2783 = vadd.f32 %v2436, %v2725
      %v2784 = vadd.f32 %v2441, %v2730
      %v2785 = vadd.f32 %v2446, %v2735
      %v2786 = vadd.f32 %v2451, %v2740
      %v2787 = vadd.f32 %v2456, %v2745
      %v2788 = vadd.f32 %v2461, %v2750
      %v2789 = vadd.f32 %v2466, %v2755
      %2790 = vmatprep.subr.mxu0 0.0
      %2791 = vmatpush1.msra.mxu0 %v1819
      %2792 = vmatprep.subr.mxu0 0.0
      %2793 = vmatpush1.msra.mxu0 %v1820
      %2794 = vmatprep.subr.mxu0 0.0
      %2795 = vmatpush1.msra.mxu0 %v1821
      %2796 = vmatprep.subr.mxu0 0.0
      %2797 = vmatpush1.msra.mxu0 %v1822
      %2798 = vmatprep.subr.mxu0 0.0
      %2799 = vmatpush1.msra.mxu0 0.0
      %2800 = vmatprep.subr.mxu0 0.0
      %2801 = vmatpush1.msra.mxu0 0.0
      %2802 = vmatprep.subr.mxu0 0.0
      %2803 = vmatpush1.msra.mxu0 0.0
      %2804 = vmatprep.subr.mxu0 0.0
      %2805 = vmatpush1.msra.mxu0 0.0
      %2806 = vmatprep.subr.mxu0 0.0
      %2807 = vmatpush1.msra.mxu0 0.0
      %2808 = vmatprep.subr.mxu0 0.0
      %2809 = vmatpush1.msra.mxu0 0.0
      %2810 = vmatprep.subr.mxu0 0.0
      %2811 = vmatpush1.msra.mxu0 0.0
      %2812 = vmatprep.subr.mxu0 0.0
      %2813 = vmatpush1.msra.mxu0 0.0
      %2814 = vmatprep.subr.mxu0 0.0
      %2815 = vmatpush1.msra.mxu0 0.0
      %2816 = vmatprep.subr.mxu0 0.0
      %2817 = vmatpush1.msra.mxu0 0.0
      %2818 = vmatprep.subr.mxu0 0.0
      %2819 = vmatpush1.msra.mxu0 0.0
      %2820 = vmatprep.subr.mxu0 0.0
      %2821 = vmatpush1.msra.mxu0 0.0
      %2822 = vmatprep.subr.mxu0 0.0
      %2823 = vmatpush1.msra.mxu0 0.0
      %2824 = vmatprep.subr.mxu0 0.0
      %2825 = vmatpush1.msra.mxu0 0.0
      %2826 = vmatprep.subr.mxu0 0.0
      %2827 = vmatpush1.msra.mxu0 0.0
      %2828 = vmatprep.subr.mxu0 0.0
      %2829 = vmatpush1.msra.mxu0 0.0
      %2830 = vmatprep.subr.mxu0 0.0
      %2831 = vmatpush1.msra.mxu0 0.0
      %2832 = vmatprep.subr.mxu0 0.0
      %2833 = vmatpush1.msra.mxu0 0.0
      %2834 = vmatprep.subr.mxu0 0.0
      %2835 = vmatpush1.msra.mxu0 0.0
      %2836 = vmatprep.subr.mxu0 0.0
      %2837 = vmatpush1.msra.mxu0 0.0
      %2838 = vmatprep.subr.mxu0 0.0
      %2839 = vmatpush1.msra.mxu0 0.0
      %2840 = vmatprep.subr.mxu0 0.0
      %2841 = vmatpush1.msra.mxu0 0.0
      %2842 = vmatprep.subr.mxu0 0.0
      %2843 = vmatpush1.msra.mxu0 0.0
      %2844 = vmatprep.subr.mxu0 0.0
      %2845 = vmatpush1.msra.mxu0 0.0
      %2846 = vmatprep.subr.mxu0 0.0
      %2847 = vmatpush1.msra.mxu0 0.0
      %2848 = vmatprep.subr.mxu0 0.0
      %2849 = vmatpush1.msra.mxu0 0.0
      %2850 = vmatprep.subr.mxu0 0.0
      %2851 = vmatpush1.msra.mxu0 0.0
      %2852 = vmatprep.subr.mxu0 0.0
      %2853 = vmatpush1.msra.mxu0 0.0
      %2854 = vmatprep.mubr.f32.mxu0 0.0
      %2855 = vmatmul.mubr.f32.gmra.mrb[0].mxu0 %v2469
      %v2856 = vpop.f32.mrb[0].mxu0
      %v2857 = vadd.f32 0.0, %v2856
      %v2858 = vpop.f32.mrb[0].mxu0
      %2859 = vmatprep.mubr.f32.mxu0 0.0
      %2860 = vmatmul.mubr.f32.gmra.mrb[0].mxu0 %v2471
      %v2861 = vpop.f32.mrb[0].mxu0
      %v2862 = vadd.f32 0.0, %v2861
      %v2863 = vpop.f32.mrb[0].mxu0
      %2864 = vmatprep.mubr.f32.mxu0 0.0
      %2865 = vmatmul.mubr.f32.gmra.mrb[0].mxu0 %v2473
      %v2866 = vpop.f32.mrb[0].mxu0
      %v2867 = vadd.f32 0.0, %v2866
      %v2868 = vpop.f32.mrb[0].mxu0
      %2869 = vmatprep.mubr.f32.mxu0 0.0
      %2870 = vmatmul.mubr.f32.gmra.mrb[0].mxu0 %v2475
      %v2871 = vpop.f32.mrb[0].mxu0
      %v2872 = vadd.f32 0.0, %v2871
      %v2873 = vpop.f32.mrb[0].mxu0
      %2874 = vmatprep.mubr.f32.mxu0 0.0
      %2875 = vmatmul.mubr.f32.gmra.mrb[0].mxu0 %v2477
      %v2876 = vpop.f32.mrb[0].mxu0
      %v2877 = vadd.f32 0.0, %v2876
      %v2878 = vpop.f32.mrb[0].mxu0
      %2879 = vmatprep.mubr.f32.mxu0 0.0
      %2880 = vmatmul.mubr.f32.gmra.mrb[0].mxu0 %v2479
      %v2881 = vpop.f32.mrb[0].mxu0
      %v2882 = vadd.f32 0.0, %v2881
      %v2883 = vpop.f32.mrb[0].mxu0
      %2884 = vmatprep.mubr.f32.mxu0 0.0
      %2885 = vmatmul.mubr.f32.gmra.mrb[0].mxu0 %v2481
      %v2886 = vpop.f32.mrb[0].mxu0
      %v2887 = vadd.f32 0.0, %v2886
      %v2888 = vpop.f32.mrb[0].mxu0
      %2889 = vmatprep.mubr.f32.mxu0 0.0
      %2890 = vmatmul.mubr.f32.gmra.mrb[0].mxu0 %v2483
      %v2891 = vpop.f32.mrb[0].mxu0
      %v2892 = vadd.f32 0.0, %v2891
      %v2893 = vpop.f32.mrb[0].mxu0
      %2894 = vmatprep.mubr.f32.mxu0 0.0
      %2895 = vmatmul.mubr.f32.gmra.mrb[0].mxu0 %v2485
      %v2896 = vpop.f32.mrb[0].mxu0
      %v2897 = vadd.f32 0.0, %v2896
      %v2898 = vpop.f32.mrb[0].mxu0
      %2899 = vmatprep.mubr.f32.mxu0 0.0
      %2900 = vmatmul.mubr.f32.gmra.mrb[0].mxu0 %v2487
      %v2901 = vpop.f32.mrb[0].mxu0
      %v2902 = vadd.f32 0.0, %v2901
      %v2903 = vpop.f32.mrb[0].mxu0
      %2904 = vmatprep.mubr.f32.mxu0 0.0
      %2905 = vmatmul.mubr.f32.gmra.mrb[0].mxu0 %v2489
      %v2906 = vpop.f32.mrb[0].mxu0
      %v2907 = vadd.f32 0.0, %v2906
      %v2908 = vpop.f32.mrb[0].mxu0
      %2909 = vmatprep.mubr.f32.mxu0 0.0
      %2910 = vmatmul.mubr.f32.gmra.mrb[0].mxu0 %v2491
      %v2911 = vpop.f32.mrb[0].mxu0
      %v2912 = vadd.f32 0.0, %v2911
      %v2913 = vpop.f32.mrb[0].mxu0
      %2914 = vmatprep.mubr.f32.mxu0 0.0
      %2915 = vmatmul.mubr.f32.gmra.mrb[0].mxu0 %v2493
      %v2916 = vpop.f32.mrb[0].mxu0
      %v2917 = vadd.f32 0.0, %v2916
      %v2918 = vpop.f32.mrb[0].mxu0
      %2919 = vmatprep.mubr.f32.mxu0 0.0
      %2920 = vmatmul.mubr.f32.gmra.mrb[0].mxu0 %v2495
      %v2921 = vpop.f32.mrb[0].mxu0
      %v2922 = vadd.f32 0.0, %v2921
      %v2923 = vpop.f32.mrb[0].mxu0
      %2924 = vmatprep.mubr.f32.mxu0 0.0
      %2925 = vmatmul.mubr.f32.gmra.mrb[0].mxu0 %v2497
      %v2926 = vpop.f32.mrb[0].mxu0
      %v2927 = vadd.f32 0.0, %v2926
      %v2928 = vpop.f32.mrb[0].mxu0
      %2929 = vmatprep.mubr.f32.mxu0 0.0
      %2930 = vmatmul.mubr.f32.gmra.mrb[0].mxu0 %v2499
      %v2931 = vpop.f32.mrb[0].mxu0
      %v2932 = vadd.f32 0.0, %v2931
      %v2933 = vpop.f32.mrb[0].mxu0
      %2934 = vmatprep.mubr.f32.mxu0 0.0
      %2935 = vmatmul.mubr.f32.gmra.mrb[0].mxu0 %v2501
      %v2936 = vpop.f32.mrb[0].mxu0
      %v2937 = vadd.f32 0.0, %v2936
      %v2938 = vpop.f32.mrb[0].mxu0
      %2939 = vmatprep.mubr.f32.mxu0 0.0
      %2940 = vmatmul.mubr.f32.gmra.mrb[0].mxu0 %v2503
      %v2941 = vpop.f32.mrb[0].mxu0
      %v2942 = vadd.f32 0.0, %v2941
      %v2943 = vpop.f32.mrb[0].mxu0
      %2944 = vmatprep.mubr.f32.mxu0 0.0
      %2945 = vmatmul.mubr.f32.gmra.mrb[0].mxu0 %v2505
      %v2946 = vpop.f32.mrb[0].mxu0
      %v2947 = vadd.f32 0.0, %v2946
      %v2948 = vpop.f32.mrb[0].mxu0
      %2949 = vmatprep.mubr.f32.mxu0 0.0
      %2950 = vmatmul.mubr.f32.gmra.mrb[0].mxu0 %v2507
      %v2951 = vpop.f32.mrb[0].mxu0
      %v2952 = vadd.f32 0.0, %v2951
      %v2953 = vpop.f32.mrb[0].mxu0
      %2954 = vmatprep.mubr.f32.mxu0 0.0
      %2955 = vmatmul.mubr.f32.gmra.mrb[0].mxu0 %v2509
      %v2956 = vpop.f32.mrb[0].mxu0
      %v2957 = vadd.f32 0.0, %v2956
      %v2958 = vpop.f32.mrb[0].mxu0
      %2959 = vmatprep.mubr.f32.mxu0 0.0
      %2960 = vmatmul.mubr.f32.gmra.mrb[0].mxu0 %v2511
      %v2961 = vpop.f32.mrb[0].mxu0
      %v2962 = vadd.f32 0.0, %v2961
      %v2963 = vpop.f32.mrb[0].mxu0
      %2964 = vmatprep.mubr.f32.mxu0 0.0
      %2965 = vmatmul.mubr.f32.gmra.mrb[0].mxu0 %v2513
      %v2966 = vpop.f32.mrb[0].mxu0
      %v2967 = vadd.f32 0.0, %v2966
      %v2968 = vpop.f32.mrb[0].mxu0
      %2969 = vmatprep.mubr.f32.mxu0 0.0
      %2970 = vmatmul.mubr.f32.gmra.mrb[0].mxu0 %v2515
      %v2971 = vpop.f32.mrb[0].mxu0
      %v2972 = vadd.f32 0.0, %v2971
      %v2973 = vpop.f32.mrb[0].mxu0
      %2974 = vmatprep.mubr.f32.mxu0 0.0
      %2975 = vmatmul.mubr.f32.gmra.mrb[0].mxu0 %v2517
      %v2976 = vpop.f32.mrb[0].mxu0
      %v2977 = vadd.f32 0.0, %v2976
      %v2978 = vpop.f32.mrb[0].mxu0
      %2979 = vmatprep.mubr.f32.mxu0 0.0
      %2980 = vmatmul.mubr.f32.gmra.mrb[0].mxu0 %v2519
      %v2981 = vpop.f32.mrb[0].mxu0
      %v2982 = vadd.f32 0.0, %v2981
      %v2983 = vpop.f32.mrb[0].mxu0
      %2984 = vmatprep.mubr.f32.mxu0 0.0
      %2985 = vmatmul.mubr.f32.gmra.mrb[0].mxu0 %v2521
      %v2986 = vpop.f32.mrb[0].mxu0
      %v2987 = vadd.f32 0.0, %v2986
      %v2988 = vpop.f32.mrb[0].mxu0
      %2989 = vmatprep.mubr.f32.mxu0 0.0
      %2990 = vmatmul.mubr.f32.gmra.mrb[0].mxu0 %v2523
      %v2991 = vpop.f32.mrb[0].mxu0
      %v2992 = vadd.f32 0.0, %v2991
      %v2993 = vpop.f32.mrb[0].mxu0
      %2994 = vmatprep.mubr.f32.mxu0 0.0
      %2995 = vmatmul.mubr.f32.gmra.mrb[0].mxu0 %v2525
      %v2996 = vpop.f32.mrb[0].mxu0
      %v2997 = vadd.f32 0.0, %v2996
      %v2998 = vpop.f32.mrb[0].mxu0
      %2999 = vmatprep.mubr.f32.mxu0 0.0
      %3000 = vmatmul.mubr.f32.gmra.mrb[0].mxu0 %v2527
      %v3001 = vpop.f32.mrb[0].mxu0
      %v3002 = vadd.f32 0.0, %v3001
      %v3003 = vpop.f32.mrb[0].mxu0
      %3004 = vmatprep.mubr.f32.mxu0 0.0
      %3005 = vmatmul.mubr.f32.gmra.mrb[0].mxu0 %v2529
      %v3006 = vpop.f32.mrb[0].mxu0
      %v3007 = vadd.f32 0.0, %v3006
      %v3008 = vpop.f32.mrb[0].mxu0
      %3009 = vmatprep.mubr.f32.mxu0 0.0
      %3010 = vmatmul.mubr.f32.gmra.mrb[0].mxu0 %v2531
      %v3011 = vpop.f32.mrb[0].mxu0
      %v3012 = vadd.f32 0.0, %v3011
      %v3013 = vpop.f32.mrb[0].mxu0
      %3014 = vdwg.mxu0
      %3015 = vmatprep.subr.mxu0 0.0
      %3016 = vmatpush1.msra.mxu0 %v1815
      %3017 = vmatprep.subr.mxu0 0.0
      %3018 = vmatpush1.msra.mxu0 %v1816
      %3019 = vmatprep.subr.mxu0 0.0
      %3020 = vmatpush1.msra.mxu0 %v1817
      %3021 = vmatprep.subr.mxu0 0.0
      %3022 = vmatpush1.msra.mxu0 %v1818
      %3023 = vmatprep.subr.mxu0 0.0
      %3024 = vmatpush1.msra.mxu0 0.0
      %3025 = vmatprep.subr.mxu0 0.0
      %3026 = vmatpush1.msra.mxu0 0.0
      %3027 = vmatprep.subr.mxu0 0.0
      %3028 = vmatpush1.msra.mxu0 0.0
      %3029 = vmatprep.subr.mxu0 0.0
      %3030 = vmatpush1.msra.mxu0 0.0
      %3031 = vmatprep.subr.mxu0 0.0
      %3032 = vmatpush1.msra.mxu0 0.0
      %3033 = vmatprep.subr.mxu0 0.0
      %3034 = vmatpush1.msra.mxu0 0.0
      %3035 = vmatprep.subr.mxu0 0.0
      %3036 = vmatpush1.msra.mxu0 0.0
      %3037 = vmatprep.subr.mxu0 0.0
      %3038 = vmatpush1.msra.mxu0 0.0
      %3039 = vmatprep.subr.mxu0 0.0
      %3040 = vmatpush1.msra.mxu0 0.0
      %3041 = vmatprep.subr.mxu0 0.0
      %3042 = vmatpush1.msra.mxu0 0.0
      %3043 = vmatprep.subr.mxu0 0.0
      %3044 = vmatpush1.msra.mxu0 0.0
      %3045 = vmatprep.subr.mxu0 0.0
      %3046 = vmatpush1.msra.mxu0 0.0
      %3047 = vmatprep.subr.mxu0 0.0
      %3048 = vmatpush1.msra.mxu0 0.0
      %3049 = vmatprep.subr.mxu0 0.0
      %3050 = vmatpush1.msra.mxu0 0.0
      %3051 = vmatprep.subr.mxu0 0.0
      %3052 = vmatpush1.msra.mxu0 0.0
      %3053 = vmatprep.subr.mxu0 0.0
      %3054 = vmatpush1.msra.mxu0 0.0
      %3055 = vmatprep.subr.mxu0 0.0
      %3056 = vmatpush1.msra.mxu0 0.0
      %3057 = vmatprep.subr.mxu0 0.0
      %3058 = vmatpush1.msra.mxu0 0.0
      %3059 = vmatprep.subr.mxu0 0.0
      %3060 = vmatpush1.msra.mxu0 0.0
      %3061 = vmatprep.subr.mxu0 0.0
      %3062 = vmatpush1.msra.mxu0 0.0
      %3063 = vmatprep.subr.mxu0 0.0
      %3064 = vmatpush1.msra.mxu0 0.0
      %3065 = vmatprep.subr.mxu0 0.0
      %3066 = vmatpush1.msra.mxu0 0.0
      %3067 = vmatprep.subr.mxu0 0.0
      %3068 = vmatpush1.msra.mxu0 0.0
      %3069 = vmatprep.subr.mxu0 0.0
      %3070 = vmatpush1.msra.mxu0 0.0
      %3071 = vmatprep.subr.mxu0 0.0
      %3072 = vmatpush1.msra.mxu0 0.0
      %3073 = vmatprep.subr.mxu0 0.0
      %3074 = vmatpush1.msra.mxu0 0.0
      %3075 = vmatprep.subr.mxu0 0.0
      %3076 = vmatpush1.msra.mxu0 0.0
      %3077 = vmatprep.subr.mxu0 0.0
      %3078 = vmatpush1.msra.mxu0 0.0
      %3079 = vmatprep.mubr.f32.mxu0 0.0
      %3080 = vmatmul.mubr.f32.gmra.mrb[0].mxu0 %v1828
      %v3081 = vpop.f32.mrb[0].mxu0
      %v3082 = vadd.f32 %v2857, %v3081
      %v3083 = vpop.f32.mrb[0].mxu0
      %3084 = vmatprep.mubr.f32.mxu0 0.0
      %3085 = vmatmul.mubr.f32.gmra.mrb[0].mxu0 %v1831
      %v3086 = vpop.f32.mrb[0].mxu0
      %v3087 = vadd.f32 %v2862, %v3086
      %v3088 = vpop.f32.mrb[0].mxu0
      %3089 = vmatprep.mubr.f32.mxu0 0.0
      %3090 = vmatmul.mubr.f32.gmra.mrb[0].mxu0 %v1834
      %v3091 = vpop.f32.mrb[0].mxu0
      %v3092 = vadd.f32 %v2867, %v3091
      %v3093 = vpop.f32.mrb[0].mxu0
      %3094 = vmatprep.mubr.f32.mxu0 0.0
      %3095 = vmatmul.mubr.f32.gmra.mrb[0].mxu0 %v1837
      %v3096 = vpop.f32.mrb[0].mxu0
      %v3097 = vadd.f32 %v2872, %v3096
      %v3098 = vpop.f32.mrb[0].mxu0
      %3099 = vmatprep.mubr.f32.mxu0 0.0
      %3100 = vmatmul.mubr.f32.gmra.mrb[0].mxu0 %v1840
      %v3101 = vpop.f32.mrb[0].mxu0
      %v3102 = vadd.f32 %v2877, %v3101
      %v3103 = vpop.f32.mrb[0].mxu0
      %3104 = vmatprep.mubr.f32.mxu0 0.0
      %3105 = vmatmul.mubr.f32.gmra.mrb[0].mxu0 %v1843
      %v3106 = vpop.f32.mrb[0].mxu0
      %v3107 = vadd.f32 %v2882, %v3106
      %v3108 = vpop.f32.mrb[0].mxu0
      %3109 = vmatprep.mubr.f32.mxu0 0.0
      %3110 = vmatmul.mubr.f32.gmra.mrb[0].mxu0 %v1846
      %v3111 = vpop.f32.mrb[0].mxu0
      %v3112 = vadd.f32 %v2887, %v3111
      %v3113 = vpop.f32.mrb[0].mxu0
      %3114 = vmatprep.mubr.f32.mxu0 0.0
      %3115 = vmatmul.mubr.f32.gmra.mrb[0].mxu0 %v1849
      %v3116 = vpop.f32.mrb[0].mxu0
      %v3117 = vadd.f32 %v2892, %v3116
      %v3118 = vpop.f32.mrb[0].mxu0
      %3119 = vmatprep.mubr.f32.mxu0 0.0
      %3120 = vmatmul.mubr.f32.gmra.mrb[0].mxu0 %v1852
      %v3121 = vpop.f32.mrb[0].mxu0
      %v3122 = vadd.f32 %v2897, %v3121
      %v3123 = vpop.f32.mrb[0].mxu0
      %3124 = vmatprep.mubr.f32.mxu0 0.0
      %3125 = vmatmul.mubr.f32.gmra.mrb[0].mxu0 %v1855
      %v3126 = vpop.f32.mrb[0].mxu0
      %v3127 = vadd.f32 %v2902, %v3126
      %v3128 = vpop.f32.mrb[0].mxu0
      %3129 = vmatprep.mubr.f32.mxu0 0.0
      %3130 = vmatmul.mubr.f32.gmra.mrb[0].mxu0 %v1858
      %v3131 = vpop.f32.mrb[0].mxu0
      %v3132 = vadd.f32 %v2907, %v3131
      %v3133 = vpop.f32.mrb[0].mxu0
      %3134 = vmatprep.mubr.f32.mxu0 0.0
      %3135 = vmatmul.mubr.f32.gmra.mrb[0].mxu0 %v1861
      %v3136 = vpop.f32.mrb[0].mxu0
      %v3137 = vadd.f32 %v2912, %v3136
      %v3138 = vpop.f32.mrb[0].mxu0
      %3139 = vmatprep.mubr.f32.mxu0 0.0
      %3140 = vmatmul.mubr.f32.gmra.mrb[0].mxu0 %v1864
      %v3141 = vpop.f32.mrb[0].mxu0
      %v3142 = vadd.f32 %v2917, %v3141
      %v3143 = vpop.f32.mrb[0].mxu0
      %3144 = vmatprep.mubr.f32.mxu0 0.0
      %3145 = vmatmul.mubr.f32.gmra.mrb[0].mxu0 %v1867
      %v3146 = vpop.f32.mrb[0].mxu0
      %v3147 = vadd.f32 %v2922, %v3146
      %v3148 = vpop.f32.mrb[0].mxu0
      %3149 = vmatprep.mubr.f32.mxu0 0.0
      %3150 = vmatmul.mubr.f32.gmra.mrb[0].mxu0 %v1870
      %v3151 = vpop.f32.mrb[0].mxu0
      %v3152 = vadd.f32 %v2927, %v3151
      %v3153 = vpop.f32.mrb[0].mxu0
      %3154 = vmatprep.mubr.f32.mxu0 0.0
      %3155 = vmatmul.mubr.f32.gmra.mrb[0].mxu0 %v1873
      %v3156 = vpop.f32.mrb[0].mxu0
      %v3157 = vadd.f32 %v2932, %v3156
      %v3158 = vpop.f32.mrb[0].mxu0
      %3159 = vmatprep.mubr.f32.mxu0 0.0
      %3160 = vmatmul.mubr.f32.gmra.mrb[0].mxu0 %v1876
      %v3161 = vpop.f32.mrb[0].mxu0
      %v3162 = vadd.f32 %v2937, %v3161
      %v3163 = vpop.f32.mrb[0].mxu0
      %3164 = vmatprep.mubr.f32.mxu0 0.0
      %3165 = vmatmul.mubr.f32.gmra.mrb[0].mxu0 %v1879
      %v3166 = vpop.f32.mrb[0].mxu0
      %v3167 = vadd.f32 %v2942, %v3166
      %v3168 = vpop.f32.mrb[0].mxu0
      %3169 = vmatprep.mubr.f32.mxu0 0.0
      %3170 = vmatmul.mubr.f32.gmra.mrb[0].mxu0 %v1882
      %v3171 = vpop.f32.mrb[0].mxu0
      %v3172 = vadd.f32 %v2947, %v3171
      %v3173 = vpop.f32.mrb[0].mxu0
      %3174 = vmatprep.mubr.f32.mxu0 0.0
      %3175 = vmatmul.mubr.f32.gmra.mrb[0].mxu0 %v1885
      %v3176 = vpop.f32.mrb[0].mxu0
      %v3177 = vadd.f32 %v2952, %v3176
      %v3178 = vpop.f32.mrb[0].mxu0
      %3179 = vmatprep.mubr.f32.mxu0 0.0
      %3180 = vmatmul.mubr.f32.gmra.mrb[0].mxu0 %v1888
      %v3181 = vpop.f32.mrb[0].mxu0
      %v3182 = vadd.f32 %v2957, %v3181
      %v3183 = vpop.f32.mrb[0].mxu0
      %3184 = vmatprep.mubr.f32.mxu0 0.0
      %3185 = vmatmul.mubr.f32.gmra.mrb[0].mxu0 %v1891
      %v3186 = vpop.f32.mrb[0].mxu0
      %v3187 = vadd.f32 %v2962, %v3186
      %v3188 = vpop.f32.mrb[0].mxu0
      %3189 = vmatprep.mubr.f32.mxu0 0.0
      %3190 = vmatmul.mubr.f32.gmra.mrb[0].mxu0 %v1894
      %v3191 = vpop.f32.mrb[0].mxu0
      %v3192 = vadd.f32 %v2967, %v3191
      %v3193 = vpop.f32.mrb[0].mxu0
      %3194 = vmatprep.mubr.f32.mxu0 0.0
      %3195 = vmatmul.mubr.f32.gmra.mrb[0].mxu0 %v1897
      %v3196 = vpop.f32.mrb[0].mxu0
      %v3197 = vadd.f32 %v2972, %v3196
      %v3198 = vpop.f32.mrb[0].mxu0
      %3199 = vmatprep.mubr.f32.mxu0 0.0
      %3200 = vmatmul.mubr.f32.gmra.mrb[0].mxu0 %v1900
      %v3201 = vpop.f32.mrb[0].mxu0
      %v3202 = vadd.f32 %v2977, %v3201
      %v3203 = vpop.f32.mrb[0].mxu0
      %3204 = vmatprep.mubr.f32.mxu0 0.0
      %3205 = vmatmul.mubr.f32.gmra.mrb[0].mxu0 %v1903
      %v3206 = vpop.f32.mrb[0].mxu0
      %v3207 = vadd.f32 %v2982, %v3206
      %v3208 = vpop.f32.mrb[0].mxu0
      %3209 = vmatprep.mubr.f32.mxu0 0.0
      %3210 = vmatmul.mubr.f32.gmra.mrb[0].mxu0 %v1906
      %v3211 = vpop.f32.mrb[0].mxu0
      %v3212 = vadd.f32 %v2987, %v3211
      %v3213 = vpop.f32.mrb[0].mxu0
      %3214 = vmatprep.mubr.f32.mxu0 0.0
      %3215 = vmatmul.mubr.f32.gmra.mrb[0].mxu0 %v1909
      %v3216 = vpop.f32.mrb[0].mxu0
      %v3217 = vadd.f32 %v2992, %v3216
      %v3218 = vpop.f32.mrb[0].mxu0
      %3219 = vmatprep.mubr.f32.mxu0 0.0
      %3220 = vmatmul.mubr.f32.gmra.mrb[0].mxu0 %v1912
      %v3221 = vpop.f32.mrb[0].mxu0
      %v3222 = vadd.f32 %v2997, %v3221
      %v3223 = vpop.f32.mrb[0].mxu0
      %3224 = vmatprep.mubr.f32.mxu0 0.0
      %3225 = vmatmul.mubr.f32.gmra.mrb[0].mxu0 %v1915
      %v3226 = vpop.f32.mrb[0].mxu0
      %v3227 = vadd.f32 %v3002, %v3226
      %v3228 = vpop.f32.mrb[0].mxu0
      %3229 = vmatprep.mubr.f32.mxu0 0.0
      %3230 = vmatmul.mubr.f32.gmra.mrb[0].mxu0 %v1918
      %v3231 = vpop.f32.mrb[0].mxu0
      %v3232 = vadd.f32 %v3007, %v3231
      %v3233 = vpop.f32.mrb[0].mxu0
      %3234 = vmatprep.mubr.f32.mxu0 0.0
      %3235 = vmatmul.mubr.f32.gmra.mrb[0].mxu0 %v1921
      %v3236 = vpop.f32.mrb[0].mxu0
      %v3237 = vadd.f32 %v3012, %v3236
      %v3238 = vpop.f32.mrb[0].mxu0
      %3239 = vdwg.mxu0
      %v3241 = vsel %vm264, %v1783, 0
      %v3244 = vsel %vm264, %v1784, 0
      %v3247 = vsel %vm264, %v1785, 0
      %v3250 = vsel %vm264, %v1786, 0
      %v3253 = vsel %vm264, %v1787, 0
      %v3256 = vsel %vm264, %v1788, 0
      %v3259 = vsel %vm264, %v1789, 0
      %v3262 = vsel %vm264, %v1790, 0
      %v3265 = vsel %vm264, %v1791, 0
      %v3268 = vsel %vm264, %v1792, 0
      %v3271 = vsel %vm264, %v1793, 0
      %v3274 = vsel %vm264, %v1794, 0
      %v3277 = vsel %vm264, %v1795, 0
      %v3280 = vsel %vm264, %v1796, 0
      %v3283 = vsel %vm264, %v1797, 0
      %v3286 = vsel %vm264, %v1798, 0
      %v3289 = vsel %vm264, %v1799, 0
      %v3292 = vsel %vm264, %v1800, 0
      %v3295 = vsel %vm264, %v1801, 0
      %v3298 = vsel %vm264, %v1802, 0
      %v3301 = vsel %vm264, %v1803, 0
      %v3304 = vsel %vm264, %v1804, 0
      %v3307 = vsel %vm264, %v1805, 0
      %v3310 = vsel %vm264, %v1806, 0
      %v3313 = vsel %vm264, %v1807, 0
      %v3316 = vsel %vm264, %v1808, 0
      %v3319 = vsel %vm264, %v1809, 0
      %v3322 = vsel %vm264, %v1810, 0
      %v3325 = vsel %vm264, %v1811, 0
      %v3328 = vsel %vm264, %v1812, 0
      %v3331 = vsel %vm264, %v1813, 0
      %v3334 = vsel %vm264, %v1814, 0
      %3336 = vmatprep.subr.mxu0 0.0
      %3337 = vmatpush1.msra.mxu0 %v1823
      %3338 = vmatprep.subr.mxu0 0.0
      %3339 = vmatpush1.msra.mxu0 %v1824
      %3340 = vmatprep.subr.mxu0 0.0
      %3341 = vmatpush1.msra.mxu0 %v1825
      %3342 = vmatprep.subr.mxu0 0.0
      %3343 = vmatpush1.msra.mxu0 %v1826
      %3344 = vmatprep.subr.mxu0 0.0
      %3345 = vmatpush1.msra.mxu0 0.0
      %3346 = vmatprep.subr.mxu0 0.0
      %3347 = vmatpush1.msra.mxu0 0.0
      %3348 = vmatprep.subr.mxu0 0.0
      %3349 = vmatpush1.msra.mxu0 0.0
      %3350 = vmatprep.subr.mxu0 0.0
      %3351 = vmatpush1.msra.mxu0 0.0
      %3352 = vmatprep.subr.mxu0 0.0
      %3353 = vmatpush1.msra.mxu0 0.0
      %3354 = vmatprep.subr.mxu0 0.0
      %3355 = vmatpush1.msra.mxu0 0.0
      %3356 = vmatprep.subr.mxu0 0.0
      %3357 = vmatpush1.msra.mxu0 0.0
      %3358 = vmatprep.subr.mxu0 0.0
      %3359 = vmatpush1.msra.mxu0 0.0
      %3360 = vmatprep.subr.mxu0 0.0
      %3361 = vmatpush1.msra.mxu0 0.0
      %3362 = vmatprep.subr.mxu0 0.0
      %3363 = vmatpush1.msra.mxu0 0.0
      %3364 = vmatprep.subr.mxu0 0.0
      %3365 = vmatpush1.msra.mxu0 0.0
      %3366 = vmatprep.subr.mxu0 0.0
      %3367 = vmatpush1.msra.mxu0 0.0
      %3368 = vmatprep.subr.mxu0 0.0
      %3369 = vmatpush1.msra.mxu0 0.0
      %3370 = vmatprep.subr.mxu0 0.0
      %3371 = vmatpush1.msra.mxu0 0.0
      %3372 = vmatprep.subr.mxu0 0.0
      %3373 = vmatpush1.msra.mxu0 0.0
      %3374 = vmatprep.subr.mxu0 0.0
      %3375 = vmatpush1.msra.mxu0 0.0
      %3376 = vmatprep.subr.mxu0 0.0
      %3377 = vmatpush1.msra.mxu0 0.0
      %3378 = vmatprep.subr.mxu0 0.0
      %3379 = vmatpush1.msra.mxu0 0.0
      %3380 = vmatprep.subr.mxu0 0.0
      %3381 = vmatpush1.msra.mxu0 0.0
      %3382 = vmatprep.subr.mxu0 0.0
      %3383 = vmatpush1.msra.mxu0 0.0
      %3384 = vmatprep.subr.mxu0 0.0
      %3385 = vmatpush1.msra.mxu0 0.0
      %3386 = vmatprep.subr.mxu0 0.0
      %3387 = vmatpush1.msra.mxu0 0.0
      %3388 = vmatprep.subr.mxu0 0.0
      %3389 = vmatpush1.msra.mxu0 0.0
      %3390 = vmatprep.subr.mxu0 0.0
      %3391 = vmatpush1.msra.mxu0 0.0
      %3392 = vmatprep.subr.mxu0 0.0
      %3393 = vmatpush1.msra.mxu0 0.0
      %3394 = vmatprep.subr.mxu0 0.0
      %3395 = vmatpush1.msra.mxu0 0.0
      %3396 = vmatprep.subr.mxu0 0.0
      %3397 = vmatpush1.msra.mxu0 0.0
      %3398 = vmatprep.subr.mxu0 0.0
      %3399 = vmatpush1.msra.mxu0 0.0
      %3400 = vmatprep.mubr.f32.mxu0 0.0
      %3401 = vmatmul.mubr.f32.gmra.mrb[0].mxu0 %v3241
      %v3402 = vpop.f32.mrb[0].mxu0
      %v3403 = vadd.f32 0.0, %v3402
      %v3404 = vpop.f32.mrb[0].mxu0
      %3405 = vmatprep.mubr.f32.mxu0 0.0
      %3406 = vmatmul.mubr.f32.gmra.mrb[0].mxu0 %v3244
      %v3407 = vpop.f32.mrb[0].mxu0
      %v3408 = vadd.f32 0.0, %v3407
      %v3409 = vpop.f32.mrb[0].mxu0
      %3410 = vmatprep.mubr.f32.mxu0 0.0
      %3411 = vmatmul.mubr.f32.gmra.mrb[0].mxu0 %v3247
      %v3412 = vpop.f32.mrb[0].mxu0
      %v3413 = vadd.f32 0.0, %v3412
      %v3414 = vpop.f32.mrb[0].mxu0
      %3415 = vmatprep.mubr.f32.mxu0 0.0
      %3416 = vmatmul.mubr.f32.gmra.mrb[0].mxu0 %v3250
      %v3417 = vpop.f32.mrb[0].mxu0
      %v3418 = vadd.f32 0.0, %v3417
      %v3419 = vpop.f32.mrb[0].mxu0
      %3420 = vmatprep.mubr.f32.mxu0 0.0
      %3421 = vmatmul.mubr.f32.gmra.mrb[0].mxu0 %v3253
      %v3422 = vpop.f32.mrb[0].mxu0
      %v3423 = vadd.f32 0.0, %v3422
      %v3424 = vpop.f32.mrb[0].mxu0
      %3425 = vmatprep.mubr.f32.mxu0 0.0
      %3426 = vmatmul.mubr.f32.gmra.mrb[0].mxu0 %v3256
      %v3427 = vpop.f32.mrb[0].mxu0
      %v3428 = vadd.f32 0.0, %v3427
      %v3429 = vpop.f32.mrb[0].mxu0
      %3430 = vmatprep.mubr.f32.mxu0 0.0
      %3431 = vmatmul.mubr.f32.gmra.mrb[0].mxu0 %v3259
      %v3432 = vpop.f32.mrb[0].mxu0
      %v3433 = vadd.f32 0.0, %v3432
      %v3434 = vpop.f32.mrb[0].mxu0
      %3435 = vmatprep.mubr.f32.mxu0 0.0
      %3436 = vmatmul.mubr.f32.gmra.mrb[0].mxu0 %v3262
      %v3437 = vpop.f32.mrb[0].mxu0
      %v3438 = vadd.f32 0.0, %v3437
      %v3439 = vpop.f32.mrb[0].mxu0
      %3440 = vmatprep.mubr.f32.mxu0 0.0
      %3441 = vmatmul.mubr.f32.gmra.mrb[0].mxu0 %v3265
      %v3442 = vpop.f32.mrb[0].mxu0
      %v3443 = vadd.f32 0.0, %v3442
      %v3444 = vpop.f32.mrb[0].mxu0
      %3445 = vmatprep.mubr.f32.mxu0 0.0
      %3446 = vmatmul.mubr.f32.gmra.mrb[0].mxu0 %v3268
      %v3447 = vpop.f32.mrb[0].mxu0
      %v3448 = vadd.f32 0.0, %v3447
      %v3449 = vpop.f32.mrb[0].mxu0
      %3450 = vmatprep.mubr.f32.mxu0 0.0
      %3451 = vmatmul.mubr.f32.gmra.mrb[0].mxu0 %v3271
      %v3452 = vpop.f32.mrb[0].mxu0
      %v3453 = vadd.f32 0.0, %v3452
      %v3454 = vpop.f32.mrb[0].mxu0
      %3455 = vmatprep.mubr.f32.mxu0 0.0
      %3456 = vmatmul.mubr.f32.gmra.mrb[0].mxu0 %v3274
      %v3457 = vpop.f32.mrb[0].mxu0
      %v3458 = vadd.f32 0.0, %v3457
      %v3459 = vpop.f32.mrb[0].mxu0
      %3460 = vmatprep.mubr.f32.mxu0 0.0
      %3461 = vmatmul.mubr.f32.gmra.mrb[0].mxu0 %v3277
      %v3462 = vpop.f32.mrb[0].mxu0
      %v3463 = vadd.f32 0.0, %v3462
      %v3464 = vpop.f32.mrb[0].mxu0
      %3465 = vmatprep.mubr.f32.mxu0 0.0
      %3466 = vmatmul.mubr.f32.gmra.mrb[0].mxu0 %v3280
      %v3467 = vpop.f32.mrb[0].mxu0
      %v3468 = vadd.f32 0.0, %v3467
      %v3469 = vpop.f32.mrb[0].mxu0
      %3470 = vmatprep.mubr.f32.mxu0 0.0
      %3471 = vmatmul.mubr.f32.gmra.mrb[0].mxu0 %v3283
      %v3472 = vpop.f32.mrb[0].mxu0
      %v3473 = vadd.f32 0.0, %v3472
      %v3474 = vpop.f32.mrb[0].mxu0
      %3475 = vmatprep.mubr.f32.mxu0 0.0
      %3476 = vmatmul.mubr.f32.gmra.mrb[0].mxu0 %v3286
      %v3477 = vpop.f32.mrb[0].mxu0
      %v3478 = vadd.f32 0.0, %v3477
      %v3479 = vpop.f32.mrb[0].mxu0
      %3480 = vmatprep.mubr.f32.mxu0 0.0
      %3481 = vmatmul.mubr.f32.gmra.mrb[0].mxu0 %v3289
      %v3482 = vpop.f32.mrb[0].mxu0
      %v3483 = vadd.f32 0.0, %v3482
      %v3484 = vpop.f32.mrb[0].mxu0
      %3485 = vmatprep.mubr.f32.mxu0 0.0
      %3486 = vmatmul.mubr.f32.gmra.mrb[0].mxu0 %v3292
      %v3487 = vpop.f32.mrb[0].mxu0
      %v3488 = vadd.f32 0.0, %v3487
      %v3489 = vpop.f32.mrb[0].mxu0
      %3490 = vmatprep.mubr.f32.mxu0 0.0
      %3491 = vmatmul.mubr.f32.gmra.mrb[0].mxu0 %v3295
      %v3492 = vpop.f32.mrb[0].mxu0
      %v3493 = vadd.f32 0.0, %v3492
      %v3494 = vpop.f32.mrb[0].mxu0
      %3495 = vmatprep.mubr.f32.mxu0 0.0
      %3496 = vmatmul.mubr.f32.gmra.mrb[0].mxu0 %v3298
      %v3497 = vpop.f32.mrb[0].mxu0
      %v3498 = vadd.f32 0.0, %v3497
      %v3499 = vpop.f32.mrb[0].mxu0
      %3500 = vmatprep.mubr.f32.mxu0 0.0
      %3501 = vmatmul.mubr.f32.gmra.mrb[0].mxu0 %v3301
      %v3502 = vpop.f32.mrb[0].mxu0
      %v3503 = vadd.f32 0.0, %v3502
      %v3504 = vpop.f32.mrb[0].mxu0
      %3505 = vmatprep.mubr.f32.mxu0 0.0
      %3506 = vmatmul.mubr.f32.gmra.mrb[0].mxu0 %v3304
      %v3507 = vpop.f32.mrb[0].mxu0
      %v3508 = vadd.f32 0.0, %v3507
      %v3509 = vpop.f32.mrb[0].mxu0
      %3510 = vmatprep.mubr.f32.mxu0 0.0
      %3511 = vmatmul.mubr.f32.gmra.mrb[0].mxu0 %v3307
      %v3512 = vpop.f32.mrb[0].mxu0
      %v3513 = vadd.f32 0.0, %v3512
      %v3514 = vpop.f32.mrb[0].mxu0
      %3515 = vmatprep.mubr.f32.mxu0 0.0
      %3516 = vmatmul.mubr.f32.gmra.mrb[0].mxu0 %v3310
      %v3517 = vpop.f32.mrb[0].mxu0
      %v3518 = vadd.f32 0.0, %v3517
      %v3519 = vpop.f32.mrb[0].mxu0
      %3520 = vmatprep.mubr.f32.mxu0 0.0
      %3521 = vmatmul.mubr.f32.gmra.mrb[0].mxu0 %v3313
      %v3522 = vpop.f32.mrb[0].mxu0
      %v3523 = vadd.f32 0.0, %v3522
      %v3524 = vpop.f32.mrb[0].mxu0
      %3525 = vmatprep.mubr.f32.mxu0 0.0
      %3526 = vmatmul.mubr.f32.gmra.mrb[0].mxu0 %v3316
      %v3527 = vpop.f32.mrb[0].mxu0
      %v3528 = vadd.f32 0.0, %v3527
      %v3529 = vpop.f32.mrb[0].mxu0
      %3530 = vmatprep.mubr.f32.mxu0 0.0
      %3531 = vmatmul.mubr.f32.gmra.mrb[0].mxu0 %v3319
      %v3532 = vpop.f32.mrb[0].mxu0
      %v3533 = vadd.f32 0.0, %v3532
      %v3534 = vpop.f32.mrb[0].mxu0
      %3535 = vmatprep.mubr.f32.mxu0 0.0
      %3536 = vmatmul.mubr.f32.gmra.mrb[0].mxu0 %v3322
      %v3537 = vpop.f32.mrb[0].mxu0
      %v3538 = vadd.f32 0.0, %v3537
      %v3539 = vpop.f32.mrb[0].mxu0
      %3540 = vmatprep.mubr.f32.mxu0 0.0
      %3541 = vmatmul.mubr.f32.gmra.mrb[0].mxu0 %v3325
      %v3542 = vpop.f32.mrb[0].mxu0
      %v3543 = vadd.f32 0.0, %v3542
      %v3544 = vpop.f32.mrb[0].mxu0
      %3545 = vmatprep.mubr.f32.mxu0 0.0
      %3546 = vmatmul.mubr.f32.gmra.mrb[0].mxu0 %v3328
      %v3547 = vpop.f32.mrb[0].mxu0
      %v3548 = vadd.f32 0.0, %v3547
      %v3549 = vpop.f32.mrb[0].mxu0
      %3550 = vmatprep.mubr.f32.mxu0 0.0
      %3551 = vmatmul.mubr.f32.gmra.mrb[0].mxu0 %v3331
      %v3552 = vpop.f32.mrb[0].mxu0
      %v3553 = vadd.f32 0.0, %v3552
      %v3554 = vpop.f32.mrb[0].mxu0
      %3555 = vmatprep.mubr.f32.mxu0 0.0
      %3556 = vmatmul.mubr.f32.gmra.mrb[0].mxu0 %v3334
      %v3557 = vpop.f32.mrb[0].mxu0
      %v3558 = vadd.f32 0.0, %v3557
      %v3559 = vpop.f32.mrb[0].mxu0
      %3560 = vdwg.mxu0
      %v3561 = vadd.f32 %v3082, %v3403
      %v3562 = vadd.f32 %v3087, %v3408
      %v3563 = vadd.f32 %v3092, %v3413
      %v3564 = vadd.f32 %v3097, %v3418
      %v3565 = vadd.f32 %v3102, %v3423
      %v3566 = vadd.f32 %v3107, %v3428
      %v3567 = vadd.f32 %v3112, %v3433
      %v3568 = vadd.f32 %v3117, %v3438
      %v3569 = vadd.f32 %v3122, %v3443
      %v3570 = vadd.f32 %v3127, %v3448
      %v3571 = vadd.f32 %v3132, %v3453
      %v3572 = vadd.f32 %v3137, %v3458
      %v3573 = vadd.f32 %v3142, %v3463
      %v3574 = vadd.f32 %v3147, %v3468
      %v3575 = vadd.f32 %v3152, %v3473
      %v3576 = vadd.f32 %v3157, %v3478
      %v3577 = vadd.f32 %v3162, %v3483
      %v3578 = vadd.f32 %v3167, %v3488
      %v3579 = vadd.f32 %v3172, %v3493
      %v3580 = vadd.f32 %v3177, %v3498
      %v3581 = vadd.f32 %v3182, %v3503
      %v3582 = vadd.f32 %v3187, %v3508
      %v3583 = vadd.f32 %v3192, %v3513
      %v3584 = vadd.f32 %v3197, %v3518
      %v3585 = vadd.f32 %v3202, %v3523
      %v3586 = vadd.f32 %v3207, %v3528
      %v3587 = vadd.f32 %v3212, %v3533
      %v3588 = vadd.f32 %v3217, %v3538
      %v3589 = vadd.f32 %v3222, %v3543
      %v3590 = vadd.f32 %v3227, %v3548
      %v3591 = vadd.f32 %v3232, %v3553
      %v3592 = vadd.f32 %v3237, %v3558
      %v3593 = vmax.f32 %v2758, %v3561
      %v3594 = vmax.f32 %v2759, %v3562
      %v3595 = vmax.f32 %v2760, %v3563
      %v3596 = vmax.f32 %v2761, %v3564
      %v3597 = vmax.f32 %v2762, %v3565
      %v3598 = vmax.f32 %v2763, %v3566
      %v3599 = vmax.f32 %v2764, %v3567
      %v3600 = vmax.f32 %v2765, %v3568
      %v3601 = vmax.f32 %v2766, %v3569
      %v3602 = vmax.f32 %v2767, %v3570
      %v3603 = vmax.f32 %v2768, %v3571
      %v3604 = vmax.f32 %v2769, %v3572
      %v3605 = vmax.f32 %v2770, %v3573
      %v3606 = vmax.f32 %v2771, %v3574
      %v3607 = vmax.f32 %v2772, %v3575
      %v3608 = vmax.f32 %v2773, %v3576
      %v3609 = vmax.f32 %v2774, %v3577
      %v3610 = vmax.f32 %v2775, %v3578
      %v3611 = vmax.f32 %v2776, %v3579
      %v3612 = vmax.f32 %v2777, %v3580
      %v3613 = vmax.f32 %v2778, %v3581
      %v3614 = vmax.f32 %v2779, %v3582
      %v3615 = vmax.f32 %v2780, %v3583
      %v3616 = vmax.f32 %v2781, %v3584
      %v3617 = vmax.f32 %v2782, %v3585
      %v3618 = vmax.f32 %v2783, %v3586
      %v3619 = vmax.f32 %v2784, %v3587
      %v3620 = vmax.f32 %v2785, %v3588
      %v3621 = vmax.f32 %v2786, %v3589
      %v3622 = vmax.f32 %v2787, %v3590
      %v3623 = vmax.f32 %v2788, %v3591
      %v3624 = vmax.f32 %v2789, %v3592
      %v3625 = vld [vmem:[%s4] sm:$0x1]
      %v3627 = vlaneseq
      %v3628 = vshrl.u32 %v3627, 7
      %v3629 = vsub.s32 0, %v3628
      %v3630 = vrot.slane %v3625, %v3629
      %v3632 = vadd.f32 %v3593, %v3630
      %v3633 = vadd.f32 %v3594, %v3630
      %v3634 = vadd.f32 %v3595, %v3630
      %v3635 = vadd.f32 %v3596, %v3630
      %v3636 = vadd.f32 %v3597, %v3630
      %v3637 = vadd.f32 %v3598, %v3630
      %v3638 = vadd.f32 %v3599, %v3630
      %v3639 = vadd.f32 %v3600, %v3630
      %v3640 = vadd.f32 %v3601, %v3630
      %v3641 = vadd.f32 %v3602, %v3630
      %v3642 = vadd.f32 %v3603, %v3630
      %v3643 = vadd.f32 %v3604, %v3630
      %v3644 = vadd.f32 %v3605, %v3630
      %v3645 = vadd.f32 %v3606, %v3630
      %v3646 = vadd.f32 %v3607, %v3630
      %v3647 = vadd.f32 %v3608, %v3630
      %v3648 = vadd.f32 %v3609, %v3630
      %v3649 = vadd.f32 %v3610, %v3630
      %v3650 = vadd.f32 %v3611, %v3630
      %v3651 = vadd.f32 %v3612, %v3630
      %v3652 = vadd.f32 %v3613, %v3630
      %v3653 = vadd.f32 %v3614, %v3630
      %v3654 = vadd.f32 %v3615, %v3630
      %v3655 = vadd.f32 %v3616, %v3630
      %v3656 = vadd.f32 %v3617, %v3630
      %v3657 = vadd.f32 %v3618, %v3630
      %v3658 = vadd.f32 %v3619, %v3630
      %v3659 = vadd.f32 %v3620, %v3630
      %v3660 = vadd.f32 %v3621, %v3630
      %v3661 = vadd.f32 %v3622, %v3630
      %v3662 = vadd.f32 %v3623, %v3630
      %v3663 = vadd.f32 %v3624, %v3630
      %v3664 = vmax.f32 %v3632, 0.0
      %v3665 = vmax.f32 %v3633, 0.0
      %v3666 = vmax.f32 %v3634, 0.0
      %v3667 = vmax.f32 %v3635, 0.0
      %v3668 = vmax.f32 %v3636, 0.0
      %v3669 = vmax.f32 %v3637, 0.0
      %v3670 = vmax.f32 %v3638, 0.0
      %v3671 = vmax.f32 %v3639, 0.0
      %v3672 = vmax.f32 %v3640, 0.0
      %v3673 = vmax.f32 %v3641, 0.0
      %v3674 = vmax.f32 %v3642, 0.0
      %v3675 = vmax.f32 %v3643, 0.0
      %v3676 = vmax.f32 %v3644, 0.0
      %v3677 = vmax.f32 %v3645, 0.0
      %v3678 = vmax.f32 %v3646, 0.0
      %v3679 = vmax.f32 %v3647, 0.0
      %v3680 = vmax.f32 %v3648, 0.0
      %v3681 = vmax.f32 %v3649, 0.0
      %v3682 = vmax.f32 %v3650, 0.0
      %v3683 = vmax.f32 %v3651, 0.0
      %v3684 = vmax.f32 %v3652, 0.0
      %v3685 = vmax.f32 %v3653, 0.0
      %v3686 = vmax.f32 %v3654, 0.0
      %v3687 = vmax.f32 %v3655, 0.0
      %v3688 = vmax.f32 %v3656, 0.0
      %v3689 = vmax.f32 %v3657, 0.0
      %v3690 = vmax.f32 %v3658, 0.0
      %v3691 = vmax.f32 %v3659, 0.0
      %v3692 = vmax.f32 %v3660, 0.0
      %v3693 = vmax.f32 %v3661, 0.0
      %v3694 = vmax.f32 %v3662, 0.0
      %v3695 = vmax.f32 %v3663, 0.0
      %v3696 = vpack.c.bf16 %v3665, %v3664
      %v3697 = vpack.c.bf16 %v3667, %v3666
      %v3698 = vpack.c.bf16 %v3669, %v3668
      %v3699 = vpack.c.bf16 %v3671, %v3670
      %v3700 = vpack.c.bf16 %v3673, %v3672
      %v3701 = vpack.c.bf16 %v3675, %v3674
      %v3702 = vpack.c.bf16 %v3677, %v3676
      %v3703 = vpack.c.bf16 %v3679, %v3678
      %v3704 = vpack.c.bf16 %v3681, %v3680
      %v3705 = vpack.c.bf16 %v3683, %v3682
      %v3706 = vpack.c.bf16 %v3685, %v3684
      %v3707 = vpack.c.bf16 %v3687, %v3686
      %v3708 = vpack.c.bf16 %v3689, %v3688
      %v3709 = vpack.c.bf16 %v3691, %v3690
      %v3710 = vpack.c.bf16 %v3693, %v3692
      %v3711 = vpack.c.bf16 %v3695, %v3694
      %v3728 = vunpack.c.l.b16 %v3696
      %v3729 = vunpack.c.h.b16 %v3696
      %v3730 = vunpack.c.l.b16 %v3697
      %v3731 = vunpack.c.h.b16 %v3697
      %v3732 = vunpack.c.l.b16 %v3698
      %v3733 = vunpack.c.h.b16 %v3698
      %v3734 = vunpack.c.l.b16 %v3699
      %v3735 = vunpack.c.h.b16 %v3699
      %v3736 = vunpack.c.l.b16 %v3700
      %v3737 = vunpack.c.h.b16 %v3700
      %v3738 = vunpack.c.l.b16 %v3701
      %v3739 = vunpack.c.h.b16 %v3701
      %v3740 = vunpack.c.l.b16 %v3702
      %v3741 = vunpack.c.h.b16 %v3702
      %v3742 = vunpack.c.l.b16 %v3703
      %v3743 = vunpack.c.h.b16 %v3703
      %v3744 = vunpack.c.l.b16 %v3704
      %v3745 = vunpack.c.h.b16 %v3704
      %v3746 = vunpack.c.l.b16 %v3705
      %v3747 = vunpack.c.h.b16 %v3705
      %v3748 = vunpack.c.l.b16 %v3706
      %v3749 = vunpack.c.h.b16 %v3706
      %v3750 = vunpack.c.l.b16 %v3707
      %v3751 = vunpack.c.h.b16 %v3707
      %v3752 = vunpack.c.l.b16 %v3708
      %v3753 = vunpack.c.h.b16 %v3708
      %v3754 = vunpack.c.l.b16 %v3709
      %v3755 = vunpack.c.h.b16 %v3709
      %v3756 = vunpack.c.l.b16 %v3710
      %v3757 = vunpack.c.h.b16 %v3710
      %v3758 = vunpack.c.l.b16 %v3711
      %v3759 = vunpack.c.h.b16 %v3711
      %v3760 = vpack.c.b16 %v3728, %v3728
      %v3761 = vpack.c.b16 %v3729, %v3729
      %v3762 = vpack.c.b16 %v3730, %v3730
      %v3763 = vpack.c.b16 %v3731, %v3731
      %v3764 = vpack.c.b16 %v3732, %v3732
      %v3765 = vpack.c.b16 %v3733, %v3733
      %v3766 = vpack.c.b16 %v3734, %v3734
      %v3767 = vpack.c.b16 %v3735, %v3735
      %v3768 = vpack.c.b16 %v3736, %v3736
      %v3769 = vpack.c.b16 %v3737, %v3737
      %v3770 = vpack.c.b16 %v3738, %v3738
      %v3771 = vpack.c.b16 %v3739, %v3739
      %v3772 = vpack.c.b16 %v3740, %v3740
      %v3773 = vpack.c.b16 %v3741, %v3741
      %v3774 = vpack.c.b16 %v3742, %v3742
      %v3775 = vpack.c.b16 %v3743, %v3743
      %v3776 = vpack.c.b16 %v3744, %v3744
      %v3777 = vpack.c.b16 %v3745, %v3745
      %v3778 = vpack.c.b16 %v3746, %v3746
      %v3779 = vpack.c.b16 %v3747, %v3747
      %v3780 = vpack.c.b16 %v3748, %v3748
      %v3781 = vpack.c.b16 %v3749, %v3749
      %v3782 = vpack.c.b16 %v3750, %v3750
      %v3783 = vpack.c.b16 %v3751, %v3751
      %v3784 = vpack.c.b16 %v3752, %v3752
      %v3785 = vpack.c.b16 %v3753, %v3753
      %v3786 = vpack.c.b16 %v3754, %v3754
      %v3787 = vpack.c.b16 %v3755, %v3755
      %v3788 = vpack.c.b16 %v3756, %v3756
      %v3789 = vpack.c.b16 %v3757, %v3757
      %v3790 = vpack.c.b16 %v3758, %v3758
      %v3791 = vpack.c.b16 %v3759, %v3759
      %vm3824 = vcmask 519168
      %3825 = vst.msk [vmem:[%s226] sm:$0xf] %vm3824, %v3760
      %3826 = vst.msk [vmem:[%s226 + $0x4] sm:$0xf] %vm3824, %v3761
      %3827 = vst.msk [vmem:[%s226 + $0x8] sm:$0xf] %vm3824, %v3762
      %3828 = vst.msk [vmem:[%s226 + $0xc] sm:$0xf] %vm3824, %v3763
      %3829 = vst.msk [vmem:[%s226 + $0x10] sm:$0xf] %vm3824, %v3764
      %3830 = vst.msk [vmem:[%s226 + $0x14] sm:$0xf] %vm3824, %v3765
      %3831 = vst.msk [vmem:[%s226 + $0x18] sm:$0xf] %vm3824, %v3766
      %3832 = vst.msk [vmem:[%s226 + $0x1c] sm:$0xf] %vm3824, %v3767
      %3833 = vst.msk [vmem:[%s226 + $0x20] sm:$0xf] %vm3824, %v3768
      %3834 = vst.msk [vmem:[%s226 + $0x24] sm:$0xf] %vm3824, %v3769
      %3835 = vst.msk [vmem:[%s226 + $0x28] sm:$0xf] %vm3824, %v3770
      %3836 = vst.msk [vmem:[%s226 + $0x2c] sm:$0xf] %vm3824, %v3771
      %3837 = vst.msk [vmem:[%s226 + $0x30] sm:$0xf] %vm3824, %v3772
      %3838 = vst.msk [vmem:[%s226 + $0x34] sm:$0xf] %vm3824, %v3773
      %3839 = vst.msk [vmem:[%s226 + $0x38] sm:$0xf] %vm3824, %v3774
      %3840 = vst.msk [vmem:[%s226 + $0x3c] sm:$0xf] %vm3824, %v3775
      %3841 = vst.msk [vmem:[%s226 + $0x40] sm:$0xf] %vm3824, %v3776
      %3842 = vst.msk [vmem:[%s226 + $0x44] sm:$0xf] %vm3824, %v3777
      %3843 = vst.msk [vmem:[%s226 + $0x48] sm:$0xf] %vm3824, %v3778
      %3844 = vst.msk [vmem:[%s226 + $0x4c] sm:$0xf] %vm3824, %v3779
      %3845 = vst.msk [vmem:[%s226 + $0x50] sm:$0xf] %vm3824, %v3780
      %3846 = vst.msk [vmem:[%s226 + $0x54] sm:$0xf] %vm3824, %v3781
      %3847 = vst.msk [vmem:[%s226 + $0x58] sm:$0xf] %vm3824, %v3782
      %3848 = vst.msk [vmem:[%s226 + $0x5c] sm:$0xf] %vm3824, %v3783
      %3849 = vst.msk [vmem:[%s226 + $0x60] sm:$0xf] %vm3824, %v3784
      %3850 = vst.msk [vmem:[%s226 + $0x64] sm:$0xf] %vm3824, %v3785
      %3851 = vst.msk [vmem:[%s226 + $0x68] sm:$0xf] %vm3824, %v3786
      %3852 = vst.msk [vmem:[%s226 + $0x6c] sm:$0xf] %vm3824, %v3787
      %3853 = vst.msk [vmem:[%s226 + $0x70] sm:$0xf] %vm3824, %v3788
      %3854 = vst.msk [vmem:[%s226 + $0x74] sm:$0xf] %vm3824, %v3789
      %3855 = vst.msk [vmem:[%s226 + $0x78] sm:$0xf] %vm3824, %v3790
      %3856 = vst.msk [vmem:[%s226 + $0x7c] sm:$0xf] %vm3824, %v3791
      %s3857 = smul.u32 32, %s16
      %p3858 = scmp.lt.s32.totalorder %s3857, 63
      %s3859 = scalar_select %p3858, %s3857, 63
      %s3860 = smul.addr %s3859, 4
      %s3861 = scalar_lea.vmem %s5, %s3860
      // Predicated region
      $region41: #{net_afd_forward.2} parent=39 // pred_check
        %p3862 = pneg %p144
      $region42: #{net_afd_forward.2} parent=39 // pred_check_branch
        %3864 = sbr.rel (%p3862) target = $region44
      $region43: #{net_afd_forward.2} parent=39 // pred_region
        %s3865 = smul.u32 32, %s16
      $region44: #{net_afd_forward.2} parent=39 // pred_fallthru
        _
    $region40: #{net_afd_forward.2} parent=5 // pred_fallthru
      _
    %p3866 = scmp.le.s32.totalorder 2, %s11
    // Predicated region
    $region45: #{net_afd_forward.2} parent=5 // pred_check
      %p3867 = pneg %p3866
    $region46: #{net_afd_forward.2} parent=5 // pred_check_branch
      %3869 = sbr.rel (%p3867) target = $region48
    $region47: #{net_afd_forward.2} parent=5 // pred_region
      %s3870 = ssub.s32 %s11, 2
      // Predicated region
      $region49: #{net_afd_forward.2} parent=47 // pred_check
        %p3871 = pneg %p150
      $region50: #{net_afd_forward.2} parent=47 // pred_check_branch
        %3873 = sbr.rel (%p3871) target = $region52
      $region51: #{net_afd_forward.2} parent=47 // pred_region
        %s3874 = smul.u32 32, %s17
        %p3875 = scmp.lt.s32.totalorder %s3874, 63
        %s3876 = scalar_select %p3875, %s3874, 63
        %s3877 = smul.addr %s3876, 4
        %s3878 = scalar_lea.vmem %s5, %s3877
      $region52: #{net_afd_forward.2} parent=47 // pred_fallthru
        _
    $region48: #{net_afd_forward.2} parent=5 // pred_fallthru
      _
  $region6: #{net_afd_forward.2} parent=0 // loop_footer
    %s15 = sadd.s32 1, %s11
  $region7: #{net_afd_forward.2} parent=0 // loop_footer_branch
    %10 = sbr.rel target = $region3
  $region8: #{net_afd_forward.2} parent=0 // loop_exit
    _

// kernel: net_afd_forward.3
$region0: #{net_afd_forward.3}
  #allocation0 [shape = 'u32[]', space=smem, size = 0x4, offset = 0x4, fixed_abs, tag = 'smem constant byte address 0x4 - core index']
  #allocation1 [shape = 'u32[144,128]{1,0:T(1,128)}', space=vmem, size = 0x12000, scoped, tag = 'internal scratch']
  #allocation2 [shape = 'f32[1,1]{1,0:T(1,128)S(1)}', space=vmem, size = 0x200, scoped, tag = 'scoped memory for net_afd_forward.3']
  %s0 = inlined_call_operand.vmem [shape: bf16[8,4096], index: 0, kind: input, shape index: {}]
  %s1 = inlined_call_operand.vmem [shape: bf16[4096,128], index: 1, kind: input, shape index: {}]
  %s2 = inlined_call_operand.vmem [shape: f32[1,128], index: 2, kind: input, shape index: {}]
  %s3 = inlined_call_operand.vmem [shape: f32[128,1], index: 3, kind: input, shape index: {}]
  %s4 = inlined_call_operand.<no memory space> [shape: f32[1,1], index: 4, kind: input, shape index: {}]
  %s5 = inlined_call_operand.vmem [shape: f32[8,1], index: 5, kind: output, shape index: {}]
  %s6 = sld [smem:[#allocation0]]
  $region30: #{net_afd_forward.3} parent=0
    _
  %s8 = ssub.s32 1, %s6
  %s9 = scalar_select 0, %s8, %s6
  %v10 = vstv %s4
  %11 = vst [vmem:[#allocation2] sm:$0x1] %v10
  // Predicated region
  $region2: #{net_afd_forward.3} parent=0 // pred_check
    _
  $region3: #{net_afd_forward.3} parent=0 // pred_check_branch
    %13 = sbr.rel (0) target = $region5
  $region4: #{net_afd_forward.3} parent=0 // pred_region
    _
  $region5: #{net_afd_forward.3} parent=0 // pred_fallthru
    _
  // Predicated region
  $region6: #{net_afd_forward.3} parent=0 // pred_check
    _
  $region7: #{net_afd_forward.3} parent=0 // pred_check_branch
    %15 = sbr.rel (0) target = $region9
  $region8: #{net_afd_forward.3} parent=0 // pred_region
    _
  $region9: #{net_afd_forward.3} parent=0 // pred_fallthru
    _
  // Predicated region
  $region10: #{net_afd_forward.3} parent=0 // pred_check
    _
  $region11: #{net_afd_forward.3} parent=0 // pred_check_branch
    %17 = sbr.rel (0) target = $region13
  $region12: #{net_afd_forward.3} parent=0 // pred_region
    _
  $region13: #{net_afd_forward.3} parent=0 // pred_fallthru
    _
  // Predicated region
  $region14: #{net_afd_forward.3} parent=0 // pred_check
    _
  $region15: #{net_afd_forward.3} parent=0 // pred_check_branch
    %19 = sbr.rel (0) target = $region17
  $region16: #{net_afd_forward.3} parent=0 // pred_region
    _
  $region17: #{net_afd_forward.3} parent=0 // pred_fallthru
    _
  // Predicated region
  $region18: #{net_afd_forward.3} parent=0 // pred_check
    _
  $region19: #{net_afd_forward.3} parent=0 // pred_check_branch
    %21 = sbr.rel (0) target = $region21
  $region20: #{net_afd_forward.3} parent=0 // pred_region
    _
  $region21: #{net_afd_forward.3} parent=0 // pred_fallthru
    _
  %v23 = vld [vmem:[%s0] sm:$0xff]
  %v24 = vld [vmem:[%s0 + $0x8] sm:$0xff]
  %v25 = vld [vmem:[%s0 + $0x10] sm:$0xff]
  %v26 = vld [vmem:[%s0 + $0x18] sm:$0xff]
  %v27 = vld [vmem:[%s0 + $0x20] sm:$0xff]
  %v28 = vld [vmem:[%s0 + $0x28] sm:$0xff]
  %v29 = vld [vmem:[%s0 + $0x30] sm:$0xff]
  %v30 = vld [vmem:[%s0 + $0x38] sm:$0xff]
  %v31 = vld [vmem:[%s0 + $0x40] sm:$0xff]
  %v32 = vld [vmem:[%s0 + $0x48] sm:$0xff]
  %v33 = vld [vmem:[%s0 + $0x50] sm:$0xff]
  %v34 = vld [vmem:[%s0 + $0x58] sm:$0xff]
  %v35 = vld [vmem:[%s0 + $0x60] sm:$0xff]
  %v36 = vld [vmem:[%s0 + $0x68] sm:$0xff]
  %v37 = vld [vmem:[%s0 + $0x70] sm:$0xff]
  %v38 = vld [vmem:[%s0 + $0x78] sm:$0xff]
  %v39 = vld [vmem:[%s1] sm:$0xf]
  %v40 = vld [vmem:[%s1 + $0x4] sm:$0xf]
  %v41 = vld [vmem:[%s1 + $0x8] sm:$0xf]
  %v42 = vld [vmem:[%s1 + $0xc] sm:$0xf]
  %v43 = vld [vmem:[%s1 + $0x10] sm:$0xf]
  %v44 = vld [vmem:[%s1 + $0x14] sm:$0xf]
  %v45 = vld [vmem:[%s1 + $0x18] sm:$0xf]
  %v46 = vld [vmem:[%s1 + $0x1c] sm:$0xf]
  %v47 = vld [vmem:[%s1 + $0x20] sm:$0xf]
  %v48 = vld [vmem:[%s1 + $0x24] sm:$0xf]
  %v49 = vld [vmem:[%s1 + $0x28] sm:$0xf]
  %v50 = vld [vmem:[%s1 + $0x2c] sm:$0xf]
  %v51 = vld [vmem:[%s1 + $0x30] sm:$0xf]
  %v52 = vld [vmem:[%s1 + $0x34] sm:$0xf]
  %v53 = vld [vmem:[%s1 + $0x38] sm:$0xf]
  %v54 = vld [vmem:[%s1 + $0x3c] sm:$0xf]
  %v55 = vld [vmem:[%s1 + $0x40] sm:$0xf]
  %v56 = vld [vmem:[%s1 + $0x44] sm:$0xf]
  %v57 = vld [vmem:[%s1 + $0x48] sm:$0xf]
  %v58 = vld [vmem:[%s1 + $0x4c] sm:$0xf]
  %v59 = vld [vmem:[%s1 + $0x50] sm:$0xf]
  %v60 = vld [vmem:[%s1 + $0x54] sm:$0xf]
  %v61 = vld [vmem:[%s1 + $0x58] sm:$0xf]
  %v62 = vld [vmem:[%s1 + $0x5c] sm:$0xf]
  %v63 = vld [vmem:[%s1 + $0x60] sm:$0xf]
  %v64 = vld [vmem:[%s1 + $0x64] sm:$0xf]
  %v65 = vld [vmem:[%s1 + $0x68] sm:$0xf]
  %v66 = vld [vmem:[%s1 + $0x6c] sm:$0xf]
  %v67 = vld [vmem:[%s1 + $0x70] sm:$0xf]
  %v68 = vld [vmem:[%s1 + $0x74] sm:$0xf]
  %v69 = vld [vmem:[%s1 + $0x78] sm:$0xf]
  %v70 = vld [vmem:[%s1 + $0x7c] sm:$0xf]
  %v71 = vld [vmem:[%s1 + $0x80] sm:$0xf]
  %v72 = vld [vmem:[%s1 + $0x84] sm:$0xf]
  %v73 = vld [vmem:[%s1 + $0x88] sm:$0xf]
  %v74 = vld [vmem:[%s1 + $0x8c] sm:$0xf]
  %v75 = vld [vmem:[%s1 + $0x90] sm:$0xf]
  %v76 = vld [vmem:[%s1 + $0x94] sm:$0xf]
  %v77 = vld [vmem:[%s1 + $0x98] sm:$0xf]
  %v78 = vld [vmem:[%s1 + $0x9c] sm:$0xf]
  %v79 = vld [vmem:[%s1 + $0xa0] sm:$0xf]
  %v80 = vld [vmem:[%s1 + $0xa4] sm:$0xf]
  %v81 = vld [vmem:[%s1 + $0xa8] sm:$0xf]
  %v82 = vld [vmem:[%s1 + $0xac] sm:$0xf]
  %v83 = vld [vmem:[%s1 + $0xb0] sm:$0xf]
  %v84 = vld [vmem:[%s1 + $0xb4] sm:$0xf]
  %v85 = vld [vmem:[%s1 + $0xb8] sm:$0xf]
  %v86 = vld [vmem:[%s1 + $0xbc] sm:$0xf]
  %v87 = vld [vmem:[%s1 + $0xc0] sm:$0xf]
  %v88 = vld [vmem:[%s1 + $0xc4] sm:$0xf]
  %v89 = vld [vmem:[%s1 + $0xc8] sm:$0xf]
  %v90 = vld [vmem:[%s1 + $0xcc] sm:$0xf]
  %v91 = vld [vmem:[%s1 + $0xd0] sm:$0xf]
  %v92 = vld [vmem:[%s1 + $0xd4] sm:$0xf]
  %v93 = vld [vmem:[%s1 + $0xd8] sm:$0xf]
  %v94 = vld [vmem:[%s1 + $0xdc] sm:$0xf]
  %v95 = vld [vmem:[%s1 + $0xe0] sm:$0xf]
  %v96 = vld [vmem:[%s1 + $0xe4] sm:$0xf]
  %v97 = vld [vmem:[%s1 + $0xe8] sm:$0xf]
  %v98 = vld [vmem:[%s1 + $0xec] sm:$0xf]
  %v99 = vld [vmem:[%s1 + $0xf0] sm:$0xf]
  %v100 = vld [vmem:[%s1 + $0xf4] sm:$0xf]
  %v101 = vld [vmem:[%s1 + $0xf8] sm:$0xf]
  %v102 = vld [vmem:[%s1 + $0xfc] sm:$0xf]
  %v103 = vld [vmem:[%s1 + $0x100] sm:$0xf]
  %v104 = vld [vmem:[%s1 + $0x104] sm:$0xf]
  %v105 = vld [vmem:[%s1 + $0x108] sm:$0xf]
  %v106 = vld [vmem:[%s1 + $0x10c] sm:$0xf]
  %v107 = vld [vmem:[%s1 + $0x110] sm:$0xf]
  %v108 = vld [vmem:[%s1 + $0x114] sm:$0xf]
  %v109 = vld [vmem:[%s1 + $0x118] sm:$0xf]
  %v110 = vld [vmem:[%s1 + $0x11c] sm:$0xf]
  %v111 = vld [vmem:[%s1 + $0x120] sm:$0xf]
  %v112 = vld [vmem:[%s1 + $0x124] sm:$0xf]
  %v113 = vld [vmem:[%s1 + $0x128] sm:$0xf]
  %v114 = vld [vmem:[%s1 + $0x12c] sm:$0xf]
  %v115 = vld [vmem:[%s1 + $0x130] sm:$0xf]
  %v116 = vld [vmem:[%s1 + $0x134] sm:$0xf]
  %v117 = vld [vmem:[%s1 + $0x138] sm:$0xf]
  %v118 = vld [vmem:[%s1 + $0x13c] sm:$0xf]
  %v119 = vld [vmem:[%s1 + $0x140] sm:$0xf]
  %v120 = vld [vmem:[%s1 + $0x144] sm:$0xf]
  %v121 = vld [vmem:[%s1 + $0x148] sm:$0xf]
  %v122 = vld [vmem:[%s1 + $0x14c] sm:$0xf]
  %v123 = vld [vmem:[%s1 + $0x150] sm:$0xf]
  %v124 = vld [vmem:[%s1 + $0x154] sm:$0xf]
  %v125 = vld [vmem:[%s1 + $0x158] sm:$0xf]
  %v126 = vld [vmem:[%s1 + $0x15c] sm:$0xf]
  %v127 = vld [vmem:[%s1 + $0x160] sm:$0xf]
  %v128 = vld [vmem:[%s1 + $0x164] sm:$0xf]
  %v129 = vld [vmem:[%s1 + $0x168] sm:$0xf]
  %v130 = vld [vmem:[%s1 + $0x16c] sm:$0xf]
  %v131 = vld [vmem:[%s1 + $0x170] sm:$0xf]
  %v132 = vld [vmem:[%s1 + $0x174] sm:$0xf]
  %v133 = vld [vmem:[%s1 + $0x178] sm:$0xf]
  %v134 = vld [vmem:[%s1 + $0x17c] sm:$0xf]
  %v135 = vld [vmem:[%s1 + $0x180] sm:$0xf]
  %v136 = vld [vmem:[%s1 + $0x184] sm:$0xf]
  %v137 = vld [vmem:[%s1 + $0x188] sm:$0xf]
  %v138 = vld [vmem:[%s1 + $0x18c] sm:$0xf]
  %v139 = vld [vmem:[%s1 + $0x190] sm:$0xf]
  %v140 = vld [vmem:[%s1 + $0x194] sm:$0xf]
  %v141 = vld [vmem:[%s1 + $0x198] sm:$0xf]
  %v142 = vld [vmem:[%s1 + $0x19c] sm:$0xf]
  %v143 = vld [vmem:[%s1 + $0x1a0] sm:$0xf]
  %v144 = vld [vmem:[%s1 + $0x1a4] sm:$0xf]
  %v145 = vld [vmem:[%s1 + $0x1a8] sm:$0xf]
  %v146 = vld [vmem:[%s1 + $0x1ac] sm:$0xf]
  %v147 = vld [vmem:[%s1 + $0x1b0] sm:$0xf]
  %v148 = vld [vmem:[%s1 + $0x1b4] sm:$0xf]
  %v149 = vld [vmem:[%s1 + $0x1b8] sm:$0xf]
  %v150 = vld [vmem:[%s1 + $0x1bc] sm:$0xf]
  %v151 = vld [vmem:[%s1 + $0x1c0] sm:$0xf]
  %v152 = vld [vmem:[%s1 + $0x1c4] sm:$0xf]
  %v153 = vld [vmem:[%s1 + $0x1c8] sm:$0xf]
  %v154 = vld [vmem:[%s1 + $0x1cc] sm:$0xf]
  %v155 = vld [vmem:[%s1 + $0x1d0] sm:$0xf]
  %v156 = vld [vmem:[%s1 + $0x1d4] sm:$0xf]
  %v157 = vld [vmem:[%s1 + $0x1d8] sm:$0xf]
  %v158 = vld [vmem:[%s1 + $0x1dc] sm:$0xf]
  %v159 = vld [vmem:[%s1 + $0x1e0] sm:$0xf]
  %v160 = vld [vmem:[%s1 + $0x1e4] sm:$0xf]
  %v161 = vld [vmem:[%s1 + $0x1e8] sm:$0xf]
  %v162 = vld [vmem:[%s1 + $0x1ec] sm:$0xf]
  %v163 = vld [vmem:[%s1 + $0x1f0] sm:$0xf]
  %v164 = vld [vmem:[%s1 + $0x1f4] sm:$0xf]
  %v165 = vld [vmem:[%s1 + $0x1f8] sm:$0xf]
  %v166 = vld [vmem:[%s1 + $0x1fc] sm:$0xf]
  %v167 = vld [vmem:[%s1 + $0x200] sm:$0xf]
  %v168 = vld [vmem:[%s1 + $0x204] sm:$0xf]
  %v169 = vld [vmem:[%s1 + $0x208] sm:$0xf]
  %v170 = vld [vmem:[%s1 + $0x20c] sm:$0xf]
  %v171 = vld [vmem:[%s1 + $0x210] sm:$0xf]
  %v172 = vld [vmem:[%s1 + $0x214] sm:$0xf]
  %v173 = vld [vmem:[%s1 + $0x218] sm:$0xf]
  %v174 = vld [vmem:[%s1 + $0x21c] sm:$0xf]
  %v175 = vld [vmem:[%s1 + $0x220] sm:$0xf]
  %v176 = vld [vmem:[%s1 + $0x224] sm:$0xf]
  %v177 = vld [vmem:[%s1 + $0x228] sm:$0xf]
  %v178 = vld [vmem:[%s1 + $0x22c] sm:$0xf]
  %v179 = vld [vmem:[%s1 + $0x230] sm:$0xf]
  %v180 = vld [vmem:[%s1 + $0x234] sm:$0xf]
  %v181 = vld [vmem:[%s1 + $0x238] sm:$0xf]
  %v182 = vld [vmem:[%s1 + $0x23c] sm:$0xf]
  %v183 = vld [vmem:[%s1 + $0x240] sm:$0xf]
  %v184 = vld [vmem:[%s1 + $0x244] sm:$0xf]
  %v185 = vld [vmem:[%s1 + $0x248] sm:$0xf]
  %v186 = vld [vmem:[%s1 + $0x24c] sm:$0xf]
  %v187 = vld [vmem:[%s1 + $0x250] sm:$0xf]
  %v188 = vld [vmem:[%s1 + $0x254] sm:$0xf]
  %v189 = vld [vmem:[%s1 + $0x258] sm:$0xf]
  %v190 = vld [vmem:[%s1 + $0x25c] sm:$0xf]
  %v191 = vld [vmem:[%s1 + $0x260] sm:$0xf]
  %v192 = vld [vmem:[%s1 + $0x264] sm:$0xf]
  %v193 = vld [vmem:[%s1 + $0x268] sm:$0xf]
  %v194 = vld [vmem:[%s1 + $0x26c] sm:$0xf]
  %v195 = vld [vmem:[%s1 + $0x270] sm:$0xf]
  %v196 = vld [vmem:[%s1 + $0x274] sm:$0xf]
  %v197 = vld [vmem:[%s1 + $0x278] sm:$0xf]
  %v198 = vld [vmem:[%s1 + $0x27c] sm:$0xf]
  %v199 = vld [vmem:[%s1 + $0x280] sm:$0xf]
  %v200 = vld [vmem:[%s1 + $0x284] sm:$0xf]
  %v201 = vld [vmem:[%s1 + $0x288] sm:$0xf]
  %v202 = vld [vmem:[%s1 + $0x28c] sm:$0xf]
  %v203 = vld [vmem:[%s1 + $0x290] sm:$0xf]
  %v204 = vld [vmem:[%s1 + $0x294] sm:$0xf]
  %v205 = vld [vmem:[%s1 + $0x298] sm:$0xf]
  %v206 = vld [vmem:[%s1 + $0x29c] sm:$0xf]
  %v207 = vld [vmem:[%s1 + $0x2a0] sm:$0xf]
  %v208 = vld [vmem:[%s1 + $0x2a4] sm:$0xf]
  %v209 = vld [vmem:[%s1 + $0x2a8] sm:$0xf]
  %v210 = vld [vmem:[%s1 + $0x2ac] sm:$0xf]
  %v211 = vld [vmem:[%s1 + $0x2b0] sm:$0xf]
  %v212 = vld [vmem:[%s1 + $0x2b4] sm:$0xf]
  %v213 = vld [vmem:[%s1 + $0x2b8] sm:$0xf]
  %v214 = vld [vmem:[%s1 + $0x2bc] sm:$0xf]
  %v215 = vld [vmem:[%s1 + $0x2c0] sm:$0xf]
  %v216 = vld [vmem:[%s1 + $0x2c4] sm:$0xf]
  %v217 = vld [vmem:[%s1 + $0x2c8] sm:$0xf]
  %v218 = vld [vmem:[%s1 + $0x2cc] sm:$0xf]
  %v219 = vld [vmem:[%s1 + $0x2d0] sm:$0xf]
  %v220 = vld [vmem:[%s1 + $0x2d4] sm:$0xf]
  %v221 = vld [vmem:[%s1 + $0x2d8] sm:$0xf]
  %v222 = vld [vmem:[%s1 + $0x2dc] sm:$0xf]
  %v223 = vld [vmem:[%s1 + $0x2e0] sm:$0xf]
  %v224 = vld [vmem:[%s1 + $0x2e4] sm:$0xf]
  %v225 = vld [vmem:[%s1 + $0x2e8] sm:$0xf]
  %v226 = vld [vmem:[%s1 + $0x2ec] sm:$0xf]
  %v227 = vld [vmem:[%s1 + $0x2f0] sm:$0xf]
  %v228 = vld [vmem:[%s1 + $0x2f4] sm:$0xf]
  %v229 = vld [vmem:[%s1 + $0x2f8] sm:$0xf]
  %v230 = vld [vmem:[%s1 + $0x2fc] sm:$0xf]
  %v231 = vld [vmem:[%s1 + $0x300] sm:$0xf]
  %v232 = vld [vmem:[%s1 + $0x304] sm:$0xf]
  %v233 = vld [vmem:[%s1 + $0x308] sm:$0xf]
  %v234 = vld [vmem:[%s1 + $0x30c] sm:$0xf]
  %v235 = vld [vmem:[%s1 + $0x310] sm:$0xf]
  %v236 = vld [vmem:[%s1 + $0x314] sm:$0xf]
  %v237 = vld [vmem:[%s1 + $0x318] sm:$0xf]
  %v238 = vld [vmem:[%s1 + $0x31c] sm:$0xf]
  %v239 = vld [vmem:[%s1 + $0x320] sm:$0xf]
  %v240 = vld [vmem:[%s1 + $0x324] sm:$0xf]
  %v241 = vld [vmem:[%s1 + $0x328] sm:$0xf]
  %v242 = vld [vmem:[%s1 + $0x32c] sm:$0xf]
  %v243 = vld [vmem:[%s1 + $0x330] sm:$0xf]
  %v244 = vld [vmem:[%s1 + $0x334] sm:$0xf]
  %v245 = vld [vmem:[%s1 + $0x338] sm:$0xf]
  %v246 = vld [vmem:[%s1 + $0x33c] sm:$0xf]
  %v247 = vld [vmem:[%s1 + $0x340] sm:$0xf]
  %v248 = vld [vmem:[%s1 + $0x344] sm:$0xf]
  %v249 = vld [vmem:[%s1 + $0x348] sm:$0xf]
  %v250 = vld [vmem:[%s1 + $0x34c] sm:$0xf]
  %v251 = vld [vmem:[%s1 + $0x350] sm:$0xf]
  %v252 = vld [vmem:[%s1 + $0x354] sm:$0xf]
  %v253 = vld [vmem:[%s1 + $0x358] sm:$0xf]
  %v254 = vld [vmem:[%s1 + $0x35c] sm:$0xf]
  %v255 = vld [vmem:[%s1 + $0x360] sm:$0xf]
  %v256 = vld [vmem:[%s1 + $0x364] sm:$0xf]
  %v257 = vld [vmem:[%s1 + $0x368] sm:$0xf]
  %v258 = vld [vmem:[%s1 + $0x36c] sm:$0xf]
  %v259 = vld [vmem:[%s1 + $0x370] sm:$0xf]
  %v260 = vld [vmem:[%s1 + $0x374] sm:$0xf]
  %v261 = vld [vmem:[%s1 + $0x378] sm:$0xf]
  %v262 = vld [vmem:[%s1 + $0x37c] sm:$0xf]
  %v263 = vld [vmem:[%s1 + $0x380] sm:$0xf]
  %v264 = vld [vmem:[%s1 + $0x384] sm:$0xf]
  %v265 = vld [vmem:[%s1 + $0x388] sm:$0xf]
  %v266 = vld [vmem:[%s1 + $0x38c] sm:$0xf]
  %v267 = vld [vmem:[%s1 + $0x390] sm:$0xf]
  %v268 = vld [vmem:[%s1 + $0x394] sm:$0xf]
  %v269 = vld [vmem:[%s1 + $0x398] sm:$0xf]
  %v270 = vld [vmem:[%s1 + $0x39c] sm:$0xf]
  %v271 = vld [vmem:[%s1 + $0x3a0] sm:$0xf]
  %v272 = vld [vmem:[%s1 + $0x3a4] sm:$0xf]
  %v273 = vld [vmem:[%s1 + $0x3a8] sm:$0xf]
  %v274 = vld [vmem:[%s1 + $0x3ac] sm:$0xf]
  %v275 = vld [vmem:[%s1 + $0x3b0] sm:$0xf]
  %v276 = vld [vmem:[%s1 + $0x3b4] sm:$0xf]
  %v277 = vld [vmem:[%s1 + $0x3b8] sm:$0xf]
  %v278 = vld [vmem:[%s1 + $0x3bc] sm:$0xf]
  %v279 = vld [vmem:[%s1 + $0x3c0] sm:$0xf]
  %v280 = vld [vmem:[%s1 + $0x3c4] sm:$0xf]
  %v281 = vld [vmem:[%s1 + $0x3c8] sm:$0xf]
  %v282 = vld [vmem:[%s1 + $0x3cc] sm:$0xf]
  %v283 = vld [vmem:[%s1 + $0x3d0] sm:$0xf]
  %v284 = vld [vmem:[%s1 + $0x3d4] sm:$0xf]
  %v285 = vld [vmem:[%s1 + $0x3d8] sm:$0xf]
  %v286 = vld [vmem:[%s1 + $0x3dc] sm:$0xf]
  %v287 = vld [vmem:[%s1 + $0x3e0] sm:$0xf]
  %v288 = vld [vmem:[%s1 + $0x3e4] sm:$0xf]
  %v289 = vld [vmem:[%s1 + $0x3e8] sm:$0xf]
  %v290 = vld [vmem:[%s1 + $0x3ec] sm:$0xf]
  %v291 = vld [vmem:[%s1 + $0x3f0] sm:$0xf]
  %v292 = vld [vmem:[%s1 + $0x3f4] sm:$0xf]
  %v293 = vld [vmem:[%s1 + $0x3f8] sm:$0xf]
  %v294 = vld [vmem:[%s1 + $0x3fc] sm:$0xf]
  %v295 = vld [vmem:[%s1 + $0x400] sm:$0xf]
  %v296 = vld [vmem:[%s1 + $0x404] sm:$0xf]
  %v297 = vld [vmem:[%s1 + $0x408] sm:$0xf]
  %v298 = vld [vmem:[%s1 + $0x40c] sm:$0xf]
  %v299 = vld [vmem:[%s1 + $0x410] sm:$0xf]
  %v300 = vld [vmem:[%s1 + $0x414] sm:$0xf]
  %v301 = vld [vmem:[%s1 + $0x418] sm:$0xf]
  %v302 = vld [vmem:[%s1 + $0x41c] sm:$0xf]
  %v303 = vld [vmem:[%s1 + $0x420] sm:$0xf]
  %v304 = vld [vmem:[%s1 + $0x424] sm:$0xf]
  %v305 = vld [vmem:[%s1 + $0x428] sm:$0xf]
  %v306 = vld [vmem:[%s1 + $0x42c] sm:$0xf]
  %v307 = vld [vmem:[%s1 + $0x430] sm:$0xf]
  %v308 = vld [vmem:[%s1 + $0x434] sm:$0xf]
  %v309 = vld [vmem:[%s1 + $0x438] sm:$0xf]
  %v310 = vld [vmem:[%s1 + $0x43c] sm:$0xf]
  %v311 = vld [vmem:[%s1 + $0x440] sm:$0xf]
  %v312 = vld [vmem:[%s1 + $0x444] sm:$0xf]
  %v313 = vld [vmem:[%s1 + $0x448] sm:$0xf]
  %v314 = vld [vmem:[%s1 + $0x44c] sm:$0xf]
  %v315 = vld [vmem:[%s1 + $0x450] sm:$0xf]
  %v316 = vld [vmem:[%s1 + $0x454] sm:$0xf]
  %v317 = vld [vmem:[%s1 + $0x458] sm:$0xf]
  %v318 = vld [vmem:[%s1 + $0x45c] sm:$0xf]
  %v319 = vld [vmem:[%s1 + $0x460] sm:$0xf]
  %v320 = vld [vmem:[%s1 + $0x464] sm:$0xf]
  %v321 = vld [vmem:[%s1 + $0x468] sm:$0xf]
  %v322 = vld [vmem:[%s1 + $0x46c] sm:$0xf]
  %v323 = vld [vmem:[%s1 + $0x470] sm:$0xf]
  %v324 = vld [vmem:[%s1 + $0x474] sm:$0xf]
  %v325 = vld [vmem:[%s1 + $0x478] sm:$0xf]
  %v326 = vld [vmem:[%s1 + $0x47c] sm:$0xf]
  %v327 = vld [vmem:[%s1 + $0x480] sm:$0xf]
  %v328 = vld [vmem:[%s1 + $0x484] sm:$0xf]
  %v329 = vld [vmem:[%s1 + $0x488] sm:$0xf]
  %v330 = vld [vmem:[%s1 + $0x48c] sm:$0xf]
  %v331 = vld [vmem:[%s1 + $0x490] sm:$0xf]
  %v332 = vld [vmem:[%s1 + $0x494] sm:$0xf]
  %v333 = vld [vmem:[%s1 + $0x498] sm:$0xf]
  %v334 = vld [vmem:[%s1 + $0x49c] sm:$0xf]
  %v335 = vld [vmem:[%s1 + $0x4a0] sm:$0xf]
  %v336 = vld [vmem:[%s1 + $0x4a4] sm:$0xf]
  %v337 = vld [vmem:[%s1 + $0x4a8] sm:$0xf]
  %v338 = vld [vmem:[%s1 + $0x4ac] sm:$0xf]
  %v339 = vld [vmem:[%s1 + $0x4b0] sm:$0xf]
  %v340 = vld [vmem:[%s1 + $0x4b4] sm:$0xf]
  %v341 = vld [vmem:[%s1 + $0x4b8] sm:$0xf]
  %v342 = vld [vmem:[%s1 + $0x4bc] sm:$0xf]
  %v343 = vld [vmem:[%s1 + $0x4c0] sm:$0xf]
  %v344 = vld [vmem:[%s1 + $0x4c4] sm:$0xf]
  %v345 = vld [vmem:[%s1 + $0x4c8] sm:$0xf]
  %v346 = vld [vmem:[%s1 + $0x4cc] sm:$0xf]
  %v347 = vld [vmem:[%s1 + $0x4d0] sm:$0xf]
  %v348 = vld [vmem:[%s1 + $0x4d4] sm:$0xf]
  %v349 = vld [vmem:[%s1 + $0x4d8] sm:$0xf]
  %v350 = vld [vmem:[%s1 + $0x4dc] sm:$0xf]
  %v351 = vld [vmem:[%s1 + $0x4e0] sm:$0xf]
  %v352 = vld [vmem:[%s1 + $0x4e4] sm:$0xf]
  %v353 = vld [vmem:[%s1 + $0x4e8] sm:$0xf]
  %v354 = vld [vmem:[%s1 + $0x4ec] sm:$0xf]
  %v355 = vld [vmem:[%s1 + $0x4f0] sm:$0xf]
  %v356 = vld [vmem:[%s1 + $0x4f4] sm:$0xf]
  %v357 = vld [vmem:[%s1 + $0x4f8] sm:$0xf]
  %v358 = vld [vmem:[%s1 + $0x4fc] sm:$0xf]
  %v359 = vld [vmem:[%s1 + $0x500] sm:$0xf]
  %v360 = vld [vmem:[%s1 + $0x504] sm:$0xf]
  %v361 = vld [vmem:[%s1 + $0x508] sm:$0xf]
  %v362 = vld [vmem:[%s1 + $0x50c] sm:$0xf]
  %v363 = vld [vmem:[%s1 + $0x510] sm:$0xf]
  %v364 = vld [vmem:[%s1 + $0x514] sm:$0xf]
  %v365 = vld [vmem:[%s1 + $0x518] sm:$0xf]
  %v366 = vld [vmem:[%s1 + $0x51c] sm:$0xf]
  %v367 = vld [vmem:[%s1 + $0x520] sm:$0xf]
  %v368 = vld [vmem:[%s1 + $0x524] sm:$0xf]
  %v369 = vld [vmem:[%s1 + $0x528] sm:$0xf]
  %v370 = vld [vmem:[%s1 + $0x52c] sm:$0xf]
  %v371 = vld [vmem:[%s1 + $0x530] sm:$0xf]
  %v372 = vld [vmem:[%s1 + $0x534] sm:$0xf]
  %v373 = vld [vmem:[%s1 + $0x538] sm:$0xf]
  %v374 = vld [vmem:[%s1 + $0x53c] sm:$0xf]
  %v375 = vld [vmem:[%s1 + $0x540] sm:$0xf]
  %v376 = vld [vmem:[%s1 + $0x544] sm:$0xf]
  %v377 = vld [vmem:[%s1 + $0x548] sm:$0xf]
  %v378 = vld [vmem:[%s1 + $0x54c] sm:$0xf]
  %v379 = vld [vmem:[%s1 + $0x550] sm:$0xf]
  %v380 = vld [vmem:[%s1 + $0x554] sm:$0xf]
  %v381 = vld [vmem:[%s1 + $0x558] sm:$0xf]
  %v382 = vld [vmem:[%s1 + $0x55c] sm:$0xf]
  %v383 = vld [vmem:[%s1 + $0x560] sm:$0xf]
  %v384 = vld [vmem:[%s1 + $0x564] sm:$0xf]
  %v385 = vld [vmem:[%s1 + $0x568] sm:$0xf]
  %v386 = vld [vmem:[%s1 + $0x56c] sm:$0xf]
  %v387 = vld [vmem:[%s1 + $0x570] sm:$0xf]
  %v388 = vld [vmem:[%s1 + $0x574] sm:$0xf]
  %v389 = vld [vmem:[%s1 + $0x578] sm:$0xf]
  %v390 = vld [vmem:[%s1 + $0x57c] sm:$0xf]
  %v391 = vld [vmem:[%s1 + $0x580] sm:$0xf]
  %v392 = vld [vmem:[%s1 + $0x584] sm:$0xf]
  %v393 = vld [vmem:[%s1 + $0x588] sm:$0xf]
  %v394 = vld [vmem:[%s1 + $0x58c] sm:$0xf]
  %v395 = vld [vmem:[%s1 + $0x590] sm:$0xf]
  %v396 = vld [vmem:[%s1 + $0x594] sm:$0xf]
  %v397 = vld [vmem:[%s1 + $0x598] sm:$0xf]
  %v398 = vld [vmem:[%s1 + $0x59c] sm:$0xf]
  %v399 = vld [vmem:[%s1 + $0x5a0] sm:$0xf]
  %v400 = vld [vmem:[%s1 + $0x5a4] sm:$0xf]
  %v401 = vld [vmem:[%s1 + $0x5a8] sm:$0xf]
  %v402 = vld [vmem:[%s1 + $0x5ac] sm:$0xf]
  %v403 = vld [vmem:[%s1 + $0x5b0] sm:$0xf]
  %v404 = vld [vmem:[%s1 + $0x5b4] sm:$0xf]
  %v405 = vld [vmem:[%s1 + $0x5b8] sm:$0xf]
  %v406 = vld [vmem:[%s1 + $0x5bc] sm:$0xf]
  %v407 = vld [vmem:[%s1 + $0x5c0] sm:$0xf]
  %v408 = vld [vmem:[%s1 + $0x5c4] sm:$0xf]
  %v409 = vld [vmem:[%s1 + $0x5c8] sm:$0xf]
  %v410 = vld [vmem:[%s1 + $0x5cc] sm:$0xf]
  %v411 = vld [vmem:[%s1 + $0x5d0] sm:$0xf]
  %v412 = vld [vmem:[%s1 + $0x5d4] sm:$0xf]
  %v413 = vld [vmem:[%s1 + $0x5d8] sm:$0xf]
  %v414 = vld [vmem:[%s1 + $0x5dc] sm:$0xf]
  %v415 = vld [vmem:[%s1 + $0x5e0] sm:$0xf]
  %v416 = vld [vmem:[%s1 + $0x5e4] sm:$0xf]
  %v417 = vld [vmem:[%s1 + $0x5e8] sm:$0xf]
  %v418 = vld [vmem:[%s1 + $0x5ec] sm:$0xf]
  %v419 = vld [vmem:[%s1 + $0x5f0] sm:$0xf]
  %v420 = vld [vmem:[%s1 + $0x5f4] sm:$0xf]
  %v421 = vld [vmem:[%s1 + $0x5f8] sm:$0xf]
  %v422 = vld [vmem:[%s1 + $0x5fc] sm:$0xf]
  %v423 = vld [vmem:[%s1 + $0x600] sm:$0xf]
  %v424 = vld [vmem:[%s1 + $0x604] sm:$0xf]
  %v425 = vld [vmem:[%s1 + $0x608] sm:$0xf]
  %v426 = vld [vmem:[%s1 + $0x60c] sm:$0xf]
  %v427 = vld [vmem:[%s1 + $0x610] sm:$0xf]
  %v428 = vld [vmem:[%s1 + $0x614] sm:$0xf]
  %v429 = vld [vmem:[%s1 + $0x618] sm:$0xf]
  %v430 = vld [vmem:[%s1 + $0x61c] sm:$0xf]
  %v431 = vld [vmem:[%s1 + $0x620] sm:$0xf]
  %v432 = vld [vmem:[%s1 + $0x624] sm:$0xf]
  %v433 = vld [vmem:[%s1 + $0x628] sm:$0xf]
  %v434 = vld [vmem:[%s1 + $0x62c] sm:$0xf]
  %v435 = vld [vmem:[%s1 + $0x630] sm:$0xf]
  %v436 = vld [vmem:[%s1 + $0x634] sm:$0xf]
  %v437 = vld [vmem:[%s1 + $0x638] sm:$0xf]
  %v438 = vld [vmem:[%s1 + $0x63c] sm:$0xf]
  %v439 = vld [vmem:[%s1 + $0x640] sm:$0xf]
  %v440 = vld [vmem:[%s1 + $0x644] sm:$0xf]
  %v441 = vld [vmem:[%s1 + $0x648] sm:$0xf]
  %v442 = vld [vmem:[%s1 + $0x64c] sm:$0xf]
  %v443 = vld [vmem:[%s1 + $0x650] sm:$0xf]
  %v444 = vld [vmem:[%s1 + $0x654] sm:$0xf]
  %v445 = vld [vmem:[%s1 + $0x658] sm:$0xf]
  %v446 = vld [vmem:[%s1 + $0x65c] sm:$0xf]
  %v447 = vld [vmem:[%s1 + $0x660] sm:$0xf]
  %v448 = vld [vmem:[%s1 + $0x664] sm:$0xf]
  %v449 = vld [vmem:[%s1 + $0x668] sm:$0xf]
  %v450 = vld [vmem:[%s1 + $0x66c] sm:$0xf]
  %v451 = vld [vmem:[%s1 + $0x670] sm:$0xf]
  %v452 = vld [vmem:[%s1 + $0x674] sm:$0xf]
  %v453 = vld [vmem:[%s1 + $0x678] sm:$0xf]
  %v454 = vld [vmem:[%s1 + $0x67c] sm:$0xf]
  %v455 = vld [vmem:[%s1 + $0x680] sm:$0xf]
  %v456 = vld [vmem:[%s1 + $0x684] sm:$0xf]
  %v457 = vld [vmem:[%s1 + $0x688] sm:$0xf]
  %v458 = vld [vmem:[%s1 + $0x68c] sm:$0xf]
  %v459 = vld [vmem:[%s1 + $0x690] sm:$0xf]
  %v460 = vld [vmem:[%s1 + $0x694] sm:$0xf]
  %v461 = vld [vmem:[%s1 + $0x698] sm:$0xf]
  %v462 = vld [vmem:[%s1 + $0x69c] sm:$0xf]
  %v463 = vld [vmem:[%s1 + $0x6a0] sm:$0xf]
  %v464 = vld [vmem:[%s1 + $0x6a4] sm:$0xf]
  %v465 = vld [vmem:[%s1 + $0x6a8] sm:$0xf]
  %v466 = vld [vmem:[%s1 + $0x6ac] sm:$0xf]
  %v467 = vld [vmem:[%s1 + $0x6b0] sm:$0xf]
  %v468 = vld [vmem:[%s1 + $0x6b4] sm:$0xf]
  %v469 = vld [vmem:[%s1 + $0x6b8] sm:$0xf]
  %v470 = vld [vmem:[%s1 + $0x6bc] sm:$0xf]
  %v471 = vld [vmem:[%s1 + $0x6c0] sm:$0xf]
  %v472 = vld [vmem:[%s1 + $0x6c4] sm:$0xf]
  %v473 = vld [vmem:[%s1 + $0x6c8] sm:$0xf]
  %v474 = vld [vmem:[%s1 + $0x6cc] sm:$0xf]
  %v475 = vld [vmem:[%s1 + $0x6d0] sm:$0xf]
  %v476 = vld [vmem:[%s1 + $0x6d4] sm:$0xf]
  %v477 = vld [vmem:[%s1 + $0x6d8] sm:$0xf]
  %v478 = vld [vmem:[%s1 + $0x6dc] sm:$0xf]
  %v479 = vld [vmem:[%s1 + $0x6e0] sm:$0xf]
  %v480 = vld [vmem:[%s1 + $0x6e4] sm:$0xf]
  %v481 = vld [vmem:[%s1 + $0x6e8] sm:$0xf]
  %v482 = vld [vmem:[%s1 + $0x6ec] sm:$0xf]
  %v483 = vld [vmem:[%s1 + $0x6f0] sm:$0xf]
  %v484 = vld [vmem:[%s1 + $0x6f4] sm:$0xf]
  %v485 = vld [vmem:[%s1 + $0x6f8] sm:$0xf]
  %v486 = vld [vmem:[%s1 + $0x6fc] sm:$0xf]
  %v487 = vld [vmem:[%s1 + $0x700] sm:$0xf]
  %v488 = vld [vmem:[%s1 + $0x704] sm:$0xf]
  %v489 = vld [vmem:[%s1 + $0x708] sm:$0xf]
  %v490 = vld [vmem:[%s1 + $0x70c] sm:$0xf]
  %v491 = vld [vmem:[%s1 + $0x710] sm:$0xf]
  %v492 = vld [vmem:[%s1 + $0x714] sm:$0xf]
  %v493 = vld [vmem:[%s1 + $0x718] sm:$0xf]
  %v494 = vld [vmem:[%s1 + $0x71c] sm:$0xf]
  %v495 = vld [vmem:[%s1 + $0x720] sm:$0xf]
  %v496 = vld [vmem:[%s1 + $0x724] sm:$0xf]
  %v497 = vld [vmem:[%s1 + $0x728] sm:$0xf]
  %v498 = vld [vmem:[%s1 + $0x72c] sm:$0xf]
  %v499 = vld [vmem:[%s1 + $0x730] sm:$0xf]
  %v500 = vld [vmem:[%s1 + $0x734] sm:$0xf]
  %v501 = vld [vmem:[%s1 + $0x738] sm:$0xf]
  %v502 = vld [vmem:[%s1 + $0x73c] sm:$0xf]
  %v503 = vld [vmem:[%s1 + $0x740] sm:$0xf]
  %v504 = vld [vmem:[%s1 + $0x744] sm:$0xf]
  %v505 = vld [vmem:[%s1 + $0x748] sm:$0xf]
  %v506 = vld [vmem:[%s1 + $0x74c] sm:$0xf]
  %v507 = vld [vmem:[%s1 + $0x750] sm:$0xf]
  %v508 = vld [vmem:[%s1 + $0x754] sm:$0xf]
  %v509 = vld [vmem:[%s1 + $0x758] sm:$0xf]
  %v510 = vld [vmem:[%s1 + $0x75c] sm:$0xf]
  %v511 = vld [vmem:[%s1 + $0x760] sm:$0xf]
  %v512 = vld [vmem:[%s1 + $0x764] sm:$0xf]
  %v513 = vld [vmem:[%s1 + $0x768] sm:$0xf]
  %v514 = vld [vmem:[%s1 + $0x76c] sm:$0xf]
  %v515 = vld [vmem:[%s1 + $0x770] sm:$0xf]
  %v516 = vld [vmem:[%s1 + $0x774] sm:$0xf]
  %v517 = vld [vmem:[%s1 + $0x778] sm:$0xf]
  %v518 = vld [vmem:[%s1 + $0x77c] sm:$0xf]
  %v519 = vld [vmem:[%s1 + $0x780] sm:$0xf]
  %v520 = vld [vmem:[%s1 + $0x784] sm:$0xf]
  %v521 = vld [vmem:[%s1 + $0x788] sm:$0xf]
  %v522 = vld [vmem:[%s1 + $0x78c] sm:$0xf]
  %v523 = vld [vmem:[%s1 + $0x790] sm:$0xf]
  %v524 = vld [vmem:[%s1 + $0x794] sm:$0xf]
  %v525 = vld [vmem:[%s1 + $0x798] sm:$0xf]
  %v526 = vld [vmem:[%s1 + $0x79c] sm:$0xf]
  %v527 = vld [vmem:[%s1 + $0x7a0] sm:$0xf]
  %v528 = vld [vmem:[%s1 + $0x7a4] sm:$0xf]
  %v529 = vld [vmem:[%s1 + $0x7a8] sm:$0xf]
  %v530 = vld [vmem:[%s1 + $0x7ac] sm:$0xf]
  %v531 = vld [vmem:[%s1 + $0x7b0] sm:$0xf]
  %v532 = vld [vmem:[%s1 + $0x7b4] sm:$0xf]
  %v533 = vld [vmem:[%s1 + $0x7b8] sm:$0xf]
  %v534 = vld [vmem:[%s1 + $0x7bc] sm:$0xf]
  %v535 = vld [vmem:[%s1 + $0x7c0] sm:$0xf]
  %v536 = vld [vmem:[%s1 + $0x7c4] sm:$0xf]
  %v537 = vld [vmem:[%s1 + $0x7c8] sm:$0xf]
  %v538 = vld [vmem:[%s1 + $0x7cc] sm:$0xf]
  %v539 = vld [vmem:[%s1 + $0x7d0] sm:$0xf]
  %v540 = vld [vmem:[%s1 + $0x7d4] sm:$0xf]
  %v541 = vld [vmem:[%s1 + $0x7d8] sm:$0xf]
  %v542 = vld [vmem:[%s1 + $0x7dc] sm:$0xf]
  %v543 = vld [vmem:[%s1 + $0x7e0] sm:$0xf]
  %v544 = vld [vmem:[%s1 + $0x7e4] sm:$0xf]
  %v545 = vld [vmem:[%s1 + $0x7e8] sm:$0xf]
  %v546 = vld [vmem:[%s1 + $0x7ec] sm:$0xf]
  %v547 = vld [vmem:[%s1 + $0x7f0] sm:$0xf]
  %v548 = vld [vmem:[%s1 + $0x7f4] sm:$0xf]
  %v549 = vld [vmem:[%s1 + $0x7f8] sm:$0xf]
  %v550 = vld [vmem:[%s1 + $0x7fc] sm:$0xf]
  %v551 = vld [vmem:[%s2] sm:$0x1]
  %v553 = vlaneseq
  %v554 = vshrl.u32 %v553, 7
  %v555 = vsub.s32 0, %v554
  %v556 = vrot.slane %v551, %v555
  %v574 = vunpack.c.l.b16 %v23
  %v575 = vunpack.c.h.b16 %v23
  %v576 = vunpack.c.l.b16 %v24
  %v577 = vunpack.c.h.b16 %v24
  %v578 = vunpack.c.l.b16 %v25
  %v579 = vunpack.c.h.b16 %v25
  %v580 = vunpack.c.l.b16 %v26
  %v581 = vunpack.c.h.b16 %v26
  %v582 = vunpack.c.l.b16 %v27
  %v583 = vunpack.c.h.b16 %v27
  %v584 = vunpack.c.l.b16 %v28
  %v585 = vunpack.c.h.b16 %v28
  %v586 = vunpack.c.l.b16 %v29
  %v587 = vunpack.c.h.b16 %v29
  %v588 = vunpack.c.l.b16 %v30
  %v589 = vunpack.c.h.b16 %v30
  %v590 = vunpack.c.l.b16 %v31
  %v591 = vunpack.c.h.b16 %v31
  %v592 = vunpack.c.l.b16 %v32
  %v593 = vunpack.c.h.b16 %v32
  %v594 = vunpack.c.l.b16 %v33
  %v595 = vunpack.c.h.b16 %v33
  %v596 = vunpack.c.l.b16 %v34
  %v597 = vunpack.c.h.b16 %v34
  %v598 = vunpack.c.l.b16 %v35
  %v599 = vunpack.c.h.b16 %v35
  %v600 = vunpack.c.l.b16 %v36
  %v601 = vunpack.c.h.b16 %v36
  %v602 = vunpack.c.l.b16 %v37
  %v603 = vunpack.c.h.b16 %v37
  %v604 = vunpack.c.l.b16 %v38
  %v605 = vunpack.c.h.b16 %v38
  %v606 = vpack.c.b16 %v574, %v574
  %v607 = vpack.c.b16 %v575, %v575
  %v608 = vpack.c.b16 %v576, %v576
  %v609 = vpack.c.b16 %v577, %v577
  %v610 = vpack.c.b16 %v578, %v578
  %v611 = vpack.c.b16 %v579, %v579
  %v612 = vpack.c.b16 %v580, %v580
  %v613 = vpack.c.b16 %v581, %v581
  %v614 = vpack.c.b16 %v582, %v582
  %v615 = vpack.c.b16 %v583, %v583
  %v616 = vpack.c.b16 %v584, %v584
  %v617 = vpack.c.b16 %v585, %v585
  %v618 = vpack.c.b16 %v586, %v586
  %v619 = vpack.c.b16 %v587, %v587
  %v620 = vpack.c.b16 %v588, %v588
  %v621 = vpack.c.b16 %v589, %v589
  %v622 = vpack.c.b16 %v590, %v590
  %v623 = vpack.c.b16 %v591, %v591
  %v624 = vpack.c.b16 %v592, %v592
  %v625 = vpack.c.b16 %v593, %v593
  %v626 = vpack.c.b16 %v594, %v594
  %v627 = vpack.c.b16 %v595, %v595
  %v628 = vpack.c.b16 %v596, %v596
  %v629 = vpack.c.b16 %v597, %v597
  %v630 = vpack.c.b16 %v598, %v598
  %v631 = vpack.c.b16 %v599, %v599
  %v632 = vpack.c.b16 %v600, %v600
  %v633 = vpack.c.b16 %v601, %v601
  %v634 = vpack.c.b16 %v602, %v602
  %v635 = vpack.c.b16 %v603, %v603
  %v636 = vpack.c.b16 %v604, %v604
  %v637 = vpack.c.b16 %v605, %v605
  %v1182 = vunpack.c.l.b16 %v39
  %v1183 = vunpack.c.l.b16 %v40
  %v1184 = vunpack.c.l.b16 %v41
  %v1185 = vunpack.c.l.b16 %v42
  %v1186 = vunpack.c.l.b16 %v43
  %v1187 = vunpack.c.l.b16 %v44
  %v1188 = vunpack.c.l.b16 %v45
  %v1189 = vunpack.c.l.b16 %v46
  %v1190 = vunpack.c.l.b16 %v47
  %v1191 = vunpack.c.l.b16 %v48
  %v1192 = vunpack.c.l.b16 %v49
  %v1193 = vunpack.c.l.b16 %v50
  %v1194 = vunpack.c.l.b16 %v51
  %v1195 = vunpack.c.l.b16 %v52
  %v1196 = vunpack.c.l.b16 %v53
  %v1197 = vunpack.c.l.b16 %v54
  %v1198 = vunpack.c.l.b16 %v55
  %v1199 = vunpack.c.l.b16 %v56
  %v1200 = vunpack.c.l.b16 %v57
  %v1201 = vunpack.c.l.b16 %v58
  %v1202 = vunpack.c.l.b16 %v59
  %v1203 = vunpack.c.l.b16 %v60
  %v1204 = vunpack.c.l.b16 %v61
  %v1205 = vunpack.c.l.b16 %v62
  %v1206 = vunpack.c.l.b16 %v63
  %v1207 = vunpack.c.l.b16 %v64
  %v1208 = vunpack.c.l.b16 %v65
  %v1209 = vunpack.c.l.b16 %v66
  %v1210 = vunpack.c.l.b16 %v67
  %v1211 = vunpack.c.l.b16 %v68
  %v1212 = vunpack.c.l.b16 %v69
  %v1213 = vunpack.c.l.b16 %v70
  %v1214 = vunpack.c.l.b16 %v71
  %v1215 = vunpack.c.l.b16 %v72
  %v1216 = vunpack.c.l.b16 %v73
  %v1217 = vunpack.c.l.b16 %v74
  %v1218 = vunpack.c.l.b16 %v75
  %v1219 = vunpack.c.l.b16 %v76
  %v1220 = vunpack.c.l.b16 %v77
  %v1221 = vunpack.c.l.b16 %v78
  %v1222 = vunpack.c.l.b16 %v79
  %v1223 = vunpack.c.l.b16 %v80
  %v1224 = vunpack.c.l.b16 %v81
  %v1225 = vunpack.c.l.b16 %v82
  %v1226 = vunpack.c.l.b16 %v83
  %v1227 = vunpack.c.l.b16 %v84
  %v1228 = vunpack.c.l.b16 %v85
  %v1229 = vunpack.c.l.b16 %v86
  %v1230 = vunpack.c.l.b16 %v87
  %v1231 = vunpack.c.l.b16 %v88
  %v1232 = vunpack.c.l.b16 %v89
  %v1233 = vunpack.c.l.b16 %v90
  %v1234 = vunpack.c.l.b16 %v91
  %v1235 = vunpack.c.l.b16 %v92
  %v1236 = vunpack.c.l.b16 %v93
  %v1237 = vunpack.c.l.b16 %v94
  %v1238 = vunpack.c.l.b16 %v95
  %v1239 = vunpack.c.l.b16 %v96
  %v1240 = vunpack.c.l.b16 %v97
  %v1241 = vunpack.c.l.b16 %v98
  %v1242 = vunpack.c.l.b16 %v99
  %v1243 = vunpack.c.l.b16 %v100
  %v1244 = vunpack.c.l.b16 %v101
  %v1245 = vunpack.c.l.b16 %v102
  %v1246 = vunpack.c.l.b16 %v103
  %v1247 = vunpack.c.l.b16 %v104
  %v1248 = vunpack.c.l.b16 %v105
  %v1249 = vunpack.c.l.b16 %v106
  %v1250 = vunpack.c.l.b16 %v107
  %v1251 = vunpack.c.l.b16 %v108
  %v1252 = vunpack.c.l.b16 %v109
  %v1253 = vunpack.c.l.b16 %v110
  %v1254 = vunpack.c.l.b16 %v111
  %v1255 = vunpack.c.l.b16 %v112
  %v1256 = vunpack.c.l.b16 %v113
  %v1257 = vunpack.c.l.b16 %v114
  %v1258 = vunpack.c.l.b16 %v115
  %v1259 = vunpack.c.l.b16 %v116
  %v1260 = vunpack.c.l.b16 %v117
  %v1261 = vunpack.c.l.b16 %v118
  %v1262 = vunpack.c.l.b16 %v119
  %v1263 = vunpack.c.l.b16 %v120
  %v1264 = vunpack.c.l.b16 %v121
  %v1265 = vunpack.c.l.b16 %v122
  %v1266 = vunpack.c.l.b16 %v123
  %v1267 = vunpack.c.l.b16 %v124
  %v1268 = vunpack.c.l.b16 %v125
  %v1269 = vunpack.c.l.b16 %v126
  %v1270 = vunpack.c.l.b16 %v127
  %v1271 = vunpack.c.l.b16 %v128
  %v1272 = vunpack.c.l.b16 %v129
  %v1273 = vunpack.c.l.b16 %v130
  %v1274 = vunpack.c.l.b16 %v131
  %v1275 = vunpack.c.l.b16 %v132
  %v1276 = vunpack.c.l.b16 %v133
  %v1277 = vunpack.c.l.b16 %v134
  %v1278 = vunpack.c.l.b16 %v135
  %v1279 = vunpack.c.l.b16 %v136
  %v1280 = vunpack.c.l.b16 %v137
  %v1281 = vunpack.c.l.b16 %v138
  %v1282 = vunpack.c.l.b16 %v139
  %v1283 = vunpack.c.l.b16 %v140
  %v1284 = vunpack.c.l.b16 %v141
  %v1285 = vunpack.c.l.b16 %v142
  %v1286 = vunpack.c.l.b16 %v143
  %v1287 = vunpack.c.l.b16 %v144
  %v1288 = vunpack.c.l.b16 %v145
  %v1289 = vunpack.c.l.b16 %v146
  %v1290 = vunpack.c.l.b16 %v147
  %v1291 = vunpack.c.l.b16 %v148
  %v1292 = vunpack.c.l.b16 %v149
  %v1293 = vunpack.c.l.b16 %v150
  %v1294 = vunpack.c.l.b16 %v151
  %v1295 = vunpack.c.l.b16 %v152
  %v1296 = vunpack.c.l.b16 %v153
  %v1297 = vunpack.c.l.b16 %v154
  %v1298 = vunpack.c.l.b16 %v155
  %v1299 = vunpack.c.l.b16 %v156
  %v1300 = vunpack.c.l.b16 %v157
  %v1301 = vunpack.c.l.b16 %v158
  %v1302 = vunpack.c.l.b16 %v159
  %v1303 = vunpack.c.l.b16 %v160
  %v1304 = vunpack.c.l.b16 %v161
  %v1305 = vunpack.c.l.b16 %v162
  %v1306 = vunpack.c.l.b16 %v163
  %v1307 = vunpack.c.l.b16 %v164
  %v1308 = vunpack.c.l.b16 %v165
  %v1309 = vunpack.c.l.b16 %v166
  %v1310 = vunpack.c.l.b16 %v167
  %v1311 = vunpack.c.l.b16 %v168
  %v1312 = vunpack.c.l.b16 %v169
  %v1313 = vunpack.c.l.b16 %v170
  %v1314 = vunpack.c.l.b16 %v171
  %v1315 = vunpack.c.l.b16 %v172
  %v1316 = vunpack.c.l.b16 %v173
  %v1317 = vunpack.c.l.b16 %v174
  %v1318 = vunpack.c.l.b16 %v175
  %v1319 = vunpack.c.l.b16 %v176
  %v1320 = vunpack.c.l.b16 %v177
  %v1321 = vunpack.c.l.b16 %v178
  %v1322 = vunpack.c.l.b16 %v179
  %v1323 = vunpack.c.l.b16 %v180
  %v1324 = vunpack.c.l.b16 %v181
  %v1325 = vunpack.c.l.b16 %v182
  %v1326 = vunpack.c.l.b16 %v183
  %v1327 = vunpack.c.l.b16 %v184
  %v1328 = vunpack.c.l.b16 %v185
  %v1329 = vunpack.c.l.b16 %v186
  %v1330 = vunpack.c.l.b16 %v187
  %v1331 = vunpack.c.l.b16 %v188
  %v1332 = vunpack.c.l.b16 %v189
  %v1333 = vunpack.c.l.b16 %v190
  %v1334 = vunpack.c.l.b16 %v191
  %v1335 = vunpack.c.l.b16 %v192
  %v1336 = vunpack.c.l.b16 %v193
  %v1337 = vunpack.c.l.b16 %v194
  %v1338 = vunpack.c.l.b16 %v195
  %v1339 = vunpack.c.l.b16 %v196
  %v1340 = vunpack.c.l.b16 %v197
  %v1341 = vunpack.c.l.b16 %v198
  %v1342 = vunpack.c.l.b16 %v199
  %v1343 = vunpack.c.l.b16 %v200
  %v1344 = vunpack.c.l.b16 %v201
  %v1345 = vunpack.c.l.b16 %v202
  %v1346 = vunpack.c.l.b16 %v203
  %v1347 = vunpack.c.l.b16 %v204
  %v1348 = vunpack.c.l.b16 %v205
  %v1349 = vunpack.c.l.b16 %v206
  %v1350 = vunpack.c.l.b16 %v207
  %v1351 = vunpack.c.l.b16 %v208
  %v1352 = vunpack.c.l.b16 %v209
  %v1353 = vunpack.c.l.b16 %v210
  %v1354 = vunpack.c.l.b16 %v211
  %v1355 = vunpack.c.l.b16 %v212
  %v1356 = vunpack.c.l.b16 %v213
  %v1357 = vunpack.c.l.b16 %v214
  %v1358 = vunpack.c.l.b16 %v215
  %v1359 = vunpack.c.l.b16 %v216
  %v1360 = vunpack.c.l.b16 %v217
  %v1361 = vunpack.c.l.b16 %v218
  %v1362 = vunpack.c.l.b16 %v219
  %v1363 = vunpack.c.l.b16 %v220
  %v1364 = vunpack.c.l.b16 %v221
  %v1365 = vunpack.c.l.b16 %v222
  %v1366 = vunpack.c.l.b16 %v223
  %v1367 = vunpack.c.l.b16 %v224
  %v1368 = vunpack.c.l.b16 %v225
  %v1369 = vunpack.c.l.b16 %v226
  %v1370 = vunpack.c.l.b16 %v227
  %v1371 = vunpack.c.l.b16 %v228
  %v1372 = vunpack.c.l.b16 %v229
  %v1373 = vunpack.c.l.b16 %v230
  %v1374 = vunpack.c.l.b16 %v231
  %v1375 = vunpack.c.l.b16 %v232
  %v1376 = vunpack.c.l.b16 %v233
  %v1377 = vunpack.c.l.b16 %v234
  %v1378 = vunpack.c.l.b16 %v235
  %v1379 = vunpack.c.l.b16 %v236
  %v1380 = vunpack.c.l.b16 %v237
  %v1381 = vunpack.c.l.b16 %v238
  %v1382 = vunpack.c.l.b16 %v239
  %v1383 = vunpack.c.l.b16 %v240
  %v1384 = vunpack.c.l.b16 %v241
  %v1385 = vunpack.c.l.b16 %v242
  %v1386 = vunpack.c.l.b16 %v243
  %v1387 = vunpack.c.l.b16 %v244
  %v1388 = vunpack.c.l.b16 %v245
  %v1389 = vunpack.c.l.b16 %v246
  %v1390 = vunpack.c.l.b16 %v247
  %v1391 = vunpack.c.l.b16 %v248
  %v1392 = vunpack.c.l.b16 %v249
  %v1393 = vunpack.c.l.b16 %v250
  %v1394 = vunpack.c.l.b16 %v251
  %v1395 = vunpack.c.l.b16 %v252
  %v1396 = vunpack.c.l.b16 %v253
  %v1397 = vunpack.c.l.b16 %v254
  %v1398 = vunpack.c.l.b16 %v255
  %v1399 = vunpack.c.l.b16 %v256
  %v1400 = vunpack.c.l.b16 %v257
  %v1401 = vunpack.c.l.b16 %v258
  %v1402 = vunpack.c.l.b16 %v259
  %v1403 = vunpack.c.l.b16 %v260
  %v1404 = vunpack.c.l.b16 %v261
  %v1405 = vunpack.c.l.b16 %v262
  %v1406 = vunpack.c.l.b16 %v263
  %v1407 = vunpack.c.l.b16 %v264
  %v1408 = vunpack.c.l.b16 %v265
  %v1409 = vunpack.c.l.b16 %v266
  %v1410 = vunpack.c.l.b16 %v267
  %v1411 = vunpack.c.l.b16 %v268
  %v1412 = vunpack.c.l.b16 %v269
  %v1413 = vunpack.c.l.b16 %v270
  %v1414 = vunpack.c.l.b16 %v271
  %v1415 = vunpack.c.l.b16 %v272
  %v1416 = vunpack.c.l.b16 %v273
  %v1417 = vunpack.c.l.b16 %v274
  %v1418 = vunpack.c.l.b16 %v275
  %v1419 = vunpack.c.l.b16 %v276
  %v1420 = vunpack.c.l.b16 %v277
  %v1421 = vunpack.c.l.b16 %v278
  %v1422 = vunpack.c.l.b16 %v279
  %v1423 = vunpack.c.l.b16 %v280
  %v1424 = vunpack.c.l.b16 %v281
  %v1425 = vunpack.c.l.b16 %v282
  %v1426 = vunpack.c.l.b16 %v283
  %v1427 = vunpack.c.l.b16 %v284
  %v1428 = vunpack.c.l.b16 %v285
  %v1429 = vunpack.c.l.b16 %v286
  %v1430 = vunpack.c.l.b16 %v287
  %v1431 = vunpack.c.l.b16 %v288
  %v1432 = vunpack.c.l.b16 %v289
  %v1433 = vunpack.c.l.b16 %v290
  %v1434 = vunpack.c.l.b16 %v291
  %v1435 = vunpack.c.l.b16 %v292
  %v1436 = vunpack.c.l.b16 %v293
  %v1437 = vunpack.c.l.b16 %v294
  %v1438 = vunpack.c.l.b16 %v295
  %v1439 = vunpack.c.l.b16 %v296
  %v1440 = vunpack.c.l.b16 %v297
  %v1441 = vunpack.c.l.b16 %v298
  %v1442 = vunpack.c.l.b16 %v299
  %v1443 = vunpack.c.l.b16 %v300
  %v1444 = vunpack.c.l.b16 %v301
  %v1445 = vunpack.c.l.b16 %v302
  %v1446 = vunpack.c.l.b16 %v303
  %v1447 = vunpack.c.l.b16 %v304
  %v1448 = vunpack.c.l.b16 %v305
  %v1449 = vunpack.c.l.b16 %v306
  %v1450 = vunpack.c.l.b16 %v307
  %v1451 = vunpack.c.l.b16 %v308
  %v1452 = vunpack.c.l.b16 %v309
  %v1453 = vunpack.c.l.b16 %v310
  %v1454 = vunpack.c.l.b16 %v311
  %v1455 = vunpack.c.l.b16 %v312
  %v1456 = vunpack.c.l.b16 %v313
  %v1457 = vunpack.c.l.b16 %v314
  %v1458 = vunpack.c.l.b16 %v315
  %v1459 = vunpack.c.l.b16 %v316
  %v1460 = vunpack.c.l.b16 %v317
  %v1461 = vunpack.c.l.b16 %v318
  %v1462 = vunpack.c.l.b16 %v319
  %v1463 = vunpack.c.l.b16 %v320
  %v1464 = vunpack.c.l.b16 %v321
  %v1465 = vunpack.c.l.b16 %v322
  %v1466 = vunpack.c.l.b16 %v323
  %v1467 = vunpack.c.l.b16 %v324
  %v1468 = vunpack.c.l.b16 %v325
  %v1469 = vunpack.c.l.b16 %v326
  %v1470 = vunpack.c.l.b16 %v327
  %v1471 = vunpack.c.l.b16 %v328
  %v1472 = vunpack.c.l.b16 %v329
  %v1473 = vunpack.c.l.b16 %v330
  %v1474 = vunpack.c.l.b16 %v331
  %v1475 = vunpack.c.l.b16 %v332
  %v1476 = vunpack.c.l.b16 %v333
  %v1477 = vunpack.c.l.b16 %v334
  %v1478 = vunpack.c.l.b16 %v335
  %v1479 = vunpack.c.l.b16 %v336
  %v1480 = vunpack.c.l.b16 %v337
  %v1481 = vunpack.c.l.b16 %v338
  %v1482 = vunpack.c.l.b16 %v339
  %v1483 = vunpack.c.l.b16 %v340
  %v1484 = vunpack.c.l.b16 %v341
  %v1485 = vunpack.c.l.b16 %v342
  %v1486 = vunpack.c.l.b16 %v343
  %v1487 = vunpack.c.l.b16 %v344
  %v1488 = vunpack.c.l.b16 %v345
  %v1489 = vunpack.c.l.b16 %v346
  %v1490 = vunpack.c.l.b16 %v347
  %v1491 = vunpack.c.l.b16 %v348
  %v1492 = vunpack.c.l.b16 %v349
  %v1493 = vunpack.c.l.b16 %v350
  %v1494 = vunpack.c.l.b16 %v351
  %v1495 = vunpack.c.l.b16 %v352
  %v1496 = vunpack.c.l.b16 %v353
  %v1497 = vunpack.c.l.b16 %v354
  %v1498 = vunpack.c.l.b16 %v355
  %v1499 = vunpack.c.l.b16 %v356
  %v1500 = vunpack.c.l.b16 %v357
  %v1501 = vunpack.c.l.b16 %v358
  %v1502 = vunpack.c.l.b16 %v359
  %v1503 = vunpack.c.l.b16 %v360
  %v1504 = vunpack.c.l.b16 %v361
  %v1505 = vunpack.c.l.b16 %v362
  %v1506 = vunpack.c.l.b16 %v363
  %v1507 = vunpack.c.l.b16 %v364
  %v1508 = vunpack.c.l.b16 %v365
  %v1509 = vunpack.c.l.b16 %v366
  %v1510 = vunpack.c.l.b16 %v367
  %v1511 = vunpack.c.l.b16 %v368
  %v1512 = vunpack.c.l.b16 %v369
  %v1513 = vunpack.c.l.b16 %v370
  %v1514 = vunpack.c.l.b16 %v371
  %v1515 = vunpack.c.l.b16 %v372
  %v1516 = vunpack.c.l.b16 %v373
  %v1517 = vunpack.c.l.b16 %v374
  %v1518 = vunpack.c.l.b16 %v375
  %v1519 = vunpack.c.l.b16 %v376
  %v1520 = vunpack.c.l.b16 %v377
  %v1521 = vunpack.c.l.b16 %v378
  %v1522 = vunpack.c.l.b16 %v379
  %v1523 = vunpack.c.l.b16 %v380
  %v1524 = vunpack.c.l.b16 %v381
  %v1525 = vunpack.c.l.b16 %v382
  %v1526 = vunpack.c.l.b16 %v383
  %v1527 = vunpack.c.l.b16 %v384
  %v1528 = vunpack.c.l.b16 %v385
  %v1529 = vunpack.c.l.b16 %v386
  %v1530 = vunpack.c.l.b16 %v387
  %v1531 = vunpack.c.l.b16 %v388
  %v1532 = vunpack.c.l.b16 %v389
  %v1533 = vunpack.c.l.b16 %v390
  %v1534 = vunpack.c.l.b16 %v391
  %v1535 = vunpack.c.l.b16 %v392
  %v1536 = vunpack.c.l.b16 %v393
  %v1537 = vunpack.c.l.b16 %v394
  %v1538 = vunpack.c.l.b16 %v395
  %v1539 = vunpack.c.l.b16 %v396
  %v1540 = vunpack.c.l.b16 %v397
  %v1541 = vunpack.c.l.b16 %v398
  %v1542 = vunpack.c.l.b16 %v399
  %v1543 = vunpack.c.l.b16 %v400
  %v1544 = vunpack.c.l.b16 %v401
  %v1545 = vunpack.c.l.b16 %v402
  %v1546 = vunpack.c.l.b16 %v403
  %v1547 = vunpack.c.l.b16 %v404
  %v1548 = vunpack.c.l.b16 %v405
  %v1549 = vunpack.c.l.b16 %v406
  %v1550 = vunpack.c.l.b16 %v407
  %v1551 = vunpack.c.l.b16 %v408
  %v1552 = vunpack.c.l.b16 %v409
  %v1553 = vunpack.c.l.b16 %v410
  %v1554 = vunpack.c.l.b16 %v411
  %v1555 = vunpack.c.l.b16 %v412
  %v1556 = vunpack.c.l.b16 %v413
  %v1557 = vunpack.c.l.b16 %v414
  %v1558 = vunpack.c.l.b16 %v415
  %v1559 = vunpack.c.l.b16 %v416
  %v1560 = vunpack.c.l.b16 %v417
  %v1561 = vunpack.c.l.b16 %v418
  %v1562 = vunpack.c.l.b16 %v419
  %v1563 = vunpack.c.l.b16 %v420
  %v1564 = vunpack.c.l.b16 %v421
  %v1565 = vunpack.c.l.b16 %v422
  %v1566 = vunpack.c.l.b16 %v423
  %v1567 = vunpack.c.l.b16 %v424
  %v1568 = vunpack.c.l.b16 %v425
  %v1569 = vunpack.c.l.b16 %v426
  %v1570 = vunpack.c.l.b16 %v427
  %v1571 = vunpack.c.l.b16 %v428
  %v1572 = vunpack.c.l.b16 %v429
  %v1573 = vunpack.c.l.b16 %v430
  %v1574 = vunpack.c.l.b16 %v431
  %v1575 = vunpack.c.l.b16 %v432
  %v1576 = vunpack.c.l.b16 %v433
  %v1577 = vunpack.c.l.b16 %v434
  %v1578 = vunpack.c.l.b16 %v435
  %v1579 = vunpack.c.l.b16 %v436
  %v1580 = vunpack.c.l.b16 %v437
  %v1581 = vunpack.c.l.b16 %v438
  %v1582 = vunpack.c.l.b16 %v439
  %v1583 = vunpack.c.l.b16 %v440
  %v1584 = vunpack.c.l.b16 %v441
  %v1585 = vunpack.c.l.b16 %v442
  %v1586 = vunpack.c.l.b16 %v443
  %v1587 = vunpack.c.l.b16 %v444
  %v1588 = vunpack.c.l.b16 %v445
  %v1589 = vunpack.c.l.b16 %v446
  %v1590 = vunpack.c.l.b16 %v447
  %v1591 = vunpack.c.l.b16 %v448
  %v1592 = vunpack.c.l.b16 %v449
  %v1593 = vunpack.c.l.b16 %v450
  %v1594 = vunpack.c.l.b16 %v451
  %v1595 = vunpack.c.l.b16 %v452
  %v1596 = vunpack.c.l.b16 %v453
  %v1597 = vunpack.c.l.b16 %v454
  %v1598 = vunpack.c.l.b16 %v455
  %v1599 = vunpack.c.l.b16 %v456
  %v1600 = vunpack.c.l.b16 %v457
  %v1601 = vunpack.c.l.b16 %v458
  %v1602 = vunpack.c.l.b16 %v459
  %v1603 = vunpack.c.l.b16 %v460
  %v1604 = vunpack.c.l.b16 %v461
  %v1605 = vunpack.c.l.b16 %v462
  %v1606 = vunpack.c.l.b16 %v463
  %v1607 = vunpack.c.l.b16 %v464
  %v1608 = vunpack.c.l.b16 %v465
  %v1609 = vunpack.c.l.b16 %v466
  %v1610 = vunpack.c.l.b16 %v467
  %v1611 = vunpack.c.l.b16 %v468
  %v1612 = vunpack.c.l.b16 %v469
  %v1613 = vunpack.c.l.b16 %v470
  %v1614 = vunpack.c.l.b16 %v471
  %v1615 = vunpack.c.l.b16 %v472
  %v1616 = vunpack.c.l.b16 %v473
  %v1617 = vunpack.c.l.b16 %v474
  %v1618 = vunpack.c.l.b16 %v475
  %v1619 = vunpack.c.l.b16 %v476
  %v1620 = vunpack.c.l.b16 %v477
  %v1621 = vunpack.c.l.b16 %v478
  %v1622 = vunpack.c.l.b16 %v479
  %v1623 = vunpack.c.l.b16 %v480
  %v1624 = vunpack.c.l.b16 %v481
  %v1625 = vunpack.c.l.b16 %v482
  %v1626 = vunpack.c.l.b16 %v483
  %v1627 = vunpack.c.l.b16 %v484
  %v1628 = vunpack.c.l.b16 %v485
  %v1629 = vunpack.c.l.b16 %v486
  %v1630 = vunpack.c.l.b16 %v487
  %v1631 = vunpack.c.l.b16 %v488
  %v1632 = vunpack.c.l.b16 %v489
  %v1633 = vunpack.c.l.b16 %v490
  %v1634 = vunpack.c.l.b16 %v491
  %v1635 = vunpack.c.l.b16 %v492
  %v1636 = vunpack.c.l.b16 %v493
  %v1637 = vunpack.c.l.b16 %v494
  %v1638 = vunpack.c.l.b16 %v495
  %v1639 = vunpack.c.l.b16 %v496
  %v1640 = vunpack.c.l.b16 %v497
  %v1641 = vunpack.c.l.b16 %v498
  %v1642 = vunpack.c.l.b16 %v499
  %v1643 = vunpack.c.l.b16 %v500
  %v1644 = vunpack.c.l.b16 %v501
  %v1645 = vunpack.c.l.b16 %v502
  %v1646 = vunpack.c.l.b16 %v503
  %v1647 = vunpack.c.l.b16 %v504
  %v1648 = vunpack.c.l.b16 %v505
  %v1649 = vunpack.c.l.b16 %v506
  %v1650 = vunpack.c.l.b16 %v507
  %v1651 = vunpack.c.l.b16 %v508
  %v1652 = vunpack.c.l.b16 %v509
  %v1653 = vunpack.c.l.b16 %v510
  %v1654 = vunpack.c.l.b16 %v511
  %v1655 = vunpack.c.l.b16 %v512
  %v1656 = vunpack.c.l.b16 %v513
  %v1657 = vunpack.c.l.b16 %v514
  %v1658 = vunpack.c.l.b16 %v515
  %v1659 = vunpack.c.l.b16 %v516
  %v1660 = vunpack.c.l.b16 %v517
  %v1661 = vunpack.c.l.b16 %v518
  %v1662 = vunpack.c.l.b16 %v519
  %v1663 = vunpack.c.l.b16 %v520
  %v1664 = vunpack.c.l.b16 %v521
  %v1665 = vunpack.c.l.b16 %v522
  %v1666 = vunpack.c.l.b16 %v523
  %v1667 = vunpack.c.l.b16 %v524
  %v1668 = vunpack.c.l.b16 %v525
  %v1669 = vunpack.c.l.b16 %v526
  %v1670 = vunpack.c.l.b16 %v527
  %v1671 = vunpack.c.l.b16 %v528
  %v1672 = vunpack.c.l.b16 %v529
  %v1673 = vunpack.c.l.b16 %v530
  %v1674 = vunpack.c.l.b16 %v531
  %v1675 = vunpack.c.l.b16 %v532
  %v1676 = vunpack.c.l.b16 %v533
  %v1677 = vunpack.c.l.b16 %v534
  %v1678 = vunpack.c.l.b16 %v535
  %v1679 = vunpack.c.l.b16 %v536
  %v1680 = vunpack.c.l.b16 %v537
  %v1681 = vunpack.c.l.b16 %v538
  %v1682 = vunpack.c.l.b16 %v539
  %v1683 = vunpack.c.l.b16 %v540
  %v1684 = vunpack.c.l.b16 %v541
  %v1685 = vunpack.c.l.b16 %v542
  %v1686 = vunpack.c.l.b16 %v543
  %v1687 = vunpack.c.l.b16 %v544
  %v1688 = vunpack.c.l.b16 %v545
  %v1689 = vunpack.c.l.b16 %v546
  %v1690 = vunpack.c.l.b16 %v547
  %v1691 = vunpack.c.l.b16 %v548
  %v1692 = vunpack.c.l.b16 %v549
  %v1693 = vunpack.c.l.b16 %v550
  %v1694 = vpack.c.b16 %v1183, %v1182
  %v1695 = vpack.c.b16 %v1185, %v1184
  %v1696 = vpack.c.b16 %v1187, %v1186
  %v1697 = vpack.c.b16 %v1189, %v1188
  %v1698 = vpack.c.b16 %v1191, %v1190
  %v1699 = vpack.c.b16 %v1193, %v1192
  %v1700 = vpack.c.b16 %v1195, %v1194
  %v1701 = vpack.c.b16 %v1197, %v1196
  %v1702 = vpack.c.b16 %v1199, %v1198
  %v1703 = vpack.c.b16 %v1201, %v1200
  %v1704 = vpack.c.b16 %v1203, %v1202
  %v1705 = vpack.c.b16 %v1205, %v1204
  %v1706 = vpack.c.b16 %v1207, %v1206
  %v1707 = vpack.c.b16 %v1209, %v1208
  %v1708 = vpack.c.b16 %v1211, %v1210
  %v1709 = vpack.c.b16 %v1213, %v1212
  %v1710 = vpack.c.b16 %v1215, %v1214
  %v1711 = vpack.c.b16 %v1217, %v1216
  %v1712 = vpack.c.b16 %v1219, %v1218
  %v1713 = vpack.c.b16 %v1221, %v1220
  %v1714 = vpack.c.b16 %v1223, %v1222
  %v1715 = vpack.c.b16 %v1225, %v1224
  %v1716 = vpack.c.b16 %v1227, %v1226
  %v1717 = vpack.c.b16 %v1229, %v1228
  %v1718 = vpack.c.b16 %v1231, %v1230
  %v1719 = vpack.c.b16 %v1233, %v1232
  %v1720 = vpack.c.b16 %v1235, %v1234
  %v1721 = vpack.c.b16 %v1237, %v1236
  %v1722 = vpack.c.b16 %v1239, %v1238
  %v1723 = vpack.c.b16 %v1241, %v1240
  %v1724 = vpack.c.b16 %v1243, %v1242
  %v1725 = vpack.c.b16 %v1245, %v1244
  %v1726 = vpack.c.b16 %v1247, %v1246
  %v1727 = vpack.c.b16 %v1249, %v1248
  %v1728 = vpack.c.b16 %v1251, %v1250
  %v1729 = vpack.c.b16 %v1253, %v1252
  %v1730 = vpack.c.b16 %v1255, %v1254
  %v1731 = vpack.c.b16 %v1257, %v1256
  %v1732 = vpack.c.b16 %v1259, %v1258
  %v1733 = vpack.c.b16 %v1261, %v1260
  %v1734 = vpack.c.b16 %v1263, %v1262
  %v1735 = vpack.c.b16 %v1265, %v1264
  %v1736 = vpack.c.b16 %v1267, %v1266
  %v1737 = vpack.c.b16 %v1269, %v1268
  %v1738 = vpack.c.b16 %v1271, %v1270
  %v1739 = vpack.c.b16 %v1273, %v1272
  %v1740 = vpack.c.b16 %v1275, %v1274
  %v1741 = vpack.c.b16 %v1277, %v1276
  %v1742 = vpack.c.b16 %v1279, %v1278
  %v1743 = vpack.c.b16 %v1281, %v1280
  %v1744 = vpack.c.b16 %v1283, %v1282
  %v1745 = vpack.c.b16 %v1285, %v1284
  %v1746 = vpack.c.b16 %v1287, %v1286
  %v1747 = vpack.c.b16 %v1289, %v1288
  %v1748 = vpack.c.b16 %v1291, %v1290
  %v1749 = vpack.c.b16 %v1293, %v1292
  %v1750 = vpack.c.b16 %v1295, %v1294
  %v1751 = vpack.c.b16 %v1297, %v1296
  %v1752 = vpack.c.b16 %v1299, %v1298
  %v1753 = vpack.c.b16 %v1301, %v1300
  %v1754 = vpack.c.b16 %v1303, %v1302
  %v1755 = vpack.c.b16 %v1305, %v1304
  %v1756 = vpack.c.b16 %v1307, %v1306
  %v1757 = vpack.c.b16 %v1309, %v1308
  %v1758 = vpack.c.b16 %v1311, %v1310
  %v1759 = vpack.c.b16 %v1313, %v1312
  %v1760 = vpack.c.b16 %v1315, %v1314
  %v1761 = vpack.c.b16 %v1317, %v1316
  %v1762 = vpack.c.b16 %v1319, %v1318
  %v1763 = vpack.c.b16 %v1321, %v1320
  %v1764 = vpack.c.b16 %v1323, %v1322
  %v1765 = vpack.c.b16 %v1325, %v1324
  %v1766 = vpack.c.b16 %v1327, %v1326
  %v1767 = vpack.c.b16 %v1329, %v1328
  %v1768 = vpack.c.b16 %v1331, %v1330
  %v1769 = vpack.c.b16 %v1333, %v1332
  %v1770 = vpack.c.b16 %v1335, %v1334
  %v1771 = vpack.c.b16 %v1337, %v1336
  %v1772 = vpack.c.b16 %v1339, %v1338
  %v1773 = vpack.c.b16 %v1341, %v1340
  %v1774 = vpack.c.b16 %v1343, %v1342
  %v1775 = vpack.c.b16 %v1345, %v1344
  %v1776 = vpack.c.b16 %v1347, %v1346
  %v1777 = vpack.c.b16 %v1349, %v1348
  %v1778 = vpack.c.b16 %v1351, %v1350
  %v1779 = vpack.c.b16 %v1353, %v1352
  %v1780 = vpack.c.b16 %v1355, %v1354
  %v1781 = vpack.c.b16 %v1357, %v1356
  %v1782 = vpack.c.b16 %v1359, %v1358
  %v1783 = vpack.c.b16 %v1361, %v1360
  %v1784 = vpack.c.b16 %v1363, %v1362
  %v1785 = vpack.c.b16 %v1365, %v1364
  %v1786 = vpack.c.b16 %v1367, %v1366
  %v1787 = vpack.c.b16 %v1369, %v1368
  %v1788 = vpack.c.b16 %v1371, %v1370
  %v1789 = vpack.c.b16 %v1373, %v1372
  %v1790 = vpack.c.b16 %v1375, %v1374
  %v1791 = vpack.c.b16 %v1377, %v1376
  %v1792 = vpack.c.b16 %v1379, %v1378
  %v1793 = vpack.c.b16 %v1381, %v1380
  %v1794 = vpack.c.b16 %v1383, %v1382
  %v1795 = vpack.c.b16 %v1385, %v1384
  %v1796 = vpack.c.b16 %v1387, %v1386
  %v1797 = vpack.c.b16 %v1389, %v1388
  %v1798 = vpack.c.b16 %v1391, %v1390
  %v1799 = vpack.c.b16 %v1393, %v1392
  %v1800 = vpack.c.b16 %v1395, %v1394
  %v1801 = vpack.c.b16 %v1397, %v1396
  %v1802 = vpack.c.b16 %v1399, %v1398
  %v1803 = vpack.c.b16 %v1401, %v1400
  %v1804 = vpack.c.b16 %v1403, %v1402
  %v1805 = vpack.c.b16 %v1405, %v1404
  %v1806 = vpack.c.b16 %v1407, %v1406
  %v1807 = vpack.c.b16 %v1409, %v1408
  %v1808 = vpack.c.b16 %v1411, %v1410
  %v1809 = vpack.c.b16 %v1413, %v1412
  %v1810 = vpack.c.b16 %v1415, %v1414
  %v1811 = vpack.c.b16 %v1417, %v1416
  %v1812 = vpack.c.b16 %v1419, %v1418
  %v1813 = vpack.c.b16 %v1421, %v1420
  %v1814 = vpack.c.b16 %v1423, %v1422
  %v1815 = vpack.c.b16 %v1425, %v1424
  %v1816 = vpack.c.b16 %v1427, %v1426
  %v1817 = vpack.c.b16 %v1429, %v1428
  %v1818 = vpack.c.b16 %v1431, %v1430
  %v1819 = vpack.c.b16 %v1433, %v1432
  %v1820 = vpack.c.b16 %v1435, %v1434
  %v1821 = vpack.c.b16 %v1437, %v1436
  %v1822 = vpack.c.b16 %v1439, %v1438
  %v1823 = vpack.c.b16 %v1441, %v1440
  %v1824 = vpack.c.b16 %v1443, %v1442
  %v1825 = vpack.c.b16 %v1445, %v1444
  %v1826 = vpack.c.b16 %v1447, %v1446
  %v1827 = vpack.c.b16 %v1449, %v1448
  %v1828 = vpack.c.b16 %v1451, %v1450
  %v1829 = vpack.c.b16 %v1453, %v1452
  %v1830 = vpack.c.b16 %v1455, %v1454
  %v1831 = vpack.c.b16 %v1457, %v1456
  %v1832 = vpack.c.b16 %v1459, %v1458
  %v1833 = vpack.c.b16 %v1461, %v1460
  %v1834 = vpack.c.b16 %v1463, %v1462
  %v1835 = vpack.c.b16 %v1465, %v1464
  %v1836 = vpack.c.b16 %v1467, %v1466
  %v1837 = vpack.c.b16 %v1469, %v1468
  %v1838 = vpack.c.b16 %v1471, %v1470
  %v1839 = vpack.c.b16 %v1473, %v1472
  %v1840 = vpack.c.b16 %v1475, %v1474
  %v1841 = vpack.c.b16 %v1477, %v1476
  %v1842 = vpack.c.b16 %v1479, %v1478
  %v1843 = vpack.c.b16 %v1481, %v1480
  %v1844 = vpack.c.b16 %v1483, %v1482
  %v1845 = vpack.c.b16 %v1485, %v1484
  %v1846 = vpack.c.b16 %v1487, %v1486
  %v1847 = vpack.c.b16 %v1489, %v1488
  %v1848 = vpack.c.b16 %v1491, %v1490
  %v1849 = vpack.c.b16 %v1493, %v1492
  %v1850 = vpack.c.b16 %v1495, %v1494
  %v1851 = vpack.c.b16 %v1497, %v1496
  %v1852 = vpack.c.b16 %v1499, %v1498
  %v1853 = vpack.c.b16 %v1501, %v1500
  %v1854 = vpack.c.b16 %v1503, %v1502
  %v1855 = vpack.c.b16 %v1505, %v1504
  %v1856 = vpack.c.b16 %v1507, %v1506
  %v1857 = vpack.c.b16 %v1509, %v1508
  %v1858 = vpack.c.b16 %v1511, %v1510
  %v1859 = vpack.c.b16 %v1513, %v1512
  %v1860 = vpack.c.b16 %v1515, %v1514
  %v1861 = vpack.c.b16 %v1517, %v1516
  %v1862 = vpack.c.b16 %v1519, %v1518
  %v1863 = vpack.c.b16 %v1521, %v1520
  %v1864 = vpack.c.b16 %v1523, %v1522
  %v1865 = vpack.c.b16 %v1525, %v1524
  %v1866 = vpack.c.b16 %v1527, %v1526
  %v1867 = vpack.c.b16 %v1529, %v1528
  %v1868 = vpack.c.b16 %v1531, %v1530
  %v1869 = vpack.c.b16 %v1533, %v1532
  %v1870 = vpack.c.b16 %v1535, %v1534
  %v1871 = vpack.c.b16 %v1537, %v1536
  %v1872 = vpack.c.b16 %v1539, %v1538
  %v1873 = vpack.c.b16 %v1541, %v1540
  %v1874 = vpack.c.b16 %v1543, %v1542
  %v1875 = vpack.c.b16 %v1545, %v1544
  %v1876 = vpack.c.b16 %v1547, %v1546
  %v1877 = vpack.c.b16 %v1549, %v1548
  %v1878 = vpack.c.b16 %v1551, %v1550
  %v1879 = vpack.c.b16 %v1553, %v1552
  %v1880 = vpack.c.b16 %v1555, %v1554
  %v1881 = vpack.c.b16 %v1557, %v1556
  %v1882 = vpack.c.b16 %v1559, %v1558
  %v1883 = vpack.c.b16 %v1561, %v1560
  %v1884 = vpack.c.b16 %v1563, %v1562
  %v1885 = vpack.c.b16 %v1565, %v1564
  %v1886 = vpack.c.b16 %v1567, %v1566
  %v1887 = vpack.c.b16 %v1569, %v1568
  %v1888 = vpack.c.b16 %v1571, %v1570
  %v1889 = vpack.c.b16 %v1573, %v1572
  %v1890 = vpack.c.b16 %v1575, %v1574
  %v1891 = vpack.c.b16 %v1577, %v1576
  %v1892 = vpack.c.b16 %v1579, %v1578
  %v1893 = vpack.c.b16 %v1581, %v1580
  %v1894 = vpack.c.b16 %v1583, %v1582
  %v1895 = vpack.c.b16 %v1585, %v1584
  %v1896 = vpack.c.b16 %v1587, %v1586
  %v1897 = vpack.c.b16 %v1589, %v1588
  %v1898 = vpack.c.b16 %v1591, %v1590
  %v1899 = vpack.c.b16 %v1593, %v1592
  %v1900 = vpack.c.b16 %v1595, %v1594
  %v1901 = vpack.c.b16 %v1597, %v1596
  %v1902 = vpack.c.b16 %v1599, %v1598
  %v1903 = vpack.c.b16 %v1601, %v1600
  %v1904 = vpack.c.b16 %v1603, %v1602
  %v1905 = vpack.c.b16 %v1605, %v1604
  %v1906 = vpack.c.b16 %v1607, %v1606
  %v1907 = vpack.c.b16 %v1609, %v1608
  %v1908 = vpack.c.b16 %v1611, %v1610
  %v1909 = vpack.c.b16 %v1613, %v1612
  %v1910 = vpack.c.b16 %v1615, %v1614
  %v1911 = vpack.c.b16 %v1617, %v1616
  %v1912 = vpack.c.b16 %v1619, %v1618
  %v1913 = vpack.c.b16 %v1621, %v1620
  %v1914 = vpack.c.b16 %v1623, %v1622
  %v1915 = vpack.c.b16 %v1625, %v1624
  %v1916 = vpack.c.b16 %v1627, %v1626
  %v1917 = vpack.c.b16 %v1629, %v1628
  %v1918 = vpack.c.b16 %v1631, %v1630
  %v1919 = vpack.c.b16 %v1633, %v1632
  %v1920 = vpack.c.b16 %v1635, %v1634
  %v1921 = vpack.c.b16 %v1637, %v1636
  %v1922 = vpack.c.b16 %v1639, %v1638
  %v1923 = vpack.c.b16 %v1641, %v1640
  %v1924 = vpack.c.b16 %v1643, %v1642
  %v1925 = vpack.c.b16 %v1645, %v1644
  %v1926 = vpack.c.b16 %v1647, %v1646
  %v1927 = vpack.c.b16 %v1649, %v1648
  %v1928 = vpack.c.b16 %v1651, %v1650
  %v1929 = vpack.c.b16 %v1653, %v1652
  %v1930 = vpack.c.b16 %v1655, %v1654
  %v1931 = vpack.c.b16 %v1657, %v1656
  %v1932 = vpack.c.b16 %v1659, %v1658
  %v1933 = vpack.c.b16 %v1661, %v1660
  %v1934 = vpack.c.b16 %v1663, %v1662
  %v1935 = vpack.c.b16 %v1665, %v1664
  %v1936 = vpack.c.b16 %v1667, %v1666
  %v1937 = vpack.c.b16 %v1669, %v1668
  %v1938 = vpack.c.b16 %v1671, %v1670
  %v1939 = vpack.c.b16 %v1673, %v1672
  %v1940 = vpack.c.b16 %v1675, %v1674
  %v1941 = vpack.c.b16 %v1677, %v1676
  %v1942 = vpack.c.b16 %v1679, %v1678
  %v1943 = vpack.c.b16 %v1681, %v1680
  %v1944 = vpack.c.b16 %v1683, %v1682
  %v1945 = vpack.c.b16 %v1685, %v1684
  %v1946 = vpack.c.b16 %v1687, %v1686
  %v1947 = vpack.c.b16 %v1689, %v1688
  %v1948 = vpack.c.b16 %v1691, %v1690
  %v1949 = vpack.c.b16 %v1693, %v1692
  %2206 = vmatprep.subr.bf16.mxu0 0
  %2207 = vmatpush1.bf16.msra.mxu0 %v1694
  %2208 = vmatprep.subr.bf16.mxu0 0
  %2209 = vmatpush1.bf16.msra.mxu0 %v1695
  %2210 = vmatprep.subr.bf16.mxu0 0
  %2211 = vmatpush1.bf16.msra.mxu0 %v1696
  %2212 = vmatprep.subr.bf16.mxu0 0
  %2213 = vmatpush1.bf16.msra.mxu0 %v1697
  %2214 = vmatprep.subr.bf16.mxu0 0
  %2215 = vmatpush1.bf16.msra.mxu0 %v1698
  %2216 = vmatprep.subr.bf16.mxu0 0
  %2217 = vmatpush1.bf16.msra.mxu0 %v1699
  %2218 = vmatprep.subr.bf16.mxu0 0
  %2219 = vmatpush1.bf16.msra.mxu0 %v1700
  %2220 = vmatprep.subr.bf16.mxu0 0
  %2221 = vmatpush1.bf16.msra.mxu0 %v1701
  %2222 = vmatprep.subr.bf16.mxu0 0
  %2223 = vmatpush1.bf16.msra.mxu0 %v1702
  %2224 = vmatprep.subr.bf16.mxu0 0
  %2225 = vmatpush1.bf16.msra.mxu0 %v1703
  %2226 = vmatprep.subr.bf16.mxu0 0
  %2227 = vmatpush1.bf16.msra.mxu0 %v1704
  %2228 = vmatprep.subr.bf16.mxu0 0
  %2229 = vmatpush1.bf16.msra.mxu0 %v1705
  %2230 = vmatprep.subr.bf16.mxu0 0
  %2231 = vmatpush1.bf16.msra.mxu0 %v1706
  %2232 = vmatprep.subr.bf16.mxu0 0
  %2233 = vmatpush1.bf16.msra.mxu0 %v1707
  %2234 = vmatprep.subr.bf16.mxu0 0
  %2235 = vmatpush1.bf16.msra.mxu0 %v1708
  %2236 = vmatprep.subr.bf16.mxu0 0
  %2237 = vmatpush1.bf16.msra.mxu0 %v1709
  %2238 = vmatprep.mubr.bf16.mxu0 %v607
  %2239 = vmatmul.mubr.bf16.gmra.mrb[0].mxu0 %v606
  %v2240 = vpop.f32.mrb[0].mxu0
  %v2241 = vadd.f32 %v556, %v2240
  %v2242 = vpop.f32.mrb[0].mxu0
  %v2243 = vpop.f32.mrb[0].mxu0
  %v2244 = vpop.f32.mrb[0].mxu0
  %2245 = vdwg.mxu0
  %2246 = vmatprep.subr.bf16.mxu0 0
  %2247 = vmatpush1.bf16.msra.mxu0 %v1710
  %2248 = vmatprep.subr.bf16.mxu0 0
  %2249 = vmatpush1.bf16.msra.mxu0 %v1711
  %2250 = vmatprep.subr.bf16.mxu0 0
  %2251 = vmatpush1.bf16.msra.mxu0 %v1712
  %2252 = vmatprep.subr.bf16.mxu0 0
  %2253 = vmatpush1.bf16.msra.mxu0 %v1713
  %2254 = vmatprep.subr.bf16.mxu0 0
  %2255 = vmatpush1.bf16.msra.mxu0 %v1714
  %2256 = vmatprep.subr.bf16.mxu0 0
  %2257 = vmatpush1.bf16.msra.mxu0 %v1715
  %2258 = vmatprep.subr.bf16.mxu0 0
  %2259 = vmatpush1.bf16.msra.mxu0 %v1716
  %2260 = vmatprep.subr.bf16.mxu0 0
  %2261 = vmatpush1.bf16.msra.mxu0 %v1717
  %2262 = vmatprep.subr.bf16.mxu0 0
  %2263 = vmatpush1.bf16.msra.mxu0 %v1718
  %2264 = vmatprep.subr.bf16.mxu0 0
  %2265 = vmatpush1.bf16.msra.mxu0 %v1719
  %2266 = vmatprep.subr.bf16.mxu0 0
  %2267 = vmatpush1.bf16.msra.mxu0 %v1720
  %2268 = vmatprep.subr.bf16.mxu0 0
  %2269 = vmatpush1.bf16.msra.mxu0 %v1721
  %2270 = vmatprep.subr.bf16.mxu0 0
  %2271 = vmatpush1.bf16.msra.mxu0 %v1722
  %2272 = vmatprep.subr.bf16.mxu0 0
  %2273 = vmatpush1.bf16.msra.mxu0 %v1723
  %2274 = vmatprep.subr.bf16.mxu0 0
  %2275 = vmatpush1.bf16.msra.mxu0 %v1724
  %2276 = vmatprep.subr.bf16.mxu0 0
  %2277 = vmatpush1.bf16.msra.mxu0 %v1725
  %2278 = vmatprep.mubr.bf16.mxu0 %v609
  %2279 = vmatmul.mubr.bf16.gmra.mrb[0].mxu0 %v608
  %v2280 = vpop.f32.mrb[0].mxu0
  %v2281 = vadd.f32 %v2241, %v2280
  %v2282 = vpop.f32.mrb[0].mxu0
  %v2283 = vpop.f32.mrb[0].mxu0
  %v2284 = vpop.f32.mrb[0].mxu0
  %2285 = vdwg.mxu0
  %2286 = vmatprep.subr.bf16.mxu0 0
  %2287 = vmatpush1.bf16.msra.mxu0 %v1726
  %2288 = vmatprep.subr.bf16.mxu0 0
  %2289 = vmatpush1.bf16.msra.mxu0 %v1727
  %2290 = vmatprep.subr.bf16.mxu0 0
  %2291 = vmatpush1.bf16.msra.mxu0 %v1728
  %2292 = vmatprep.subr.bf16.mxu0 0
  %2293 = vmatpush1.bf16.msra.mxu0 %v1729
  %2294 = vmatprep.subr.bf16.mxu0 0
  %2295 = vmatpush1.bf16.msra.mxu0 %v1730
  %2296 = vmatprep.subr.bf16.mxu0 0
  %2297 = vmatpush1.bf16.msra.mxu0 %v1731
  %2298 = vmatprep.subr.bf16.mxu0 0
  %2299 = vmatpush1.bf16.msra.mxu0 %v1732
  %2300 = vmatprep.subr.bf16.mxu0 0
  %2301 = vmatpush1.bf16.msra.mxu0 %v1733
  %2302 = vmatprep.subr.bf16.mxu0 0
  %2303 = vmatpush1.bf16.msra.mxu0 %v1734
  %2304 = vmatprep.subr.bf16.mxu0 0
  %2305 = vmatpush1.bf16.msra.mxu0 %v1735
  %2306 = vmatprep.subr.bf16.mxu0 0
  %2307 = vmatpush1.bf16.msra.mxu0 %v1736
  %2308 = vmatprep.subr.bf16.mxu0 0
  %2309 = vmatpush1.bf16.msra.mxu0 %v1737
  %2310 = vmatprep.subr.bf16.mxu0 0
  %2311 = vmatpush1.bf16.msra.mxu0 %v1738
  %2312 = vmatprep.subr.bf16.mxu0 0
  %2313 = vmatpush1.bf16.msra.mxu0 %v1739
  %2314 = vmatprep.subr.bf16.mxu0 0
  %2315 = vmatpush1.bf16.msra.mxu0 %v1740
  %2316 = vmatprep.subr.bf16.mxu0 0
  %2317 = vmatpush1.bf16.msra.mxu0 %v1741
  %2318 = vmatprep.mubr.bf16.mxu0 %v611
  %2319 = vmatmul.mubr.bf16.gmra.mrb[0].mxu0 %v610
  %v2320 = vpop.f32.mrb[0].mxu0
  %v2321 = vadd.f32 %v2281, %v2320
  %v2322 = vpop.f32.mrb[0].mxu0
  %v2323 = vpop.f32.mrb[0].mxu0
  %v2324 = vpop.f32.mrb[0].mxu0
  %2325 = vdwg.mxu0
  %2326 = vmatprep.subr.bf16.mxu0 0
  %2327 = vmatpush1.bf16.msra.mxu0 %v1742
  %2328 = vmatprep.subr.bf16.mxu0 0
  %2329 = vmatpush1.bf16.msra.mxu0 %v1743
  %2330 = vmatprep.subr.bf16.mxu0 0
  %2331 = vmatpush1.bf16.msra.mxu0 %v1744
  %2332 = vmatprep.subr.bf16.mxu0 0
  %2333 = vmatpush1.bf16.msra.mxu0 %v1745
  %2334 = vmatprep.subr.bf16.mxu0 0
  %2335 = vmatpush1.bf16.msra.mxu0 %v1746
  %2336 = vmatprep.subr.bf16.mxu0 0
  %2337 = vmatpush1.bf16.msra.mxu0 %v1747
  %2338 = vmatprep.subr.bf16.mxu0 0
  %2339 = vmatpush1.bf16.msra.mxu0 %v1748
  %2340 = vmatprep.subr.bf16.mxu0 0
  %2341 = vmatpush1.bf16.msra.mxu0 %v1749
  %2342 = vmatprep.subr.bf16.mxu0 0
  %2343 = vmatpush1.bf16.msra.mxu0 %v1750
  %2344 = vmatprep.subr.bf16.mxu0 0
  %2345 = vmatpush1.bf16.msra.mxu0 %v1751
  %2346 = vmatprep.subr.bf16.mxu0 0
  %2347 = vmatpush1.bf16.msra.mxu0 %v1752
  %2348 = vmatprep.subr.bf16.mxu0 0
  %2349 = vmatpush1.bf16.msra.mxu0 %v1753
  %2350 = vmatprep.subr.bf16.mxu0 0
  %2351 = vmatpush1.bf16.msra.mxu0 %v1754
  %2352 = vmatprep.subr.bf16.mxu0 0
  %2353 = vmatpush1.bf16.msra.mxu0 %v1755
  %2354 = vmatprep.subr.bf16.mxu0 0
  %2355 = vmatpush1.bf16.msra.mxu0 %v1756
  %2356 = vmatprep.subr.bf16.mxu0 0
  %2357 = vmatpush1.bf16.msra.mxu0 %v1757
  %2358 = vmatprep.mubr.bf16.mxu0 %v613
  %2359 = vmatmul.mubr.bf16.gmra.mrb[0].mxu0 %v612
  %v2360 = vpop.f32.mrb[0].mxu0
  %v2361 = vadd.f32 %v2321, %v2360
  %v2362 = vpop.f32.mrb[0].mxu0
  %v2363 = vpop.f32.mrb[0].mxu0
  %v2364 = vpop.f32.mrb[0].mxu0
  %2365 = vdwg.mxu0
  %2366 = vmatprep.subr.bf16.mxu0 0
  %2367 = vmatpush1.bf16.msra.mxu0 %v1758
  %2368 = vmatprep.subr.bf16.mxu0 0
  %2369 = vmatpush1.bf16.msra.mxu0 %v1759
  %2370 = vmatprep.subr.bf16.mxu0 0
  %2371 = vmatpush1.bf16.msra.mxu0 %v1760
  %2372 = vmatprep.subr.bf16.mxu0 0
  %2373 = vmatpush1.bf16.msra.mxu0 %v1761
  %2374 = vmatprep.subr.bf16.mxu0 0
  %2375 = vmatpush1.bf16.msra.mxu0 %v1762
  %2376 = vmatprep.subr.bf16.mxu0 0
  %2377 = vmatpush1.bf16.msra.mxu0 %v1763
  %2378 = vmatprep.subr.bf16.mxu0 0
  %2379 = vmatpush1.bf16.msra.mxu0 %v1764
  %2380 = vmatprep.subr.bf16.mxu0 0
  %2381 = vmatpush1.bf16.msra.mxu0 %v1765
  %2382 = vmatprep.subr.bf16.mxu0 0
  %2383 = vmatpush1.bf16.msra.mxu0 %v1766
  %2384 = vmatprep.subr.bf16.mxu0 0
  %2385 = vmatpush1.bf16.msra.mxu0 %v1767
  %2386 = vmatprep.subr.bf16.mxu0 0
  %2387 = vmatpush1.bf16.msra.mxu0 %v1768
  %2388 = vmatprep.subr.bf16.mxu0 0
  %2389 = vmatpush1.bf16.msra.mxu0 %v1769
  %2390 = vmatprep.subr.bf16.mxu0 0
  %2391 = vmatpush1.bf16.msra.mxu0 %v1770
  %2392 = vmatprep.subr.bf16.mxu0 0
  %2393 = vmatpush1.bf16.msra.mxu0 %v1771
  %2394 = vmatprep.subr.bf16.mxu0 0
  %2395 = vmatpush1.bf16.msra.mxu0 %v1772
  %2396 = vmatprep.subr.bf16.mxu0 0
  %2397 = vmatpush1.bf16.msra.mxu0 %v1773
  %2398 = vmatprep.mubr.bf16.mxu0 %v615
  %2399 = vmatmul.mubr.bf16.gmra.mrb[0].mxu0 %v614
  %v2400 = vpop.f32.mrb[0].mxu0
  %v2401 = vadd.f32 %v2361, %v2400
  %v2402 = vpop.f32.mrb[0].mxu0
  %v2403 = vpop.f32.mrb[0].mxu0
  %v2404 = vpop.f32.mrb[0].mxu0
  %2405 = vdwg.mxu0
  %2406 = vmatprep.subr.bf16.mxu0 0
  %2407 = vmatpush1.bf16.msra.mxu0 %v1774
  %2408 = vmatprep.subr.bf16.mxu0 0
  %2409 = vmatpush1.bf16.msra.mxu0 %v1775
  %2410 = vmatprep.subr.bf16.mxu0 0
  %2411 = vmatpush1.bf16.msra.mxu0 %v1776
  %2412 = vmatprep.subr.bf16.mxu0 0
  %2413 = vmatpush1.bf16.msra.mxu0 %v1777
  %2414 = vmatprep.subr.bf16.mxu0 0
  %2415 = vmatpush1.bf16.msra.mxu0 %v1778
  %2416 = vmatprep.subr.bf16.mxu0 0
  %2417 = vmatpush1.bf16.msra.mxu0 %v1779
  %2418 = vmatprep.subr.bf16.mxu0 0
  %2419 = vmatpush1.bf16.msra.mxu0 %v1780
  %2420 = vmatprep.subr.bf16.mxu0 0
  %2421 = vmatpush1.bf16.msra.mxu0 %v1781
  %2422 = vmatprep.subr.bf16.mxu0 0
  %2423 = vmatpush1.bf16.msra.mxu0 %v1782
  %2424 = vmatprep.subr.bf16.mxu0 0
  %2425 = vmatpush1.bf16.msra.mxu0 %v1783
  %2426 = vmatprep.subr.bf16.mxu0 0
  %2427 = vmatpush1.bf16.msra.mxu0 %v1784
  %2428 = vmatprep.subr.bf16.mxu0 0
  %2429 = vmatpush1.bf16.msra.mxu0 %v1785
  %2430 = vmatprep.subr.bf16.mxu0 0
  %2431 = vmatpush1.bf16.msra.mxu0 %v1786
  %2432 = vmatprep.subr.bf16.mxu0 0
  %2433 = vmatpush1.bf16.msra.mxu0 %v1787
  %2434 = vmatprep.subr.bf16.mxu0 0
  %2435 = vmatpush1.bf16.msra.mxu0 %v1788
  %2436 = vmatprep.subr.bf16.mxu0 0
  %2437 = vmatpush1.bf16.msra.mxu0 %v1789
  %2438 = vmatprep.mubr.bf16.mxu0 %v617
  %2439 = vmatmul.mubr.bf16.gmra.mrb[0].mxu0 %v616
  %v2440 = vpop.f32.mrb[0].mxu0
  %v2441 = vadd.f32 %v2401, %v2440
  %v2442 = vpop.f32.mrb[0].mxu0
  %v2443 = vpop.f32.mrb[0].mxu0
  %v2444 = vpop.f32.mrb[0].mxu0
  %2445 = vdwg.mxu0
  %2446 = vmatprep.subr.bf16.mxu0 0
  %2447 = vmatpush1.bf16.msra.mxu0 %v1790
  %2448 = vmatprep.subr.bf16.mxu0 0
  %2449 = vmatpush1.bf16.msra.mxu0 %v1791
  %2450 = vmatprep.subr.bf16.mxu0 0
  %2451 = vmatpush1.bf16.msra.mxu0 %v1792
  %2452 = vmatprep.subr.bf16.mxu0 0
  %2453 = vmatpush1.bf16.msra.mxu0 %v1793
  %2454 = vmatprep.subr.bf16.mxu0 0
  %2455 = vmatpush1.bf16.msra.mxu0 %v1794
  %2456 = vmatprep.subr.bf16.mxu0 0
  %2457 = vmatpush1.bf16.msra.mxu0 %v1795
  %2458 = vmatprep.subr.bf16.mxu0 0
  %2459 = vmatpush1.bf16.msra.mxu0 %v1796
  %2460 = vmatprep.subr.bf16.mxu0 0
  %2461 = vmatpush1.bf16.msra.mxu0 %v1797
  %2462 = vmatprep.subr.bf16.mxu0 0
  %2463 = vmatpush1.bf16.msra.mxu0 %v1798
  %2464 = vmatprep.subr.bf16.mxu0 0
  %2465 = vmatpush1.bf16.msra.mxu0 %v1799
  %2466 = vmatprep.subr.bf16.mxu0 0
  %2467 = vmatpush1.bf16.msra.mxu0 %v1800
  %2468 = vmatprep.subr.bf16.mxu0 0
  %2469 = vmatpush1.bf16.msra.mxu0 %v1801
  %2470 = vmatprep.subr.bf16.mxu0 0
  %2471 = vmatpush1.bf16.msra.mxu0 %v1802
  %2472 = vmatprep.subr.bf16.mxu0 0
  %2473 = vmatpush1.bf16.msra.mxu0 %v1803
  %2474 = vmatprep.subr.bf16.mxu0 0
  %2475 = vmatpush1.bf16.msra.mxu0 %v1804
  %2476 = vmatprep.subr.bf16.mxu0 0
  %2477 = vmatpush1.bf16.msra.mxu0 %v1805
  %2478 = vmatprep.mubr.bf16.mxu0 %v619
  %2479 = vmatmul.mubr.bf16.gmra.mrb[0].mxu0 %v618
  %v2480 = vpop.f32.mrb[0].mxu0
  %v2481 = vadd.f32 %v2441, %v2480
  %v2482 = vpop.f32.mrb[0].mxu0
  %v2483 = vpop.f32.mrb[0].mxu0
  %v2484 = vpop.f32.mrb[0].mxu0
  %2485 = vdwg.mxu0
  %2486 = vmatprep.subr.bf16.mxu0 0
  %2487 = vmatpush1.bf16.msra.mxu0 %v1806
  %2488 = vmatprep.subr.bf16.mxu0 0
  %2489 = vmatpush1.bf16.msra.mxu0 %v1807
  %2490 = vmatprep.subr.bf16.mxu0 0
  %2491 = vmatpush1.bf16.msra.mxu0 %v1808
  %2492 = vmatprep.subr.bf16.mxu0 0
  %2493 = vmatpush1.bf16.msra.mxu0 %v1809
  %2494 = vmatprep.subr.bf16.mxu0 0
  %2495 = vmatpush1.bf16.msra.mxu0 %v1810
  %2496 = vmatprep.subr.bf16.mxu0 0
  %2497 = vmatpush1.bf16.msra.mxu0 %v1811
  %2498 = vmatprep.subr.bf16.mxu0 0
  %2499 = vmatpush1.bf16.msra.mxu0 %v1812
  %2500 = vmatprep.subr.bf16.mxu0 0
  %2501 = vmatpush1.bf16.msra.mxu0 %v1813
  %2502 = vmatprep.subr.bf16.mxu0 0
  %2503 = vmatpush1.bf16.msra.mxu0 %v1814
  %2504 = vmatprep.subr.bf16.mxu0 0
  %2505 = vmatpush1.bf16.msra.mxu0 %v1815
  %2506 = vmatprep.subr.bf16.mxu0 0
  %2507 = vmatpush1.bf16.msra.mxu0 %v1816
  %2508 = vmatprep.subr.bf16.mxu0 0
  %2509 = vmatpush1.bf16.msra.mxu0 %v1817
  %2510 = vmatprep.subr.bf16.mxu0 0
  %2511 = vmatpush1.bf16.msra.mxu0 %v1818
  %2512 = vmatprep.subr.bf16.mxu0 0
  %2513 = vmatpush1.bf16.msra.mxu0 %v1819
  %2514 = vmatprep.subr.bf16.mxu0 0
  %2515 = vmatpush1.bf16.msra.mxu0 %v1820
  %2516 = vmatprep.subr.bf16.mxu0 0
  %2517 = vmatpush1.bf16.msra.mxu0 %v1821
  %2518 = vmatprep.mubr.bf16.mxu0 %v621
  %2519 = vmatmul.mubr.bf16.gmra.mrb[0].mxu0 %v620
  %v2520 = vpop.f32.mrb[0].mxu0
  %v2521 = vadd.f32 %v2481, %v2520
  %v2522 = vpop.f32.mrb[0].mxu0
  %v2523 = vpop.f32.mrb[0].mxu0
  %v2524 = vpop.f32.mrb[0].mxu0
  %2525 = vdwg.mxu0
  %2526 = vmatprep.subr.bf16.mxu0 0
  %2527 = vmatpush1.bf16.msra.mxu0 %v1822
  %2528 = vmatprep.subr.bf16.mxu0 0
  %2529 = vmatpush1.bf16.msra.mxu0 %v1823
  %2530 = vmatprep.subr.bf16.mxu0 0
  %2531 = vmatpush1.bf16.msra.mxu0 %v1824
  %2532 = vmatprep.subr.bf16.mxu0 0
  %2533 = vmatpush1.bf16.msra.mxu0 %v1825
  %2534 = vmatprep.subr.bf16.mxu0 0
  %2535 = vmatpush1.bf16.msra.mxu0 %v1826
  %2536 = vmatprep.subr.bf16.mxu0 0
  %2537 = vmatpush1.bf16.msra.mxu0 %v1827
  %2538 = vmatprep.subr.bf16.mxu0 0
  %2539 = vmatpush1.bf16.msra.mxu0 %v1828
  %2540 = vmatprep.subr.bf16.mxu0 0
  %2541 = vmatpush1.bf16.msra.mxu0 %v1829
  %2542 = vmatprep.subr.bf16.mxu0 0
  %2543 = vmatpush1.bf16.msra.mxu0 %v1830
  %2544 = vmatprep.subr.bf16.mxu0 0
  %2545 = vmatpush1.bf16.msra.mxu0 %v1831
  %2546 = vmatprep.subr.bf16.mxu0 0
  %2547 = vmatpush1.bf16.msra.mxu0 %v1832
  %2548 = vmatprep.subr.bf16.mxu0 0
  %2549 = vmatpush1.bf16.msra.mxu0 %v1833
  %2550 = vmatprep.subr.bf16.mxu0 0
  %2551 = vmatpush1.bf16.msra.mxu0 %v1834
  %2552 = vmatprep.subr.bf16.mxu0 0
  %2553 = vmatpush1.bf16.msra.mxu0 %v1835
  %2554 = vmatprep.subr.bf16.mxu0 0
  %2555 = vmatpush1.bf16.msra.mxu0 %v1836
  %2556 = vmatprep.subr.bf16.mxu0 0
  %2557 = vmatpush1.bf16.msra.mxu0 %v1837
  %2558 = vmatprep.mubr.bf16.mxu0 %v623
  %2559 = vmatmul.mubr.bf16.gmra.mrb[0].mxu0 %v622
  %v2560 = vpop.f32.mrb[0].mxu0
  %v2561 = vadd.f32 %v2521, %v2560
  %v2562 = vpop.f32.mrb[0].mxu0
  %v2563 = vpop.f32.mrb[0].mxu0
  %v2564 = vpop.f32.mrb[0].mxu0
  %2565 = vdwg.mxu0
  %2566 = vmatprep.subr.bf16.mxu0 0
  %2567 = vmatpush1.bf16.msra.mxu0 %v1838
  %2568 = vmatprep.subr.bf16.mxu0 0
  %2569 = vmatpush1.bf16.msra.mxu0 %v1839
  %2570 = vmatprep.subr.bf16.mxu0 0
  %2571 = vmatpush1.bf16.msra.mxu0 %v1840
  %2572 = vmatprep.subr.bf16.mxu0 0
  %2573 = vmatpush1.bf16.msra.mxu0 %v1841
  %2574 = vmatprep.subr.bf16.mxu0 0
  %2575 = vmatpush1.bf16.msra.mxu0 %v1842
  %2576 = vmatprep.subr.bf16.mxu0 0
  %2577 = vmatpush1.bf16.msra.mxu0 %v1843
  %2578 = vmatprep.subr.bf16.mxu0 0
  %2579 = vmatpush1.bf16.msra.mxu0 %v1844
  %2580 = vmatprep.subr.bf16.mxu0 0
  %2581 = vmatpush1.bf16.msra.mxu0 %v1845
  %2582 = vmatprep.subr.bf16.mxu0 0
  %2583 = vmatpush1.bf16.msra.mxu0 %v1846
  %2584 = vmatprep.subr.bf16.mxu0 0
  %2585 = vmatpush1.bf16.msra.mxu0 %v1847
  %2586 = vmatprep.subr.bf16.mxu0 0
  %2587 = vmatpush1.bf16.msra.mxu0 %v1848
  %2588 = vmatprep.subr.bf16.mxu0 0
  %2589 = vmatpush1.bf16.msra.mxu0 %v1849
  %2590 = vmatprep.subr.bf16.mxu0 0
  %2591 = vmatpush1.bf16.msra.mxu0 %v1850
  %2592 = vmatprep.subr.bf16.mxu0 0
  %2593 = vmatpush1.bf16.msra.mxu0 %v1851
  %2594 = vmatprep.subr.bf16.mxu0 0
  %2595 = vmatpush1.bf16.msra.mxu0 %v1852
  %2596 = vmatprep.subr.bf16.mxu0 0
  %2597 = vmatpush1.bf16.msra.mxu0 %v1853
  %2598 = vmatprep.mubr.bf16.mxu0 %v625
  %2599 = vmatmul.mubr.bf16.gmra.mrb[0].mxu0 %v624
  %v2600 = vpop.f32.mrb[0].mxu0
  %v2601 = vadd.f32 %v2561, %v2600
  %v2602 = vpop.f32.mrb[0].mxu0
  %v2603 = vpop.f32.mrb[0].mxu0
  %v2604 = vpop.f32.mrb[0].mxu0
  %2605 = vdwg.mxu0
  %2606 = vmatprep.subr.bf16.mxu0 0
  %2607 = vmatpush1.bf16.msra.mxu0 %v1854
  %2608 = vmatprep.subr.bf16.mxu0 0
  %2609 = vmatpush1.bf16.msra.mxu0 %v1855
  %2610 = vmatprep.subr.bf16.mxu0 0
  %2611 = vmatpush1.bf16.msra.mxu0 %v1856
  %2612 = vmatprep.subr.bf16.mxu0 0
  %2613 = vmatpush1.bf16.msra.mxu0 %v1857
  %2614 = vmatprep.subr.bf16.mxu0 0
  %2615 = vmatpush1.bf16.msra.mxu0 %v1858
  %2616 = vmatprep.subr.bf16.mxu0 0
  %2617 = vmatpush1.bf16.msra.mxu0 %v1859
  %2618 = vmatprep.subr.bf16.mxu0 0
  %2619 = vmatpush1.bf16.msra.mxu0 %v1860
  %2620 = vmatprep.subr.bf16.mxu0 0
  %2621 = vmatpush1.bf16.msra.mxu0 %v1861
  %2622 = vmatprep.subr.bf16.mxu0 0
  %2623 = vmatpush1.bf16.msra.mxu0 %v1862
  %2624 = vmatprep.subr.bf16.mxu0 0
  %2625 = vmatpush1.bf16.msra.mxu0 %v1863
  %2626 = vmatprep.subr.bf16.mxu0 0
  %2627 = vmatpush1.bf16.msra.mxu0 %v1864
  %2628 = vmatprep.subr.bf16.mxu0 0
  %2629 = vmatpush1.bf16.msra.mxu0 %v1865
  %2630 = vmatprep.subr.bf16.mxu0 0
  %2631 = vmatpush1.bf16.msra.mxu0 %v1866
  %2632 = vmatprep.subr.bf16.mxu0 0
  %2633 = vmatpush1.bf16.msra.mxu0 %v1867
  %2634 = vmatprep.subr.bf16.mxu0 0
  %2635 = vmatpush1.bf16.msra.mxu0 %v1868
  %2636 = vmatprep.subr.bf16.mxu0 0
  %2637 = vmatpush1.bf16.msra.mxu0 %v1869
  %2638 = vmatprep.mubr.bf16.mxu0 %v627
  %2639 = vmatmul.mubr.bf16.gmra.mrb[0].mxu0 %v626
  %v2640 = vpop.f32.mrb[0].mxu0
  %v2641 = vadd.f32 %v2601, %v2640
  %v2642 = vpop.f32.mrb[0].mxu0
  %v2643 = vpop.f32.mrb[0].mxu0
  %v2644 = vpop.f32.mrb[0].mxu0
  %2645 = vdwg.mxu0
  %2646 = vmatprep.subr.bf16.mxu0 0
  %2647 = vmatpush1.bf16.msra.mxu0 %v1870
  %2648 = vmatprep.subr.bf16.mxu0 0
  %2649 = vmatpush1.bf16.msra.mxu0 %v1871
  %2650 = vmatprep.subr.bf16.mxu0 0
  %2651 = vmatpush1.bf16.msra.mxu0 %v1872
  %2652 = vmatprep.subr.bf16.mxu0 0
  %2653 = vmatpush1.bf16.msra.mxu0 %v1873
  %2654 = vmatprep.subr.bf16.mxu0 0
  %2655 = vmatpush1.bf16.msra.mxu0 %v1874
  %2656 = vmatprep.subr.bf16.mxu0 0
  %2657 = vmatpush1.bf16.msra.mxu0 %v1875
  %2658 = vmatprep.subr.bf16.mxu0 0
  %2659 = vmatpush1.bf16.msra.mxu0 %v1876
  %2660 = vmatprep.subr.bf16.mxu0 0
  %2661 = vmatpush1.bf16.msra.mxu0 %v1877
  %2662 = vmatprep.subr.bf16.mxu0 0
  %2663 = vmatpush1.bf16.msra.mxu0 %v1878
  %2664 = vmatprep.subr.bf16.mxu0 0
  %2665 = vmatpush1.bf16.msra.mxu0 %v1879
  %2666 = vmatprep.subr.bf16.mxu0 0
  %2667 = vmatpush1.bf16.msra.mxu0 %v1880
  %2668 = vmatprep.subr.bf16.mxu0 0
  %2669 = vmatpush1.bf16.msra.mxu0 %v1881
  %2670 = vmatprep.subr.bf16.mxu0 0
  %2671 = vmatpush1.bf16.msra.mxu0 %v1882
  %2672 = vmatprep.subr.bf16.mxu0 0
  %2673 = vmatpush1.bf16.msra.mxu0 %v1883
  %2674 = vmatprep.subr.bf16.mxu0 0
  %2675 = vmatpush1.bf16.msra.mxu0 %v1884
  %2676 = vmatprep.subr.bf16.mxu0 0
  %2677 = vmatpush1.bf16.msra.mxu0 %v1885
  %2678 = vmatprep.mubr.bf16.mxu0 %v629
  %2679 = vmatmul.mubr.bf16.gmra.mrb[0].mxu0 %v628
  %v2680 = vpop.f32.mrb[0].mxu0
  %v2681 = vadd.f32 %v2641, %v2680
  %v2682 = vpop.f32.mrb[0].mxu0
  %v2683 = vpop.f32.mrb[0].mxu0
  %v2684 = vpop.f32.mrb[0].mxu0
  %2685 = vdwg.mxu0
  %2686 = vmatprep.subr.bf16.mxu0 0
  %2687 = vmatpush1.bf16.msra.mxu0 %v1886
  %2688 = vmatprep.subr.bf16.mxu0 0
  %2689 = vmatpush1.bf16.msra.mxu0 %v1887
  %2690 = vmatprep.subr.bf16.mxu0 0
  %2691 = vmatpush1.bf16.msra.mxu0 %v1888
  %2692 = vmatprep.subr.bf16.mxu0 0
  %2693 = vmatpush1.bf16.msra.mxu0 %v1889
  %2694 = vmatprep.subr.bf16.mxu0 0
  %2695 = vmatpush1.bf16.msra.mxu0 %v1890
  %2696 = vmatprep.subr.bf16.mxu0 0
  %2697 = vmatpush1.bf16.msra.mxu0 %v1891
  %2698 = vmatprep.subr.bf16.mxu0 0
  %2699 = vmatpush1.bf16.msra.mxu0 %v1892
  %2700 = vmatprep.subr.bf16.mxu0 0
  %2701 = vmatpush1.bf16.msra.mxu0 %v1893
  %2702 = vmatprep.subr.bf16.mxu0 0
  %2703 = vmatpush1.bf16.msra.mxu0 %v1894
  %2704 = vmatprep.subr.bf16.mxu0 0
  %2705 = vmatpush1.bf16.msra.mxu0 %v1895
  %2706 = vmatprep.subr.bf16.mxu0 0
  %2707 = vmatpush1.bf16.msra.mxu0 %v1896
  %2708 = vmatprep.subr.bf16.mxu0 0
  %2709 = vmatpush1.bf16.msra.mxu0 %v1897
  %2710 = vmatprep.subr.bf16.mxu0 0
  %2711 = vmatpush1.bf16.msra.mxu0 %v1898
  %2712 = vmatprep.subr.bf16.mxu0 0
  %2713 = vmatpush1.bf16.msra.mxu0 %v1899
  %2714 = vmatprep.subr.bf16.mxu0 0
  %2715 = vmatpush1.bf16.msra.mxu0 %v1900
  %2716 = vmatprep.subr.bf16.mxu0 0
  %2717 = vmatpush1.bf16.msra.mxu0 %v1901
  %2718 = vmatprep.mubr.bf16.mxu0 %v631
  %2719 = vmatmul.mubr.bf16.gmra.mrb[0].mxu0 %v630
  %v2720 = vpop.f32.mrb[0].mxu0
  %v2721 = vadd.f32 %v2681, %v2720
  %v2722 = vpop.f32.mrb[0].mxu0
  %v2723 = vpop.f32.mrb[0].mxu0
  %v2724 = vpop.f32.mrb[0].mxu0
  %2725 = vdwg.mxu0
  %2726 = vmatprep.subr.bf16.mxu0 0
  %2727 = vmatpush1.bf16.msra.mxu0 %v1902
  %2728 = vmatprep.subr.bf16.mxu0 0
  %2729 = vmatpush1.bf16.msra.mxu0 %v1903
  %2730 = vmatprep.subr.bf16.mxu0 0
  %2731 = vmatpush1.bf16.msra.mxu0 %v1904
  %2732 = vmatprep.subr.bf16.mxu0 0
  %2733 = vmatpush1.bf16.msra.mxu0 %v1905
  %2734 = vmatprep.subr.bf16.mxu0 0
  %2735 = vmatpush1.bf16.msra.mxu0 %v1906
  %2736 = vmatprep.subr.bf16.mxu0 0
  %2737 = vmatpush1.bf16.msra.mxu0 %v1907
  %2738 = vmatprep.subr.bf16.mxu0 0
  %2739 = vmatpush1.bf16.msra.mxu0 %v1908
  %2740 = vmatprep.subr.bf16.mxu0 0
  %2741 = vmatpush1.bf16.msra.mxu0 %v1909
  %2742 = vmatprep.subr.bf16.mxu0 0
  %2743 = vmatpush1.bf16.msra.mxu0 %v1910
  %2744 = vmatprep.subr.bf16.mxu0 0
  %2745 = vmatpush1.bf16.msra.mxu0 %v1911
  %2746 = vmatprep.subr.bf16.mxu0 0
  %2747 = vmatpush1.bf16.msra.mxu0 %v1912
  %2748 = vmatprep.subr.bf16.mxu0 0
  %2749 = vmatpush1.bf16.msra.mxu0 %v1913
  %2750 = vmatprep.subr.bf16.mxu0 0
  %2751 = vmatpush1.bf16.msra.mxu0 %v1914
  %2752 = vmatprep.subr.bf16.mxu0 0
  %2753 = vmatpush1.bf16.msra.mxu0 %v1915
  %2754 = vmatprep.subr.bf16.mxu0 0
  %2755 = vmatpush1.bf16.msra.mxu0 %v1916
  %2756 = vmatprep.subr.bf16.mxu0 0
  %2757 = vmatpush1.bf16.msra.mxu0 %v1917
  %2758 = vmatprep.mubr.bf16.mxu0 %v633
  %2759 = vmatmul.mubr.bf16.gmra.mrb[0].mxu0 %v632
  %v2760 = vpop.f32.mrb[0].mxu0
  %v2761 = vadd.f32 %v2721, %v2760
  %v2762 = vpop.f32.mrb[0].mxu0
  %v2763 = vpop.f32.mrb[0].mxu0
  %v2764 = vpop.f32.mrb[0].mxu0
  %2765 = vdwg.mxu0
  %2766 = vmatprep.subr.bf16.mxu0 0
  %2767 = vmatpush1.bf16.msra.mxu0 %v1918
  %2768 = vmatprep.subr.bf16.mxu0 0
  %2769 = vmatpush1.bf16.msra.mxu0 %v1919
  %2770 = vmatprep.subr.bf16.mxu0 0
  %2771 = vmatpush1.bf16.msra.mxu0 %v1920
  %2772 = vmatprep.subr.bf16.mxu0 0
  %2773 = vmatpush1.bf16.msra.mxu0 %v1921
  %2774 = vmatprep.subr.bf16.mxu0 0
  %2775 = vmatpush1.bf16.msra.mxu0 %v1922
  %2776 = vmatprep.subr.bf16.mxu0 0
  %2777 = vmatpush1.bf16.msra.mxu0 %v1923
  %2778 = vmatprep.subr.bf16.mxu0 0
  %2779 = vmatpush1.bf16.msra.mxu0 %v1924
  %2780 = vmatprep.subr.bf16.mxu0 0
  %2781 = vmatpush1.bf16.msra.mxu0 %v1925
  %2782 = vmatprep.subr.bf16.mxu0 0
  %2783 = vmatpush1.bf16.msra.mxu0 %v1926
  %2784 = vmatprep.subr.bf16.mxu0 0
  %2785 = vmatpush1.bf16.msra.mxu0 %v1927
  %2786 = vmatprep.subr.bf16.mxu0 0
  %2787 = vmatpush1.bf16.msra.mxu0 %v1928
  %2788 = vmatprep.subr.bf16.mxu0 0
  %2789 = vmatpush1.bf16.msra.mxu0 %v1929
  %2790 = vmatprep.subr.bf16.mxu0 0
  %2791 = vmatpush1.bf16.msra.mxu0 %v1930
  %2792 = vmatprep.subr.bf16.mxu0 0
  %2793 = vmatpush1.bf16.msra.mxu0 %v1931
  %2794 = vmatprep.subr.bf16.mxu0 0
  %2795 = vmatpush1.bf16.msra.mxu0 %v1932
  %2796 = vmatprep.subr.bf16.mxu0 0
  %2797 = vmatpush1.bf16.msra.mxu0 %v1933
  %2798 = vmatprep.mubr.bf16.mxu0 %v635
  %2799 = vmatmul.mubr.bf16.gmra.mrb[0].mxu0 %v634
  %v2800 = vpop.f32.mrb[0].mxu0
  %v2801 = vadd.f32 %v2761, %v2800
  %v2802 = vpop.f32.mrb[0].mxu0
  %v2803 = vpop.f32.mrb[0].mxu0
  %v2804 = vpop.f32.mrb[0].mxu0
  %2805 = vdwg.mxu0
  %2806 = vmatprep.subr.bf16.mxu0 0
  %2807 = vmatpush1.bf16.msra.mxu0 %v1934
  %2808 = vmatprep.subr.bf16.mxu0 0
  %2809 = vmatpush1.bf16.msra.mxu0 %v1935
  %2810 = vmatprep.subr.bf16.mxu0 0
  %2811 = vmatpush1.bf16.msra.mxu0 %v1936
  %2812 = vmatprep.subr.bf16.mxu0 0
  %2813 = vmatpush1.bf16.msra.mxu0 %v1937
  %2814 = vmatprep.subr.bf16.mxu0 0
  %2815 = vmatpush1.bf16.msra.mxu0 %v1938
  %2816 = vmatprep.subr.bf16.mxu0 0
  %2817 = vmatpush1.bf16.msra.mxu0 %v1939
  %2818 = vmatprep.subr.bf16.mxu0 0
  %2819 = vmatpush1.bf16.msra.mxu0 %v1940
  %2820 = vmatprep.subr.bf16.mxu0 0
  %2821 = vmatpush1.bf16.msra.mxu0 %v1941
  %2822 = vmatprep.subr.bf16.mxu0 0
  %2823 = vmatpush1.bf16.msra.mxu0 %v1942
  %2824 = vmatprep.subr.bf16.mxu0 0
  %2825 = vmatpush1.bf16.msra.mxu0 %v1943
  %2826 = vmatprep.subr.bf16.mxu0 0
  %2827 = vmatpush1.bf16.msra.mxu0 %v1944
  %2828 = vmatprep.subr.bf16.mxu0 0
  %2829 = vmatpush1.bf16.msra.mxu0 %v1945
  %2830 = vmatprep.subr.bf16.mxu0 0
  %2831 = vmatpush1.bf16.msra.mxu0 %v1946
  %2832 = vmatprep.subr.bf16.mxu0 0
  %2833 = vmatpush1.bf16.msra.mxu0 %v1947
  %2834 = vmatprep.subr.bf16.mxu0 0
  %2835 = vmatpush1.bf16.msra.mxu0 %v1948
  %2836 = vmatprep.subr.bf16.mxu0 0
  %2837 = vmatpush1.bf16.msra.mxu0 %v1949
  %2838 = vmatprep.mubr.bf16.mxu0 %v637
  %2839 = vmatmul.mubr.bf16.gmra.mrb[0].mxu0 %v636
  %v2840 = vpop.f32.mrb[0].mxu0
  %v2841 = vadd.f32 %v2801, %v2840
  %v2842 = vpop.f32.mrb[0].mxu0
  %v2843 = vpop.f32.mrb[0].mxu0
  %v2844 = vpop.f32.mrb[0].mxu0
  %2845 = vdwg.mxu0
  %v2846 = vmax.f32 %v2841, 0.0
  %v2847 = vld [vmem:[%s3] sm:$0xff]
  %v2848 = vld [vmem:[%s3 + $0x8] sm:$0xff]
  %v2849 = vld [vmem:[%s3 + $0x10] sm:$0xff]
  %v2850 = vld [vmem:[%s3 + $0x18] sm:$0xff]
  %v2851 = vld [vmem:[%s3 + $0x20] sm:$0xff]
  %v2852 = vld [vmem:[%s3 + $0x28] sm:$0xff]
  %v2853 = vld [vmem:[%s3 + $0x30] sm:$0xff]
  %v2854 = vld [vmem:[%s3 + $0x38] sm:$0xff]
  %v2855 = vld [vmem:[%s3 + $0x40] sm:$0xff]
  %v2856 = vld [vmem:[%s3 + $0x48] sm:$0xff]
  %v2857 = vld [vmem:[%s3 + $0x50] sm:$0xff]
  %v2858 = vld [vmem:[%s3 + $0x58] sm:$0xff]
  %v2859 = vld [vmem:[%s3 + $0x60] sm:$0xff]
  %v2860 = vld [vmem:[%s3 + $0x68] sm:$0xff]
  %v2861 = vld [vmem:[%s3 + $0x70] sm:$0xff]
  %v2862 = vld [vmem:[%s3 + $0x78] sm:$0xff]
  %v2863 = vld [vmem:[#allocation2] sm:$0x1]
  %v2865 = vlaneseq
  %v2866 = vshrl.u32 %v2865, 7
  %v2867 = vsub.s32 0, %v2866
  %v2868 = vrot.slane %v2863, %v2867
  %2870 = vmatprep.subr.mxu0 0.0
  %2871 = vmatpush1.msra.mxu0 %v2847
  %2872 = vmatprep.subr.mxu0 0.0
  %2873 = vmatpush1.msra.mxu0 %v2848
  %2874 = vmatprep.subr.mxu0 0.0
  %2875 = vmatpush1.msra.mxu0 %v2849
  %2876 = vmatprep.subr.mxu0 0.0
  %2877 = vmatpush1.msra.mxu0 %v2850
  %2878 = vmatprep.subr.mxu0 0.0
  %2879 = vmatpush1.msra.mxu0 %v2851
  %2880 = vmatprep.subr.mxu0 0.0
  %2881 = vmatpush1.msra.mxu0 %v2852
  %2882 = vmatprep.subr.mxu0 0.0
  %2883 = vmatpush1.msra.mxu0 %v2853
  %2884 = vmatprep.subr.mxu0 0.0
  %2885 = vmatpush1.msra.mxu0 %v2854
  %2886 = vmatprep.subr.mxu0 0.0
  %2887 = vmatpush1.msra.mxu0 %v2855
  %2888 = vmatprep.subr.mxu0 0.0
  %2889 = vmatpush1.msra.mxu0 %v2856
  %2890 = vmatprep.subr.mxu0 0.0
  %2891 = vmatpush1.msra.mxu0 %v2857
  %2892 = vmatprep.subr.mxu0 0.0
  %2893 = vmatpush1.msra.mxu0 %v2858
  %2894 = vmatprep.subr.mxu0 0.0
  %2895 = vmatpush1.msra.mxu0 %v2859
  %2896 = vmatprep.subr.mxu0 0.0
  %2897 = vmatpush1.msra.mxu0 %v2860
  %2898 = vmatprep.subr.mxu0 0.0
  %2899 = vmatpush1.msra.mxu0 %v2861
  %2900 = vmatprep.subr.mxu0 0.0
  %2901 = vmatpush1.msra.mxu0 %v2862
  %2902 = vmatprep.subr.mxu0 0.0
  %2903 = vmatpush1.msra.mxu0 0.0
  %2904 = vmatprep.subr.mxu0 0.0
  %2905 = vmatpush1.msra.mxu0 0.0
  %2906 = vmatprep.subr.mxu0 0.0
  %2907 = vmatpush1.msra.mxu0 0.0
  %2908 = vmatprep.subr.mxu0 0.0
  %2909 = vmatpush1.msra.mxu0 0.0
  %2910 = vmatprep.subr.mxu0 0.0
  %2911 = vmatpush1.msra.mxu0 0.0
  %2912 = vmatprep.subr.mxu0 0.0
  %2913 = vmatpush1.msra.mxu0 0.0
  %2914 = vmatprep.subr.mxu0 0.0
  %2915 = vmatpush1.msra.mxu0 0.0
  %2916 = vmatprep.subr.mxu0 0.0
  %2917 = vmatpush1.msra.mxu0 0.0
  %2918 = vmatprep.subr.mxu0 0.0
  %2919 = vmatpush1.msra.mxu0 0.0
  %2920 = vmatprep.subr.mxu0 0.0
  %2921 = vmatpush1.msra.mxu0 0.0
  %2922 = vmatprep.subr.mxu0 0.0
  %2923 = vmatpush1.msra.mxu0 0.0
  %2924 = vmatprep.subr.mxu0 0.0
  %2925 = vmatpush1.msra.mxu0 0.0
  %2926 = vmatprep.subr.mxu0 0.0
  %2927 = vmatpush1.msra.mxu0 0.0
  %2928 = vmatprep.subr.mxu0 0.0
  %2929 = vmatpush1.msra.mxu0 0.0
  %2930 = vmatprep.subr.mxu0 0.0
  %2931 = vmatpush1.msra.mxu0 0.0
  %2932 = vmatprep.subr.mxu0 0.0
  %2933 = vmatpush1.msra.mxu0 0.0
  %2934 = vmatprep.mubr.f32.mxu0 0.0
  %2935 = vmatmul.mubr.f32.gmra.mrb[0].mxu0 %v2846
  %v2936 = vpop.f32.mrb[0].mxu0
  %v2937 = vadd.f32 %v2868, %v2936
  %v2938 = vpop.f32.mrb[0].mxu0
  %2939 = vdwg.mxu0
  %vm2940 = vcmask 7168
  %2941 = vst.msk [vmem:[%s5] sm:$0xff] %vm2940, %v2937
  // Predicated region
  $region22: #{net_afd_forward.3} parent=0 // pred_check
    _
  $region23: #{net_afd_forward.3} parent=0 // pred_check_branch
    %2943 = sbr.rel (0) target = $region25
  $region24: #{net_afd_forward.3} parent=0 // pred_region
    _
  $region25: #{net_afd_forward.3} parent=0 // pred_fallthru
    _
  // Predicated region
  $region26: #{net_afd_forward.3} parent=0 // pred_check
    _
  $region27: #{net_afd_forward.3} parent=0 // pred_check_branch
    %2945 = sbr.rel (0) target = $region29
  $region28: #{net_afd_forward.3} parent=0 // pred_region
    _
  $region29: #{net_afd_forward.3} parent=0 // pred_fallthru
    _

</llo_original>
